<compile_context>
chip_gen: v5e
topology: v5e:2x2
jax: 0.10.0
libtpu: 0.0.40
codegen_flags: <defaults>
</compile_context>

<pallas_src>
import functools
import math

import numpy as np

import jax
import jax.numpy as jnp
from jax import lax
from jax.experimental import pallas as pl
from jax.experimental.pallas import tpu as pltpu

NEG_SLOPE = 0.01                       # F.leaky_relu default negative slope
_VMEM = pl.BlockSpec(memory_space=pltpu.MemorySpace.VMEM)
_LANE = 128


def _ceil_to(n, m):
    return ((n + m - 1) // m) * m


# --------------------------------------------------------------------------
# in-kernel helpers
# --------------------------------------------------------------------------
def _leaky(x):
    return jnp.where(x > 0, x, NEG_SLOPE * x)


def _mm(a, w, dtype):
    """MXU matmul; operands cast to `dtype` at the dot boundary, f32 accum."""
    return jnp.dot(a.astype(dtype), w.astype(dtype),
                   preferred_element_type=jnp.float32)


def _layernorm(z, g, b, eps=1e-5):
    """LayerNorm over the last dim (PyTorch semantics, biased variance)."""
    mean = jnp.mean(z, axis=-1, keepdims=True)
    var = jnp.mean(jnp.square(z - mean), axis=-1, keepdims=True)
    return (z - mean) * lax.rsqrt(var + eps) * g + b


def _mha_rows(x, mask, wqkv, bqkv, wo, bo, nheads, mm_dtype):
    """Multi-head self-attention over the stacked rows of x (all batches).

    mask[i, j] == True iff rows i and j belong to the same batch element,
    which makes the stacked-row softmax identical to per-batch softmax.
    Per-head attention outputs are folded directly into the output projection
    as full-width partial matmuls (no per-head VMEM assembly / masked stores).
    Matches torch.nn.MultiheadAttention in eval mode.
    """
    M, D = x.shape
    hd = D // nheads
    scale = 1.0 / math.sqrt(hd)
    qkv = _mm(x, wqkv, mm_dtype) + bqkv                        # (M, 3D), f32
    out = None
    for h in range(nheads):                                    # static, tiny
        qh = qkv[:, h * hd:(h + 1) * hd]
        kh = qkv[:, D + h * hd:D + (h + 1) * hd]
        vh = qkv[:, 2 * D + h * hd:2 * D + (h + 1) * hd]
        # q @ k^T in f32 without an explicit transpose (contract dim 1 of both)
        s = lax.dot_general(qh, kh, (((1,), (1,)), ((), ())),
                            preferred_element_type=jnp.float32) * scale
        s = jnp.where(mask, s, -1e9)
        s = s - jnp.max(s, axis=-1, keepdims=True)
        p = jnp.exp(s)
        p = p / jnp.sum(p, axis=-1, keepdims=True)             # exact softmax
        oh = jnp.dot(p, vh, preferred_element_type=jnp.float32)   # (M, hd)
        part = _mm(oh, wo[h * hd:(h + 1) * hd, :], mm_dtype)       # (M, D)
        out = part if out is None else out + part
    return out + bo


# --------------------------------------------------------------------------
# the fused kernel
# --------------------------------------------------------------------------
def _backbone_kernel(obs_ref, hist_ref, bidc_ref, bidr_ref, bias_ref,
                     w_small_ref, w_big_ref, w_deep_ref,
                     o_ref, xbuf, catbuf, *,
                     wl, bl, B, lidar_dim, kin_input_dim, kin_output_dim,
                     n_history_frame, n_waypoints, nheads, mm_dtype):
    H, L, K = n_history_frame, lidar_dim, kin_output_dim
    M1 = B * (H + 1)
    M2 = M1 + B
    i1 = kin_input_dim
    i2 = i1 + L                       # current lidar: obs[:, i1:i2]
    i3 = i1 + L * (H + 1)             # goal start
    i5 = i3 + 2 + 2 * n_waypoints     # end of [goal ; waypoints]

    slab_refs = {"small": w_small_ref, "big": w_big_ref, "deep": w_deep_ref}

    def W(name):                                   # packed-weight slice (value)
        s, c0, r, c = wl[name]
        return slab_refs[s][0:r, c0:c0 + c]

    def Bv(name):                                  # packed-bias row (1, n)
        r, n = bl[name]
        return bias_ref[r:r + 1, 0:n]

    obs = obs_ref[...]                                        # (B, obs_dim)

    # same-batch masks / per-batch selection built in-kernel from the tiny
    # batch-id vectors (no O(M^2) host materialization, no extra DMAs).
    bidc = bidc_ref[...]                                      # (M2, 1) int32
    bidr = bidr_ref[...]                                      # (1, M2) int32
    mask1 = bidc[:M1, :] == bidr[:, :M1]                      # (M1, M1) bool
    mask2 = bidc == bidr                                      # (M2, M2) bool
    # rows [M1, M2) are exactly one per batch in order -> selection matrix
    sel = jnp.where(bidc[M1:M2, :] == bidr, 1.0, 0.0)         # (B, M2) f32

    # ---------------- FDM embeddings: ONE matmul for all history frames -----
    hs = _leaky(_mm(hist_ref[...], W("he_w"), mm_dtype) + Bv("he_b"))  # (B*H,128)
    co = _leaky(_mm(obs[:, i1:i2], W("ce_w"), mm_dtype) + Bv("ce_b"))  # (B,128)
    xbuf[0:B * H, :] = hs
    xbuf[B * H:M1, :] = co
    x = xbuf[...]                                             # (M1, d_model)

    # ---------------- TransformerEncoderLayer (post-norm, ReLU FF, eval) ----
    attn = _mha_rows(x, mask1, W("tfm_wqkv"), Bv("tfm_bqkv"),
                     W("tfm_wo"), Bv("tfm_bo"), nheads, mm_dtype)
    x = _layernorm(x + attn, Bv("ln1_g"), Bv("ln1_b"))
    ff = jnp.maximum(_mm(x, W("tfm_w1"), mm_dtype) + Bv("tfm_b1"), 0.0)
    ff = _mm(ff, W("tfm_w2"), mm_dtype) + Bv("tfm_b2")
    x = _layernorm(x + ff, Bv("ln2_g"), Bv("ln2_b"))
    env_rep = _mm(x, W("fdm_enc_w"), mm_dtype) + Bv("fdm_enc_b")   # (M1, K)

    # ---------------- KineticModel: 4-layer MLP + fused waypoint/goal -------
    kk = _leaky(_mm(obs[:, 0:i1], W("kin_w1"), mm_dtype) + Bv("kin_b1"))
    kk = _leaky(_mm(kk, W("kin_w2"), mm_dtype) + Bv("kin_b2"))
    kk = _leaky(_mm(kk, W("kin_w3"), mm_dtype) + Bv("kin_b3"))
    kk = _mm(kk, W("kin_w4"), mm_dtype) + Bv("kin_b4")             # (B, K/2)
    wg = _mm(obs[:, i3:i5], W("wg_w"), mm_dtype) + Bv("wg_b")      # (B, K/2)

    # ---------------- assemble [env_rep ; robot_rep] in one VMEM slab -------
    hk = K // 2
    catbuf[0:M1, :] = env_rep
    catbuf[M1:M2, 0:hk] = kk
    catbuf[M1:M2, hk:K] = wg

    # ---------------- BackBone head: MHA + encode + per-batch sum -----------
    out = _mha_rows(catbuf[...], mask2, W("mha_wqkv"), Bv("mha_bqkv"),
                    W("mha_wo"), Bv("mha_bo"), nheads, mm_dtype)
    lat = _leaky(_mm(out, W("enc_w"), mm_dtype) + Bv("enc_b"))     # (M2, latent)
    o_ref[...] = jnp.dot(sel, lat,
                         preferred_element_type=jnp.float32).astype(o_ref.dtype)


# --------------------------------------------------------------------------
# host wrapper
# --------------------------------------------------------------------------
def backbone_forward(packed, observation, *, layouts, lidar_dim, kin_input_dim,
                     kin_output_dim, latent_dim, n_history_frame, n_waypoints,
                     d_model=128, nheads=4, mm_dtype=jnp.bfloat16):
    B = observation.shape[0]
    H, L = n_history_frame, lidar_dim
    M1 = B * (H + 1)
    M2 = M1 + B
    i1 = kin_input_dim
    i2 = i1 + L
    i3 = i1 + L * (H + 1)

    # (B*H, L) history slab: row r = b*H + j (row-major reshape in the wrapper
    # so the kernel needs no in-kernel relayout and does a single matmul).
    hist2d = observation[:, i2:i3].reshape(B * H, L)

    # tiny per-row batch-id vectors (replace host-side O(M^2) bias matrices)
    rows = np.arange(M2)
    bid = np.where(rows < B * H, rows // H,
                   np.where(rows < M1, rows - B * H, rows - M1)).astype(np.int32)
    bid_col = jnp.asarray(bid.reshape(M2, 1))
    bid_row = jnp.asarray(bid.reshape(1, M2))

    kernel = functools.partial(
        _backbone_kernel, wl=layouts["weights"], bl=layouts["bias"],
        B=B, lidar_dim=lidar_dim, kin_input_dim=kin_input_dim,
        kin_output_dim=kin_output_dim, n_history_frame=n_history_frame,
        n_waypoints=n_waypoints, nheads=nheads, mm_dtype=mm_dtype)

    return pl.pallas_call(
        kernel,
        out_shape=jax.ShapeDtypeStruct((B, latent_dim), jnp.float32),
        in_specs=[_VMEM] * 8,
        out_specs=_VMEM,
        scratch_shapes=[
            pltpu.VMEM((M1, d_model), jnp.float32),          # FDM sequence slab
            pltpu.VMEM((M2, kin_output_dim), jnp.float32),   # [env ; robot] slab
        ],
    )(observation, hist2d, bid_col, bid_row,
      packed["biases"], packed["w_small"], packed["w_big"], packed["w_deep"])


# --------------------------------------------------------------------------
# Parameter init (xavier_uniform weights, zero biases — matches weights_init_)
# --------------------------------------------------------------------------
def _xavier(key, fan_in, fan_out):
    bound = math.sqrt(6.0 / (fan_in + fan_out))
    return jax.random.uniform(key, (fan_in, fan_out), jnp.float32, -bound, bound)


def init_params(key, lidar_dim, kin_input_dim, kin_output_dim, latent_dim,
                n_waypoints, d_model=128):
    keys = iter(jax.random.split(key, 32))

    def lin(fi, fo):
        return _xavier(next(keys), fi, fo), jnp.zeros((1, fo), jnp.float32)

    def mha_params(d):
        # torch in_proj_weight is (3d, d); stored transposed (d, 3d), fused QKV.
        wqkv = _xavier(next(keys), d, 3 * d)
        wo, bo = lin(d, d)
        return dict(wqkv=wqkv, bqkv=jnp.zeros((1, 3 * d), jnp.float32),
                    wo=wo, bo=bo)

    he_w, he_b = lin(lidar_dim, d_model)
    ce_w, ce_b = lin(lidar_dim, d_model)
    tfm = mha_params(d_model)
    w1, b1 = lin(d_model, 512)
    w2, b2 = lin(512, d_model)
    tfm.update(w1=w1, b1=b1, w2=w2, b2=b2,
               ln1_g=jnp.ones((1, d_model), jnp.float32),
               ln1_b=jnp.zeros((1, d_model), jnp.float32),
               ln2_g=jnp.ones((1, d_model), jnp.float32),
               ln2_b=jnp.zeros((1, d_model), jnp.float32))
    enc_w, enc_b = lin(d_model, kin_output_dim)
    fdm = dict(he_w=he_w, he_b=he_b, ce_w=ce_w, ce_b=ce_b, tfm=tfm,
               enc_w=enc_w, enc_b=enc_b)

    k1w, k1b = lin(kin_input_dim, 128)
    k2w, k2b = lin(128, 256)
    k3w, k3b = lin(256, 128)
    k4w, k4b = lin(128, kin_output_dim // 2)
    wpw, wpb = lin(n_waypoints * 2, kin_output_dim // 4)
    gw, gb = lin(2, kin_output_dim // 4)
    kin = dict(w1=k1w, b1=k1b, w2=k2w, b2=k2b, w3=k3w, b3=k3b, w4=k4w, b4=k4b,
               wp_w=wpw, wp_b=wpb, g_w=gw, g_b=gb)

    mha = mha_params(kin_output_dim)
    ew, eb = lin(kin_output_dim, latent_dim)
    return dict(fdm=fdm, kin=kin, mha=mha, enc=dict(w=ew, b=eb))


# --------------------------------------------------------------------------
# one-time parameter packing: 4 VMEM slabs instead of ~36 tiny inputs
# --------------------------------------------------------------------------
def _pack_weight_group(slab_name, entries):
    """Pack 2-D weights column-wise into one slab; every block starts at a
    128-aligned column so each in-kernel slice is lane-aligned."""
    max_r = max(int(a.shape[0]) for _, a in entries)
    total_c = sum(_ceil_to(int(a.shape[1]), _LANE) for _, a in entries)
    slab = np.zeros((max_r, total_c), np.float32)
    layout = {}
    col = 0
    for name, a in entries:
        a = np.asarray(a, np.float32)
        r, c = a.shape
        slab[:r, col:col + c] = a
        layout[name] = (slab_name, col, r, c)
        col += _ceil_to(c, _LANE)
    return jnp.asarray(slab), layout


def pack_params(params, *, kin_output_dim, n_waypoints):
    f, k, m, e = params["fdm"], params["kin"], params["mha"], params["enc"]
    t = f["tfm"]
    K = kin_output_dim

    # fused block-diagonal [goal(2) ; waypoints(2n)] -> [wp_proj ; goal_proj]
    wg_w = np.zeros((2 + 2 * n_waypoints, K // 2), np.float32)
    wg_w[2:, :K // 4] = np.asarray(k["wp_w"])
    wg_w[:2, K // 4:] = np.asarray(k["g_w"])
    wg_b = np.concatenate([np.asarray(k["wp_b"]), np.asarray(k["g_b"])], -1)

    w_small, l_small = _pack_weight_group("small", [
        ("he_w", f["he_w"]), ("ce_w", f["ce_w"]),
        ("kin_w1", k["w1"]), ("wg_w", wg_w)])
    w_big, l_big = _pack_weight_group("big", [
        ("tfm_wqkv", t["wqkv"]), ("tfm_wo", t["wo"]), ("tfm_w1", t["w1"]),
        ("fdm_enc_w", f["enc_w"]), ("kin_w2", k["w2"]), ("kin_w4", k["w4"]),
        ("mha_wqkv", m["wqkv"]), ("mha_wo", m["wo"]), ("enc_w", e["w"])])
    w_deep, l_deep = _pack_weight_group("deep", [
        ("tfm_w2", t["w2"]), ("kin_w3", k["w3"])])
    wl = {**l_small, **l_big, **l_deep}

    bias_entries = [
        ("he_b", f["he_b"]), ("ce_b", f["ce_b"]),
        ("tfm_bqkv", t["bqkv"]), ("tfm_bo", t["bo"]),
        ("tfm_b1", t["b1"]), ("tfm_b2", t["b2"]),
        ("ln1_g", t["ln1_g"]), ("ln1_b", t["ln1_b"]),
        ("ln2_g", t["ln2_g"]), ("ln2_b", t["ln2_b"]),
        ("fdm_enc_b", f["enc_b"]),
        ("kin_b1", k["b1"]), ("kin_b2", k["b2"]),
        ("kin_b3", k["b3"]), ("kin_b4", k["b4"]),
        ("wg_b", wg_b),
        ("mha_bqkv", m["bqkv"]), ("mha_bo", m["bo"]),
        ("enc_b", e["b"]),
    ]
    width = _ceil_to(max(int(np.asarray(b).shape[-1]) for _, b in bias_entries),
                     _LANE)
    bslab = np.zeros((len(bias_entries), width), np.float32)
    bl = {}
    for r, (name, b) in enumerate(bias_entries):
        b = np.asarray(b, np.float32).reshape(-1)
        bslab[r, :b.shape[0]] = b
        bl[name] = (r, int(b.shape[0]))

    packed = dict(biases=jnp.asarray(bslab), w_small=w_small,
                  w_big=w_big, w_deep=w_deep)
    layouts = dict(weights=wl, bias=bl)
    return packed, layouts


# --------------------------------------------------------------------------
# pure-JAX reference (mirrors the PyTorch forward; same bf16 dot boundaries)
# --------------------------------------------------------------------------
def _reference_forward(params, observation, *, lidar_dim, kin_input_dim,
                       kin_output_dim, latent_dim, n_history_frame,
                       n_waypoints, d_model=128, nheads=4,
                       mm_dtype=jnp.bfloat16):
    B = observation.shape[0]
    H = n_history_frame
    i1 = kin_input_dim
    i2 = i1 + lidar_dim
    i3 = i2 + H * lidar_dim
    i4 = i3 + 2
    kin_s = observation[:, :i1]
    cur = observation[:, i1:i2][:, None, :]
    hist = observation[:, i2:i3].reshape(B, H, lidar_dim)
    goals = observation[:, i3:i4]
    wpts = observation[:, i4:]

    def lin(x, w, b):
        return jnp.dot(x.astype(mm_dtype), w.astype(mm_dtype),
                       preferred_element_type=jnp.float32) + b

    def leaky(x):
        return jnp.where(x > 0, x, NEG_SLOPE * x)

    def layernorm(x, g, b, eps=1e-5):
        mu = jnp.mean(x, -1, keepdims=True)
        var = jnp.mean((x - mu) ** 2, -1, keepdims=True)
        return (x - mu) / jnp.sqrt(var + eps) * g + b

    def mha(x, m):
        Bq, S, D = x.shape
        hd = D // nheads
        q = lin(x, m["wqkv"][:, :D], m["bqkv"][:, :D]).reshape(Bq, S, nheads, hd)
        k = lin(x, m["wqkv"][:, D:2 * D], m["bqkv"][:, D:2 * D]).reshape(Bq, S, nheads, hd)
        v = lin(x, m["wqkv"][:, 2 * D:], m["bqkv"][:, 2 * D:]).reshape(Bq, S, nheads, hd)
        s = jnp.einsum('bqhd,bkhd->bhqk', q, k) / math.sqrt(hd)
        p = jax.nn.softmax(s, axis=-1)
        o = jnp.einsum('bhqk,bkhd->bqhd', p, v).reshape(Bq, S, D)
        return lin(o, m["wo"], m["bo"])

    f = params["fdm"]
    hs = leaky(lin(hist, f["he_w"], f["he_b"]))
    co = leaky(lin(cur, f["ce_w"], f["ce_b"]))
    x = jnp.concatenate([hs, co], axis=1)
    t = f["tfm"]
    x = layernorm(x + mha(x, t), t["ln1_g"], t["ln1_b"])
    ff = lin(jnp.maximum(lin(x, t["w1"], t["b1"]), 0.0), t["w2"], t["b2"])
    x = layernorm(x + ff, t["ln2_g"], t["ln2_b"])
    env = lin(x, f["enc_w"], f["enc_b"])

    q = params["kin"]
    kk = leaky(lin(kin_s, q["w1"], q["b1"]))
    kk = leaky(lin(kk, q["w2"], q["b2"]))
    kk = leaky(lin(kk, q["w3"], q["b3"]))
    kk = lin(kk, q["w4"], q["b4"])
    robot = jnp.concatenate([kk, lin(wpts, q["wp_w"], q["wp_b"]),
                             lin(goals, q["g_w"], q["g_b"])], axis=-1)
    cat = jnp.concatenate([env, robot[:, None, :]], axis=1)
    out = mha(cat, params["mha"])
    lat = leaky(lin(out, params["enc"]["w"], params["enc"]["b"]))
    return jnp.sum(lat, axis=1)


# --------------------------------------------------------------------------
if __name__ == "__main__":
    B = 2
    lidar_dim = 32
    kin_input_dim = 6
    kin_output_dim = 64
    latent_dim = 32
    n_history_frame = 4
    n_waypoints = 5
    obs_dim = (kin_input_dim + lidar_dim * (n_history_frame + 1)
               + 2 + 2 * n_waypoints)

    key = jax.random.PRNGKey(0)
    pkey, xkey = jax.random.split(key)
    params = init_params(pkey, lidar_dim, kin_input_dim, kin_output_dim,
                         latent_dim, n_waypoints)
    observation = jax.random.normal(xkey, (B, obs_dim), jnp.float32)

    cfg = dict(lidar_dim=lidar_dim, kin_input_dim=kin_input_dim,
               kin_output_dim=kin_output_dim, latent_dim=latent_dim,
               n_history_frame=n_history_frame, n_waypoints=n_waypoints)

    packed, layouts = pack_params(params, kin_output_dim=kin_output_dim,
                                  n_waypoints=n_waypoints)

    fwd = jax.jit(functools.partial(backbone_forward, layouts=layouts, **cfg))
    latent = jax.block_until_ready(fwd(packed, observation))

    ref = _reference_forward(params, observation, **cfg)
    assert latent.shape == (B, latent_dim), latent.shape
    assert bool(jnp.all(jnp.isfinite(latent)))
    err = float(jnp.max(jnp.abs(latent - ref)))
    assert bool(jnp.allclose(latent, ref, rtol=2e-2, atol=2e-2)), err
    print("KERNEL_OK")
</pallas_src>

<mosaic_0001>
module attributes {stable_mosaic.version = 11 : i64} {
  func.func @_backbone_kernel(%arg0: memref<2x178xf32, #tpu.memory_space<vmem>>, %arg1: memref<8x32xf32, #tpu.memory_space<vmem>>, %arg2: memref<12x1xi32, #tpu.memory_space<vmem>>, %arg3: memref<1x12xi32, #tpu.memory_space<vmem>>, %arg4: memref<19x512xf32, #tpu.memory_space<vmem>>, %arg5: memref<32x512xf32, #tpu.memory_space<vmem>>, %arg6: memref<128x2048xf32, #tpu.memory_space<vmem>>, %arg7: memref<512x256xf32, #tpu.memory_space<vmem>>, %arg8: memref<2x32xf32, #tpu.memory_space<vmem>>, %arg9: memref<10x128xf32, #tpu.memory_space<vmem>>, %arg10: memref<12x64xf32, #tpu.memory_space<vmem>>) attributes {dimension_semantics = [], scalar_prefetch = 0 : i64, scratch_operands = 2 : i64, tpu.core_type = #tpu.core_type<tc>} {
    %c0 = arith.constant 0 : index
    %c0_0 = arith.constant 0 : index
    %0 = vector.load %arg0[%c0, %c0_0] : memref<2x178xf32, #tpu.memory_space<vmem>>, vector<2x178xf32>
    %c0_1 = arith.constant 0 : index
    %c0_2 = arith.constant 0 : index
    %1 = vector.load %arg2[%c0_1, %c0_2] : memref<12x1xi32, #tpu.memory_space<vmem>>, vector<12x1xi32>
    %c0_3 = arith.constant 0 : index
    %c0_4 = arith.constant 0 : index
    %2 = vector.load %arg3[%c0_3, %c0_4] : memref<1x12xi32, #tpu.memory_space<vmem>>, vector<1x12xi32>
    %3 = vector.extract_strided_slice %1 {offsets = [0, 0], sizes = [10, 1], strides = [1, 1]} : vector<12x1xi32> to vector<10x1xi32>
    %4 = vector.extract_strided_slice %2 {offsets = [0, 0], sizes = [1, 10], strides = [1, 1]} : vector<1x12xi32> to vector<1x10xi32>
    %5 = vector.broadcast %3 : vector<10x1xi32> to vector<10x10xi32>
    %6 = vector.broadcast %4 : vector<1x10xi32> to vector<10x10xi32>
    %7 = arith.cmpi eq, %5, %6 : vector<10x10xi32>
    %8 = vector.broadcast %1 : vector<12x1xi32> to vector<12x12xi32>
    %9 = vector.broadcast %2 : vector<1x12xi32> to vector<12x12xi32>
    %10 = arith.cmpi eq, %8, %9 : vector<12x12xi32>
    %11 = vector.extract_strided_slice %1 {offsets = [10, 0], sizes = [2, 1], strides = [1, 1]} : vector<12x1xi32> to vector<2x1xi32>
    %12 = vector.broadcast %11 : vector<2x1xi32> to vector<2x12xi32>
    %13 = vector.broadcast %2 : vector<1x12xi32> to vector<2x12xi32>
    %14 = arith.cmpi eq, %12, %13 : vector<2x12xi32>
    %cst = arith.constant 1.000000e+00 : f32
    %cst_5 = arith.constant 0.000000e+00 : f32
    %15 = vector.broadcast %cst : f32 to vector<2x12xf32>
    %16 = vector.broadcast %cst_5 : f32 to vector<2x12xf32>
    %17 = arith.select %14, %15, %16 : vector<2x12xi1>, vector<2x12xf32>
    %c0_6 = arith.constant 0 : index
    %c0_7 = arith.constant 0 : index
    %18 = vector.load %arg1[%c0_6, %c0_7] : memref<8x32xf32, #tpu.memory_space<vmem>>, vector<8x32xf32>
    %c0_8 = arith.constant 0 : index
    %c0_9 = arith.constant 0 : index
    %19 = vector.load %arg5[%c0_8, %c0_9] : memref<32x512xf32, #tpu.memory_space<vmem>>, vector<32x128xf32>
    %20 = arith.truncf %18 : vector<8x32xf32> to vector<8x32xbf16>
    %21 = arith.truncf %19 : vector<32x128xf32> to vector<32x128xbf16>
    %cst_10 = arith.constant dense<0.000000e+00> : vector<8x128xf32>
    %22 = tpu.matmul %20, %21, %cst_10 {dimension_numbers = #tpu.dot_dimension_numbers<[1], [0], [0], [1], [0, 0, 1, 1], [], []>} : vector<8x32xbf16>, vector<32x128xbf16>, vector<8x128xf32> -> vector<8x128xf32>
    %c0_11 = arith.constant 0 : index
    %c0_12 = arith.constant 0 : index
    %23 = vector.load %arg4[%c0_11, %c0_12] : memref<19x512xf32, #tpu.memory_space<vmem>>, vector<1x128xf32>
    %24 = vector.broadcast %23 : vector<1x128xf32> to vector<8x128xf32>
    %25 = arith.addf %22, %24 : vector<8x128xf32>
    %cst_13 = arith.constant 0.000000e+00 : f32
    %26 = vector.broadcast %cst_13 : f32 to vector<8x128xf32>
    %27 = arith.cmpf ogt, %25, %26 : vector<8x128xf32>
    %cst_14 = arith.constant 0.00999999977 : f32
    %28 = vector.broadcast %cst_14 : f32 to vector<8x128xf32>
    %29 = arith.mulf %28, %25 : vector<8x128xf32>
    %30 = arith.select %27, %25, %29 : vector<8x128xi1>, vector<8x128xf32>
    %31 = vector.extract_strided_slice %0 {offsets = [0, 6], sizes = [2, 32], strides = [1, 1]} : vector<2x178xf32> to vector<2x32xf32>
    %c0_15 = arith.constant 0 : index
    %c128 = arith.constant 128 : index
    %32 = vector.load %arg5[%c0_15, %c128] : memref<32x512xf32, #tpu.memory_space<vmem>>, vector<32x128xf32>
    %33 = arith.truncf %31 : vector<2x32xf32> to vector<2x32xbf16>
    %34 = arith.truncf %32 : vector<32x128xf32> to vector<32x128xbf16>
    %cst_16 = arith.constant dense<0.000000e+00> : vector<2x128xf32>
    %35 = tpu.matmul %33, %34, %cst_16 {dimension_numbers = #tpu.dot_dimension_numbers<[1], [0], [0], [1], [0, 0, 1, 1], [], []>} : vector<2x32xbf16>, vector<32x128xbf16>, vector<2x128xf32> -> vector<2x128xf32>
    %c1 = arith.constant 1 : index
    %c0_17 = arith.constant 0 : index
    %36 = vector.load %arg4[%c1, %c0_17] : memref<19x512xf32, #tpu.memory_space<vmem>>, vector<1x128xf32>
    %37 = vector.broadcast %36 : vector<1x128xf32> to vector<2x128xf32>
    %38 = arith.addf %35, %37 : vector<2x128xf32>
    %cst_18 = arith.constant 0.000000e+00 : f32
    %39 = vector.broadcast %cst_18 : f32 to vector<2x128xf32>
    %40 = arith.cmpf ogt, %38, %39 : vector<2x128xf32>
    %cst_19 = arith.constant 0.00999999977 : f32
    %41 = vector.broadcast %cst_19 : f32 to vector<2x128xf32>
    %42 = arith.mulf %41, %38 : vector<2x128xf32>
    %43 = arith.select %40, %38, %42 : vector<2x128xi1>, vector<2x128xf32>
    %c0_20 = arith.constant 0 : index
    %c0_21 = arith.constant 0 : index
    %44 = vector.load %arg9[%c0_20, %c0_21] : memref<10x128xf32, #tpu.memory_space<vmem>>, vector<8x128xf32>
    tpu.vector_store %arg9[%c0_20, %c0_21], %30 {strides = array<i32>} : memref<10x128xf32, #tpu.memory_space<vmem>>, vector<8x128xf32>,
    %c8 = arith.constant 8 : index
    %c0_22 = arith.constant 0 : index
    %45 = vector.load %arg9[%c8, %c0_22] : memref<10x128xf32, #tpu.memory_space<vmem>>, vector<2x128xf32>
    tpu.vector_store %arg9[%c8, %c0_22], %43 {strides = array<i32>} : memref<10x128xf32, #tpu.memory_space<vmem>>, vector<2x128xf32>,
    %c0_23 = arith.constant 0 : index
    %c0_24 = arith.constant 0 : index
    %46 = vector.load %arg9[%c0_23, %c0_24] : memref<10x128xf32, #tpu.memory_space<vmem>>, vector<10x128xf32>
    %c0_25 = arith.constant 0 : index
    %c0_26 = arith.constant 0 : index
    %47 = vector.load %arg6[%c0_25, %c0_26] : memref<128x2048xf32, #tpu.memory_space<vmem>>, vector<128x384xf32>
    %c2 = arith.constant 2 : index
    %c0_27 = arith.constant 0 : index
    %48 = vector.load %arg4[%c2, %c0_27] : memref<19x512xf32, #tpu.memory_space<vmem>>, vector<1x384xf32>
    %c0_28 = arith.constant 0 : index
    %c384 = arith.constant 384 : index
    %49 = vector.load %arg6[%c0_28, %c384] : memref<128x2048xf32, #tpu.memory_space<vmem>>, vector<128x128xf32>
    %c3 = arith.constant 3 : index
    %c0_29 = arith.constant 0 : index
    %50 = vector.load %arg4[%c3, %c0_29] : memref<19x512xf32, #tpu.memory_space<vmem>>, vector<1x128xf32>
    %51 = arith.truncf %46 : vector<10x128xf32> to vector<10x128xbf16>
    %52 = arith.truncf %47 : vector<128x384xf32> to vector<128x384xbf16>
    %cst_30 = arith.constant dense<0.000000e+00> : vector<10x384xf32>
    %53 = tpu.matmul %51, %52, %cst_30 {dimension_numbers = #tpu.dot_dimension_numbers<[1], [0], [0], [1], [0, 0, 1, 1], [], []>} : vector<10x128xbf16>, vector<128x384xbf16>, vector<10x384xf32> -> vector<10x384xf32>
    %54 = vector.broadcast %48 : vector<1x384xf32> to vector<10x384xf32>
    %55 = arith.addf %53, %54 : vector<10x384xf32>
    %56 = vector.extract_strided_slice %55 {offsets = [0, 0], sizes = [10, 32], strides = [1, 1]} : vector<10x384xf32> to vector<10x32xf32>
    %57 = vector.extract_strided_slice %55 {offsets = [0, 128], sizes = [10, 32], strides = [1, 1]} : vector<10x384xf32> to vector<10x32xf32>
    %58 = vector.extract_strided_slice %55 {offsets = [0, 256], sizes = [10, 32], strides = [1, 1]} : vector<10x384xf32> to vector<10x32xf32>
    %cst_31 = arith.constant dense<0.000000e+00> : vector<10x10xf32>
    %59 = tpu.matmul %56, %57, %cst_31 {dimension_numbers = #tpu.dot_dimension_numbers<[1], [1], [0], [0], [0, 0, 1, 0], [], []>} : vector<10x32xf32>, vector<10x32xf32>, vector<10x10xf32> -> vector<10x10xf32>
    %cst_32 = arith.constant 0.176776692 : f32
    %60 = vector.broadcast %cst_32 : f32 to vector<10x10xf32>
    %61 = arith.mulf %59, %60 : vector<10x10xf32>
    %cst_33 = arith.constant -1.000000e+09 : f32
    %62 = vector.broadcast %cst_33 : f32 to vector<10x10xf32>
    %63 = arith.select %7, %61, %62 : vector<10x10xi1>, vector<10x10xf32>
    %cst_34 = arith.constant dense<0xFF800000> : vector<10xf32>
    %64 = vector.multi_reduction <maximumf>, %63, %cst_34 [1] : vector<10x10xf32> to vector<10xf32>
    %65 = vector.shape_cast %64 : vector<10xf32> to vector<10x1xf32>
    %66 = vector.broadcast %65 : vector<10x1xf32> to vector<10x10xf32>
    %67 = arith.subf %63, %66 : vector<10x10xf32>
    %68 = math.exp %67 : vector<10x10xf32>
    %cst_35 = arith.constant dense<0.000000e+00> : vector<10xf32>
    %69 = vector.multi_reduction <add>, %68, %cst_35 [1] : vector<10x10xf32> to vector<10xf32>
    %70 = vector.shape_cast %69 : vector<10xf32> to vector<10x1xf32>
    %71 = vector.broadcast %70 : vector<10x1xf32> to vector<10x10xf32>
    %72 = arith.divf %68, %71 : vector<10x10xf32>
    %cst_36 = arith.constant dense<0.000000e+00> : vector<10x32xf32>
    %73 = tpu.matmul %72, %58, %cst_36 {dimension_numbers = #tpu.dot_dimension_numbers<[1], [0], [0], [1], [0, 0, 1, 1], [], []>} : vector<10x10xf32>, vector<10x32xf32>, vector<10x32xf32> -> vector<10x32xf32>
    %74 = vector.extract_strided_slice %49 {offsets = [0, 0], sizes = [32, 128], strides = [1, 1]} : vector<128x128xf32> to vector<32x128xf32>
    %75 = arith.truncf %73 : vector<10x32xf32> to vector<10x32xbf16>
    %76 = arith.truncf %74 : vector<32x128xf32> to vector<32x128xbf16>
    %cst_37 = arith.constant dense<0.000000e+00> : vector<10x128xf32>
    %77 = tpu.matmul %75, %76, %cst_37 {dimension_numbers = #tpu.dot_dimension_numbers<[1], [0], [0], [1], [0, 0, 1, 1], [], []>} : vector<10x32xbf16>, vector<32x128xbf16>, vector<10x128xf32> -> vector<10x128xf32>
    %78 = vector.extract_strided_slice %55 {offsets = [0, 32], sizes = [10, 32], strides = [1, 1]} : vector<10x384xf32> to vector<10x32xf32>
    %79 = vector.extract_strided_slice %55 {offsets = [0, 160], sizes = [10, 32], strides = [1, 1]} : vector<10x384xf32> to vector<10x32xf32>
    %80 = vector.extract_strided_slice %55 {offsets = [0, 288], sizes = [10, 32], strides = [1, 1]} : vector<10x384xf32> to vector<10x32xf32>
    %cst_38 = arith.constant dense<0.000000e+00> : vector<10x10xf32>
    %81 = tpu.matmul %78, %79, %cst_38 {dimension_numbers = #tpu.dot_dimension_numbers<[1], [1], [0], [0], [0, 0, 1, 0], [], []>} : vector<10x32xf32>, vector<10x32xf32>, vector<10x10xf32> -> vector<10x10xf32>
    %cst_39 = arith.constant 0.176776692 : f32
    %82 = vector.broadcast %cst_39 : f32 to vector<10x10xf32>
    %83 = arith.mulf %81, %82 : vector<10x10xf32>
    %cst_40 = arith.constant -1.000000e+09 : f32
    %84 = vector.broadcast %cst_40 : f32 to vector<10x10xf32>
    %85 = arith.select %7, %83, %84 : vector<10x10xi1>, vector<10x10xf32>
    %cst_41 = arith.constant dense<0xFF800000> : vector<10xf32>
    %86 = vector.multi_reduction <maximumf>, %85, %cst_41 [1] : vector<10x10xf32> to vector<10xf32>
    %87 = vector.shape_cast %86 : vector<10xf32> to vector<10x1xf32>
    %88 = vector.broadcast %87 : vector<10x1xf32> to vector<10x10xf32>
    %89 = arith.subf %85, %88 : vector<10x10xf32>
    %90 = math.exp %89 : vector<10x10xf32>
    %cst_42 = arith.constant dense<0.000000e+00> : vector<10xf32>
    %91 = vector.multi_reduction <add>, %90, %cst_42 [1] : vector<10x10xf32> to vector<10xf32>
    %92 = vector.shape_cast %91 : vector<10xf32> to vector<10x1xf32>
    %93 = vector.broadcast %92 : vector<10x1xf32> to vector<10x10xf32>
    %94 = arith.divf %90, %93 : vector<10x10xf32>
    %cst_43 = arith.constant dense<0.000000e+00> : vector<10x32xf32>
    %95 = tpu.matmul %94, %80, %cst_43 {dimension_numbers = #tpu.dot_dimension_numbers<[1], [0], [0], [1], [0, 0, 1, 1], [], []>} : vector<10x10xf32>, vector<10x32xf32>, vector<10x32xf32> -> vector<10x32xf32>
    %96 = vector.extract_strided_slice %49 {offsets = [32, 0], sizes = [32, 128], strides = [1, 1]} : vector<128x128xf32> to vector<32x128xf32>
    %97 = arith.truncf %95 : vector<10x32xf32> to vector<10x32xbf16>
    %98 = arith.truncf %96 : vector<32x128xf32> to vector<32x128xbf16>
    %cst_44 = arith.constant dense<0.000000e+00> : vector<10x128xf32>
    %99 = tpu.matmul %97, %98, %cst_44 {dimension_numbers = #tpu.dot_dimension_numbers<[1], [0], [0], [1], [0, 0, 1, 1], [], []>} : vector<10x32xbf16>, vector<32x128xbf16>, vector<10x128xf32> -> vector<10x128xf32>
    %100 = arith.addf %77, %99 : vector<10x128xf32>
    %101 = vector.extract_strided_slice %55 {offsets = [0, 64], sizes = [10, 32], strides = [1, 1]} : vector<10x384xf32> to vector<10x32xf32>
    %102 = vector.extract_strided_slice %55 {offsets = [0, 192], sizes = [10, 32], strides = [1, 1]} : vector<10x384xf32> to vector<10x32xf32>
    %103 = vector.extract_strided_slice %55 {offsets = [0, 320], sizes = [10, 32], strides = [1, 1]} : vector<10x384xf32> to vector<10x32xf32>
    %cst_45 = arith.constant dense<0.000000e+00> : vector<10x10xf32>
    %104 = tpu.matmul %101, %102, %cst_45 {dimension_numbers = #tpu.dot_dimension_numbers<[1], [1], [0], [0], [0, 0, 1, 0], [], []>} : vector<10x32xf32>, vector<10x32xf32>, vector<10x10xf32> -> vector<10x10xf32>
    %cst_46 = arith.constant 0.176776692 : f32
    %105 = vector.broadcast %cst_46 : f32 to vector<10x10xf32>
    %106 = arith.mulf %104, %105 : vector<10x10xf32>
    %cst_47 = arith.constant -1.000000e+09 : f32
    %107 = vector.broadcast %cst_47 : f32 to vector<10x10xf32>
    %108 = arith.select %7, %106, %107 : vector<10x10xi1>, vector<10x10xf32>
    %cst_48 = arith.constant dense<0xFF800000> : vector<10xf32>
    %109 = vector.multi_reduction <maximumf>, %108, %cst_48 [1] : vector<10x10xf32> to vector<10xf32>
    %110 = vector.shape_cast %109 : vector<10xf32> to vector<10x1xf32>
    %111 = vector.broadcast %110 : vector<10x1xf32> to vector<10x10xf32>
    %112 = arith.subf %108, %111 : vector<10x10xf32>
    %113 = math.exp %112 : vector<10x10xf32>
    %cst_49 = arith.constant dense<0.000000e+00> : vector<10xf32>
    %114 = vector.multi_reduction <add>, %113, %cst_49 [1] : vector<10x10xf32> to vector<10xf32>
    %115 = vector.shape_cast %114 : vector<10xf32> to vector<10x1xf32>
    %116 = vector.broadcast %115 : vector<10x1xf32> to vector<10x10xf32>
    %117 = arith.divf %113, %116 : vector<10x10xf32>
    %cst_50 = arith.constant dense<0.000000e+00> : vector<10x32xf32>
    %118 = tpu.matmul %117, %103, %cst_50 {dimension_numbers = #tpu.dot_dimension_numbers<[1], [0], [0], [1], [0, 0, 1, 1], [], []>} : vector<10x10xf32>, vector<10x32xf32>, vector<10x32xf32> -> vector<10x32xf32>
    %119 = vector.extract_strided_slice %49 {offsets = [64, 0], sizes = [32, 128], strides = [1, 1]} : vector<128x128xf32> to vector<32x128xf32>
    %120 = arith.truncf %118 : vector<10x32xf32> to vector<10x32xbf16>
    %121 = arith.truncf %119 : vector<32x128xf32> to vector<32x128xbf16>
    %cst_51 = arith.constant dense<0.000000e+00> : vector<10x128xf32>
    %122 = tpu.matmul %120, %121, %cst_51 {dimension_numbers = #tpu.dot_dimension_numbers<[1], [0], [0], [1], [0, 0, 1, 1], [], []>} : vector<10x32xbf16>, vector<32x128xbf16>, vector<10x128xf32> -> vector<10x128xf32>
    %123 = arith.addf %100, %122 : vector<10x128xf32>
    %124 = vector.extract_strided_slice %55 {offsets = [0, 96], sizes = [10, 32], strides = [1, 1]} : vector<10x384xf32> to vector<10x32xf32>
    %125 = vector.extract_strided_slice %55 {offsets = [0, 224], sizes = [10, 32], strides = [1, 1]} : vector<10x384xf32> to vector<10x32xf32>
    %126 = vector.extract_strided_slice %55 {offsets = [0, 352], sizes = [10, 32], strides = [1, 1]} : vector<10x384xf32> to vector<10x32xf32>
    %cst_52 = arith.constant dense<0.000000e+00> : vector<10x10xf32>
    %127 = tpu.matmul %124, %125, %cst_52 {dimension_numbers = #tpu.dot_dimension_numbers<[1], [1], [0], [0], [0, 0, 1, 0], [], []>} : vector<10x32xf32>, vector<10x32xf32>, vector<10x10xf32> -> vector<10x10xf32>
    %cst_53 = arith.constant 0.176776692 : f32
    %128 = vector.broadcast %cst_53 : f32 to vector<10x10xf32>
    %129 = arith.mulf %127, %128 : vector<10x10xf32>
    %cst_54 = arith.constant -1.000000e+09 : f32
    %130 = vector.broadcast %cst_54 : f32 to vector<10x10xf32>
    %131 = arith.select %7, %129, %130 : vector<10x10xi1>, vector<10x10xf32>
    %cst_55 = arith.constant dense<0xFF800000> : vector<10xf32>
    %132 = vector.multi_reduction <maximumf>, %131, %cst_55 [1] : vector<10x10xf32> to vector<10xf32>
    %133 = vector.shape_cast %132 : vector<10xf32> to vector<10x1xf32>
    %134 = vector.broadcast %133 : vector<10x1xf32> to vector<10x10xf32>
    %135 = arith.subf %131, %134 : vector<10x10xf32>
    %136 = math.exp %135 : vector<10x10xf32>
    %cst_56 = arith.constant dense<0.000000e+00> : vector<10xf32>
    %137 = vector.multi_reduction <add>, %136, %cst_56 [1] : vector<10x10xf32> to vector<10xf32>
    %138 = vector.shape_cast %137 : vector<10xf32> to vector<10x1xf32>
    %139 = vector.broadcast %138 : vector<10x1xf32> to vector<10x10xf32>
    %140 = arith.divf %136, %139 : vector<10x10xf32>
    %cst_57 = arith.constant dense<0.000000e+00> : vector<10x32xf32>
    %141 = tpu.matmul %140, %126, %cst_57 {dimension_numbers = #tpu.dot_dimension_numbers<[1], [0], [0], [1], [0, 0, 1, 1], [], []>} : vector<10x10xf32>, vector<10x32xf32>, vector<10x32xf32> -> vector<10x32xf32>
    %142 = vector.extract_strided_slice %49 {offsets = [96, 0], sizes = [32, 128], strides = [1, 1]} : vector<128x128xf32> to vector<32x128xf32>
    %143 = arith.truncf %141 : vector<10x32xf32> to vector<10x32xbf16>
    %144 = arith.truncf %142 : vector<32x128xf32> to vector<32x128xbf16>
    %cst_58 = arith.constant dense<0.000000e+00> : vector<10x128xf32>
    %145 = tpu.matmul %143, %144, %cst_58 {dimension_numbers = #tpu.dot_dimension_numbers<[1], [0], [0], [1], [0, 0, 1, 1], [], []>} : vector<10x32xbf16>, vector<32x128xbf16>, vector<10x128xf32> -> vector<10x128xf32>
    %146 = arith.addf %123, %145 : vector<10x128xf32>
    %147 = vector.broadcast %50 : vector<1x128xf32> to vector<10x128xf32>
    %148 = arith.addf %146, %147 : vector<10x128xf32>
    %149 = arith.addf %46, %148 : vector<10x128xf32>
    %c6 = arith.constant 6 : index
    %c0_59 = arith.constant 0 : index
    %150 = vector.load %arg4[%c6, %c0_59] : memref<19x512xf32, #tpu.memory_space<vmem>>, vector<1x128xf32>
    %c7 = arith.constant 7 : index
    %c0_60 = arith.constant 0 : index
    %151 = vector.load %arg4[%c7, %c0_60] : memref<19x512xf32, #tpu.memory_space<vmem>>, vector<1x128xf32>
    %cst_61 = arith.constant dense<0.000000e+00> : vector<10xf32>
    %152 = vector.multi_reduction <add>, %149, %cst_61 [1] : vector<10x128xf32> to vector<10xf32>
    %153 = vector.shape_cast %152 : vector<10xf32> to vector<10x1xf32>
    %cst_62 = arith.constant 1.280000e+02 : f32
    %154 = vector.broadcast %cst_62 : f32 to vector<10x1xf32>
    %155 = arith.divf %153, %154 : vector<10x1xf32>
    %156 = vector.broadcast %155 : vector<10x1xf32> to vector<10x128xf32>
    %157 = arith.subf %149, %156 : vector<10x128xf32>
    %158 = arith.mulf %157, %157 : vector<10x128xf32>
    %cst_63 = arith.constant dense<0.000000e+00> : vector<10xf32>
    %159 = vector.multi_reduction <add>, %158, %cst_63 [1] : vector<10x128xf32> to vector<10xf32>
    %160 = vector.shape_cast %159 : vector<10xf32> to vector<10x1xf32>
    %cst_64 = arith.constant 1.280000e+02 : f32
    %161 = vector.broadcast %cst_64 : f32 to vector<10x1xf32>
    %162 = arith.divf %160, %161 : vector<10x1xf32>
    %163 = vector.broadcast %155 : vector<10x1xf32> to vector<10x128xf32>
    %164 = arith.subf %149, %163 : vector<10x128xf32>
    %cst_65 = arith.constant 9.99999974E-6 : f32
    %165 = vector.broadcast %cst_65 : f32 to vector<10x1xf32>
    %166 = arith.addf %162, %165 : vector<10x1xf32>
    %167 = math.rsqrt %166 : vector<10x1xf32>
    %168 = vector.broadcast %167 : vector<10x1xf32> to vector<10x128xf32>
    %169 = arith.mulf %164, %168 : vector<10x128xf32>
    %170 = vector.broadcast %150 : vector<1x128xf32> to vector<10x128xf32>
    %171 = arith.mulf %169, %170 : vector<10x128xf32>
    %172 = vector.broadcast %151 : vector<1x128xf32> to vector<10x128xf32>
    %173 = arith.addf %171, %172 : vector<10x128xf32>
    %c0_66 = arith.constant 0 : index
    %c512 = arith.constant 512 : index
    %174 = vector.load %arg6[%c0_66, %c512] : memref<128x2048xf32, #tpu.memory_space<vmem>>, vector<128x512xf32>
    %175 = arith.truncf %173 : vector<10x128xf32> to vector<10x128xbf16>
    %176 = arith.truncf %174 : vector<128x512xf32> to vector<128x512xbf16>
    %cst_67 = arith.constant dense<0.000000e+00> : vector<10x512xf32>
    %177 = tpu.matmul %175, %176, %cst_67 {dimension_numbers = #tpu.dot_dimension_numbers<[1], [0], [0], [1], [0, 0, 1, 1], [], []>} : vector<10x128xbf16>, vector<128x512xbf16>, vector<10x512xf32> -> vector<10x512xf32>
    %c4 = arith.constant 4 : index
    %c0_68 = arith.constant 0 : index
    %178 = vector.load %arg4[%c4, %c0_68] : memref<19x512xf32, #tpu.memory_space<vmem>>, vector<1x512xf32>
    %179 = vector.broadcast %178 : vector<1x512xf32> to vector<10x512xf32>
    %180 = arith.addf %177, %179 : vector<10x512xf32>
    %cst_69 = arith.constant 0.000000e+00 : f32
    %181 = vector.broadcast %cst_69 : f32 to vector<10x512xf32>
    %182 = arith.maximumf %180, %181 : vector<10x512xf32>
    %c0_70 = arith.constant 0 : index
    %c0_71 = arith.constant 0 : index
    %183 = vector.load %arg7[%c0_70, %c0_71] : memref<512x256xf32, #tpu.memory_space<vmem>>, vector<512x128xf32>
    %184 = arith.truncf %182 : vector<10x512xf32> to vector<10x512xbf16>
    %185 = arith.truncf %183 : vector<512x128xf32> to vector<512x128xbf16>
    %cst_72 = arith.constant dense<0.000000e+00> : vector<10x128xf32>
    %186 = tpu.matmul %184, %185, %cst_72 {dimension_numbers = #tpu.dot_dimension_numbers<[1], [0], [0], [1], [0, 0, 1, 1], [], []>} : vector<10x512xbf16>, vector<512x128xbf16>, vector<10x128xf32> -> vector<10x128xf32>
    %c5 = arith.constant 5 : index
    %c0_73 = arith.constant 0 : index
    %187 = vector.load %arg4[%c5, %c0_73] : memref<19x512xf32, #tpu.memory_space<vmem>>, vector<1x128xf32>
    %188 = vector.broadcast %187 : vector<1x128xf32> to vector<10x128xf32>
    %189 = arith.addf %186, %188 : vector<10x128xf32>
    %190 = arith.addf %173, %189 : vector<10x128xf32>
    %c8_74 = arith.constant 8 : index
    %c0_75 = arith.constant 0 : index
    %191 = vector.load %arg4[%c8_74, %c0_75] : memref<19x512xf32, #tpu.memory_space<vmem>>, vector<1x128xf32>
    %c9 = arith.constant 9 : index
    %c0_76 = arith.constant 0 : index
    %192 = vector.load %arg4[%c9, %c0_76] : memref<19x512xf32, #tpu.memory_space<vmem>>, vector<1x128xf32>
    %cst_77 = arith.constant dense<0.000000e+00> : vector<10xf32>
    %193 = vector.multi_reduction <add>, %190, %cst_77 [1] : vector<10x128xf32> to vector<10xf32>
    %194 = vector.shape_cast %193 : vector<10xf32> to vector<10x1xf32>
    %cst_78 = arith.constant 1.280000e+02 : f32
    %195 = vector.broadcast %cst_78 : f32 to vector<10x1xf32>
    %196 = arith.divf %194, %195 : vector<10x1xf32>
    %197 = vector.broadcast %196 : vector<10x1xf32> to vector<10x128xf32>
    %198 = arith.subf %190, %197 : vector<10x128xf32>
    %199 = arith.mulf %198, %198 : vector<10x128xf32>
    %cst_79 = arith.constant dense<0.000000e+00> : vector<10xf32>
    %200 = vector.multi_reduction <add>, %199, %cst_79 [1] : vector<10x128xf32> to vector<10xf32>
    %201 = vector.shape_cast %200 : vector<10xf32> to vector<10x1xf32>
    %cst_80 = arith.constant 1.280000e+02 : f32
    %202 = vector.broadcast %cst_80 : f32 to vector<10x1xf32>
    %203 = arith.divf %201, %202 : vector<10x1xf32>
    %204 = vector.broadcast %196 : vector<10x1xf32> to vector<10x128xf32>
    %205 = arith.subf %190, %204 : vector<10x128xf32>
    %cst_81 = arith.constant 9.99999974E-6 : f32
    %206 = vector.broadcast %cst_81 : f32 to vector<10x1xf32>
    %207 = arith.addf %203, %206 : vector<10x1xf32>
    %208 = math.rsqrt %207 : vector<10x1xf32>
    %209 = vector.broadcast %208 : vector<10x1xf32> to vector<10x128xf32>
    %210 = arith.mulf %205, %209 : vector<10x128xf32>
    %211 = vector.broadcast %191 : vector<1x128xf32> to vector<10x128xf32>
    %212 = arith.mulf %210, %211 : vector<10x128xf32>
    %213 = vector.broadcast %192 : vector<1x128xf32> to vector<10x128xf32>
    %214 = arith.addf %212, %213 : vector<10x128xf32>
    %c0_82 = arith.constant 0 : index
    %c1024 = arith.constant 1024 : index
    %215 = vector.load %arg6[%c0_82, %c1024] : memref<128x2048xf32, #tpu.memory_space<vmem>>, vector<128x64xf32>
    %216 = arith.truncf %214 : vector<10x128xf32> to vector<10x128xbf16>
    %217 = arith.truncf %215 : vector<128x64xf32> to vector<128x64xbf16>
    %cst_83 = arith.constant dense<0.000000e+00> : vector<10x64xf32>
    %218 = tpu.matmul %216, %217, %cst_83 {dimension_numbers = #tpu.dot_dimension_numbers<[1], [0], [0], [1], [0, 0, 1, 1], [], []>} : vector<10x128xbf16>, vector<128x64xbf16>, vector<10x64xf32> -> vector<10x64xf32>
    %c10 = arith.constant 10 : index
    %c0_84 = arith.constant 0 : index
    %219 = vector.load %arg4[%c10, %c0_84] : memref<19x512xf32, #tpu.memory_space<vmem>>, vector<1x64xf32>
    %220 = vector.broadcast %219 : vector<1x64xf32> to vector<10x64xf32>
    %221 = arith.addf %218, %220 : vector<10x64xf32>
    %222 = vector.extract_strided_slice %0 {offsets = [0, 0], sizes = [2, 6], strides = [1, 1]} : vector<2x178xf32> to vector<2x6xf32>
    %c0_85 = arith.constant 0 : index
    %c256 = arith.constant 256 : index
    %223 = vector.load %arg5[%c0_85, %c256] : memref<32x512xf32, #tpu.memory_space<vmem>>, vector<6x128xf32>
    %224 = arith.truncf %222 : vector<2x6xf32> to vector<2x6xbf16>
    %225 = arith.truncf %223 : vector<6x128xf32> to vector<6x128xbf16>
    %cst_86 = arith.constant dense<0.000000e+00> : vector<2x128xf32>
    %226 = tpu.matmul %224, %225, %cst_86 {dimension_numbers = #tpu.dot_dimension_numbers<[1], [0], [0], [1], [0, 0, 1, 1], [], []>} : vector<2x6xbf16>, vector<6x128xbf16>, vector<2x128xf32> -> vector<2x128xf32>
    %c11 = arith.constant 11 : index
    %c0_87 = arith.constant 0 : index
    %227 = vector.load %arg4[%c11, %c0_87] : memref<19x512xf32, #tpu.memory_space<vmem>>, vector<1x128xf32>
    %228 = vector.broadcast %227 : vector<1x128xf32> to vector<2x128xf32>
    %229 = arith.addf %226, %228 : vector<2x128xf32>
    %cst_88 = arith.constant 0.000000e+00 : f32
    %230 = vector.broadcast %cst_88 : f32 to vector<2x128xf32>
    %231 = arith.cmpf ogt, %229, %230 : vector<2x128xf32>
    %cst_89 = arith.constant 0.00999999977 : f32
    %232 = vector.broadcast %cst_89 : f32 to vector<2x128xf32>
    %233 = arith.mulf %232, %229 : vector<2x128xf32>
    %234 = arith.select %231, %229, %233 : vector<2x128xi1>, vector<2x128xf32>
    %c0_90 = arith.constant 0 : index
    %c1152 = arith.constant 1152 : index
    %235 = vector.load %arg6[%c0_90, %c1152] : memref<128x2048xf32, #tpu.memory_space<vmem>>, vector<128x256xf32>
    %236 = arith.truncf %234 : vector<2x128xf32> to vector<2x128xbf16>
    %237 = arith.truncf %235 : vector<128x256xf32> to vector<128x256xbf16>
    %cst_91 = arith.constant dense<0.000000e+00> : vector<2x256xf32>
    %238 = tpu.matmul %236, %237, %cst_91 {dimension_numbers = #tpu.dot_dimension_numbers<[1], [0], [0], [1], [0, 0, 1, 1], [], []>} : vector<2x128xbf16>, vector<128x256xbf16>, vector<2x256xf32> -> vector<2x256xf32>
    %c12 = arith.constant 12 : index
    %c0_92 = arith.constant 0 : index
    %239 = vector.load %arg4[%c12, %c0_92] : memref<19x512xf32, #tpu.memory_space<vmem>>, vector<1x256xf32>
    %240 = vector.broadcast %239 : vector<1x256xf32> to vector<2x256xf32>
    %241 = arith.addf %238, %240 : vector<2x256xf32>
    %cst_93 = arith.constant 0.000000e+00 : f32
    %242 = vector.broadcast %cst_93 : f32 to vector<2x256xf32>
    %243 = arith.cmpf ogt, %241, %242 : vector<2x256xf32>
    %cst_94 = arith.constant 0.00999999977 : f32
    %244 = vector.broadcast %cst_94 : f32 to vector<2x256xf32>
    %245 = arith.mulf %244, %241 : vector<2x256xf32>
    %246 = arith.select %243, %241, %245 : vector<2x256xi1>, vector<2x256xf32>
    %c0_95 = arith.constant 0 : index
    %c128_96 = arith.constant 128 : index
    %247 = vector.load %arg7[%c0_95, %c128_96] : memref<512x256xf32, #tpu.memory_space<vmem>>, vector<256x128xf32>
    %248 = arith.truncf %246 : vector<2x256xf32> to vector<2x256xbf16>
    %249 = arith.truncf %247 : vector<256x128xf32> to vector<256x128xbf16>
    %cst_97 = arith.constant dense<0.000000e+00> : vector<2x128xf32>
    %250 = tpu.matmul %248, %249, %cst_97 {dimension_numbers = #tpu.dot_dimension_numbers<[1], [0], [0], [1], [0, 0, 1, 1], [], []>} : vector<2x256xbf16>, vector<256x128xbf16>, vector<2x128xf32> -> vector<2x128xf32>
    %c13 = arith.constant 13 : index
    %c0_98 = arith.constant 0 : index
    %251 = vector.load %arg4[%c13, %c0_98] : memref<19x512xf32, #tpu.memory_space<vmem>>, vector<1x128xf32>
    %252 = vector.broadcast %251 : vector<1x128xf32> to vector<2x128xf32>
    %253 = arith.addf %250, %252 : vector<2x128xf32>
    %cst_99 = arith.constant 0.000000e+00 : f32
    %254 = vector.broadcast %cst_99 : f32 to vector<2x128xf32>
    %255 = arith.cmpf ogt, %253, %254 : vector<2x128xf32>
    %cst_100 = arith.constant 0.00999999977 : f32
    %256 = vector.broadcast %cst_100 : f32 to vector<2x128xf32>
    %257 = arith.mulf %256, %253 : vector<2x128xf32>
    %258 = arith.select %255, %253, %257 : vector<2x128xi1>, vector<2x128xf32>
    %c0_101 = arith.constant 0 : index
    %c1408 = arith.constant 1408 : index
    %259 = vector.load %arg6[%c0_101, %c1408] : memref<128x2048xf32, #tpu.memory_space<vmem>>, vector<128x32xf32>
    %260 = arith.truncf %258 : vector<2x128xf32> to vector<2x128xbf16>
    %261 = arith.truncf %259 : vector<128x32xf32> to vector<128x32xbf16>
    %cst_102 = arith.constant dense<0.000000e+00> : vector<2x32xf32>
    %262 = tpu.matmul %260, %261, %cst_102 {dimension_numbers = #tpu.dot_dimension_numbers<[1], [0], [0], [1], [0, 0, 1, 1], [], []>} : vector<2x128xbf16>, vector<128x32xbf16>, vector<2x32xf32> -> vector<2x32xf32>
    %c14 = arith.constant 14 : index
    %c0_103 = arith.constant 0 : index
    %263 = vector.load %arg4[%c14, %c0_103] : memref<19x512xf32, #tpu.memory_space<vmem>>, vector<1x32xf32>
    %264 = vector.broadcast %263 : vector<1x32xf32> to vector<2x32xf32>
    %265 = arith.addf %262, %264 : vector<2x32xf32>
    %266 = vector.extract_strided_slice %0 {offsets = [0, 166], sizes = [2, 12], strides = [1, 1]} : vector<2x178xf32> to vector<2x12xf32>
    %c0_104 = arith.constant 0 : index
    %c384_105 = arith.constant 384 : index
    %267 = vector.load %arg5[%c0_104, %c384_105] : memref<32x512xf32, #tpu.memory_space<vmem>>, vector<12x32xf32>
    %268 = arith.truncf %266 : vector<2x12xf32> to vector<2x12xbf16>
    %269 = arith.truncf %267 : vector<12x32xf32> to vector<12x32xbf16>
    %cst_106 = arith.constant dense<0.000000e+00> : vector<2x32xf32>
    %270 = tpu.matmul %268, %269, %cst_106 {dimension_numbers = #tpu.dot_dimension_numbers<[1], [0], [0], [1], [0, 0, 1, 1], [], []>} : vector<2x12xbf16>, vector<12x32xbf16>, vector<2x32xf32> -> vector<2x32xf32>
    %c15 = arith.constant 15 : index
    %c0_107 = arith.constant 0 : index
    %271 = vector.load %arg4[%c15, %c0_107] : memref<19x512xf32, #tpu.memory_space<vmem>>, vector<1x32xf32>
    %272 = vector.broadcast %271 : vector<1x32xf32> to vector<2x32xf32>
    %273 = arith.addf %270, %272 : vector<2x32xf32>
    %c0_108 = arith.constant 0 : index
    %c0_109 = arith.constant 0 : index
    %274 = vector.load %arg10[%c0_108, %c0_109] : memref<12x64xf32, #tpu.memory_space<vmem>>, vector<10x64xf32>
    tpu.vector_store %arg10[%c0_108, %c0_109], %221 {strides = array<i32>} : memref<12x64xf32, #tpu.memory_space<vmem>>, vector<10x64xf32>,
    %c10_110 = arith.constant 10 : index
    %c0_111 = arith.constant 0 : index
    %275 = vector.load %arg10[%c10_110, %c0_111] : memref<12x64xf32, #tpu.memory_space<vmem>>, vector<2x32xf32>
    tpu.vector_store %arg10[%c10_110, %c0_111], %265 {strides = array<i32>} : memref<12x64xf32, #tpu.memory_space<vmem>>, vector<2x32xf32>,
    %c10_112 = arith.constant 10 : index
    %c32 = arith.constant 32 : index
    %276 = vector.load %arg10[%c10_112, %c32] : memref<12x64xf32, #tpu.memory_space<vmem>>, vector<2x32xf32>
    tpu.vector_store %arg10[%c10_112, %c32], %273 {strides = array<i32>} : memref<12x64xf32, #tpu.memory_space<vmem>>, vector<2x32xf32>,
    %c0_113 = arith.constant 0 : index
    %c0_114 = arith.constant 0 : index
    %277 = vector.load %arg10[%c0_113, %c0_114] : memref<12x64xf32, #tpu.memory_space<vmem>>, vector<12x64xf32>
    %c0_115 = arith.constant 0 : index
    %c1536 = arith.constant 1536 : index
    %278 = vector.load %arg6[%c0_115, %c1536] : memref<128x2048xf32, #tpu.memory_space<vmem>>, vector<64x192xf32>
    %c16 = arith.constant 16 : index
    %c0_116 = arith.constant 0 : index
    %279 = vector.load %arg4[%c16, %c0_116] : memref<19x512xf32, #tpu.memory_space<vmem>>, vector<1x192xf32>
    %c0_117 = arith.constant 0 : index
    %c1792 = arith.constant 1792 : index
    %280 = vector.load %arg6[%c0_117, %c1792] : memref<128x2048xf32, #tpu.memory_space<vmem>>, vector<64x64xf32>
    %c17 = arith.constant 17 : index
    %c0_118 = arith.constant 0 : index
    %281 = vector.load %arg4[%c17, %c0_118] : memref<19x512xf32, #tpu.memory_space<vmem>>, vector<1x64xf32>
    %282 = arith.truncf %277 : vector<12x64xf32> to vector<12x64xbf16>
    %283 = arith.truncf %278 : vector<64x192xf32> to vector<64x192xbf16>
    %cst_119 = arith.constant dense<0.000000e+00> : vector<12x192xf32>
    %284 = tpu.matmul %282, %283, %cst_119 {dimension_numbers = #tpu.dot_dimension_numbers<[1], [0], [0], [1], [0, 0, 1, 1], [], []>} : vector<12x64xbf16>, vector<64x192xbf16>, vector<12x192xf32> -> vector<12x192xf32>
    %285 = vector.broadcast %279 : vector<1x192xf32> to vector<12x192xf32>
    %286 = arith.addf %284, %285 : vector<12x192xf32>
    %287 = vector.extract_strided_slice %286 {offsets = [0, 0], sizes = [12, 16], strides = [1, 1]} : vector<12x192xf32> to vector<12x16xf32>
    %288 = vector.extract_strided_slice %286 {offsets = [0, 64], sizes = [12, 16], strides = [1, 1]} : vector<12x192xf32> to vector<12x16xf32>
    %289 = vector.extract_strided_slice %286 {offsets = [0, 128], sizes = [12, 16], strides = [1, 1]} : vector<12x192xf32> to vector<12x16xf32>
    %cst_120 = arith.constant dense<0.000000e+00> : vector<12x12xf32>
    %290 = tpu.matmul %287, %288, %cst_120 {dimension_numbers = #tpu.dot_dimension_numbers<[1], [1], [0], [0], [0, 0, 1, 0], [], []>} : vector<12x16xf32>, vector<12x16xf32>, vector<12x12xf32> -> vector<12x12xf32>
    %cst_121 = arith.constant 2.500000e-01 : f32
    %291 = vector.broadcast %cst_121 : f32 to vector<12x12xf32>
    %292 = arith.mulf %290, %291 : vector<12x12xf32>
    %cst_122 = arith.constant -1.000000e+09 : f32
    %293 = vector.broadcast %cst_122 : f32 to vector<12x12xf32>
    %294 = arith.select %10, %292, %293 : vector<12x12xi1>, vector<12x12xf32>
    %cst_123 = arith.constant dense<0xFF800000> : vector<12xf32>
    %295 = vector.multi_reduction <maximumf>, %294, %cst_123 [1] : vector<12x12xf32> to vector<12xf32>
    %296 = vector.shape_cast %295 : vector<12xf32> to vector<12x1xf32>
    %297 = vector.broadcast %296 : vector<12x1xf32> to vector<12x12xf32>
    %298 = arith.subf %294, %297 : vector<12x12xf32>
    %299 = math.exp %298 : vector<12x12xf32>
    %cst_124 = arith.constant dense<0.000000e+00> : vector<12xf32>
    %300 = vector.multi_reduction <add>, %299, %cst_124 [1] : vector<12x12xf32> to vector<12xf32>
    %301 = vector.shape_cast %300 : vector<12xf32> to vector<12x1xf32>
    %302 = vector.broadcast %301 : vector<12x1xf32> to vector<12x12xf32>
    %303 = arith.divf %299, %302 : vector<12x12xf32>
    %cst_125 = arith.constant dense<0.000000e+00> : vector<12x16xf32>
    %304 = tpu.matmul %303, %289, %cst_125 {dimension_numbers = #tpu.dot_dimension_numbers<[1], [0], [0], [1], [0, 0, 1, 1], [], []>} : vector<12x12xf32>, vector<12x16xf32>, vector<12x16xf32> -> vector<12x16xf32>
    %305 = vector.extract_strided_slice %280 {offsets = [0, 0], sizes = [16, 64], strides = [1, 1]} : vector<64x64xf32> to vector<16x64xf32>
    %306 = arith.truncf %304 : vector<12x16xf32> to vector<12x16xbf16>
    %307 = arith.truncf %305 : vector<16x64xf32> to vector<16x64xbf16>
    %cst_126 = arith.constant dense<0.000000e+00> : vector<12x64xf32>
    %308 = tpu.matmul %306, %307, %cst_126 {dimension_numbers = #tpu.dot_dimension_numbers<[1], [0], [0], [1], [0, 0, 1, 1], [], []>} : vector<12x16xbf16>, vector<16x64xbf16>, vector<12x64xf32> -> vector<12x64xf32>
    %309 = vector.extract_strided_slice %286 {offsets = [0, 16], sizes = [12, 16], strides = [1, 1]} : vector<12x192xf32> to vector<12x16xf32>
    %310 = vector.extract_strided_slice %286 {offsets = [0, 80], sizes = [12, 16], strides = [1, 1]} : vector<12x192xf32> to vector<12x16xf32>
    %311 = vector.extract_strided_slice %286 {offsets = [0, 144], sizes = [12, 16], strides = [1, 1]} : vector<12x192xf32> to vector<12x16xf32>
    %cst_127 = arith.constant dense<0.000000e+00> : vector<12x12xf32>
    %312 = tpu.matmul %309, %310, %cst_127 {dimension_numbers = #tpu.dot_dimension_numbers<[1], [1], [0], [0], [0, 0, 1, 0], [], []>} : vector<12x16xf32>, vector<12x16xf32>, vector<12x12xf32> -> vector<12x12xf32>
    %cst_128 = arith.constant 2.500000e-01 : f32
    %313 = vector.broadcast %cst_128 : f32 to vector<12x12xf32>
    %314 = arith.mulf %312, %313 : vector<12x12xf32>
    %cst_129 = arith.constant -1.000000e+09 : f32
    %315 = vector.broadcast %cst_129 : f32 to vector<12x12xf32>
    %316 = arith.select %10, %314, %315 : vector<12x12xi1>, vector<12x12xf32>
    %cst_130 = arith.constant dense<0xFF800000> : vector<12xf32>
    %317 = vector.multi_reduction <maximumf>, %316, %cst_130 [1] : vector<12x12xf32> to vector<12xf32>
    %318 = vector.shape_cast %317 : vector<12xf32> to vector<12x1xf32>
    %319 = vector.broadcast %318 : vector<12x1xf32> to vector<12x12xf32>
    %320 = arith.subf %316, %319 : vector<12x12xf32>
    %321 = math.exp %320 : vector<12x12xf32>
    %cst_131 = arith.constant dense<0.000000e+00> : vector<12xf32>
    %322 = vector.multi_reduction <add>, %321, %cst_131 [1] : vector<12x12xf32> to vector<12xf32>
    %323 = vector.shape_cast %322 : vector<12xf32> to vector<12x1xf32>
    %324 = vector.broadcast %323 : vector<12x1xf32> to vector<12x12xf32>
    %325 = arith.divf %321, %324 : vector<12x12xf32>
    %cst_132 = arith.constant dense<0.000000e+00> : vector<12x16xf32>
    %326 = tpu.matmul %325, %311, %cst_132 {dimension_numbers = #tpu.dot_dimension_numbers<[1], [0], [0], [1], [0, 0, 1, 1], [], []>} : vector<12x12xf32>, vector<12x16xf32>, vector<12x16xf32> -> vector<12x16xf32>
    %327 = vector.extract_strided_slice %280 {offsets = [16, 0], sizes = [16, 64], strides = [1, 1]} : vector<64x64xf32> to vector<16x64xf32>
    %328 = arith.truncf %326 : vector<12x16xf32> to vector<12x16xbf16>
    %329 = arith.truncf %327 : vector<16x64xf32> to vector<16x64xbf16>
    %cst_133 = arith.constant dense<0.000000e+00> : vector<12x64xf32>
    %330 = tpu.matmul %328, %329, %cst_133 {dimension_numbers = #tpu.dot_dimension_numbers<[1], [0], [0], [1], [0, 0, 1, 1], [], []>} : vector<12x16xbf16>, vector<16x64xbf16>, vector<12x64xf32> -> vector<12x64xf32>
    %331 = arith.addf %308, %330 : vector<12x64xf32>
    %332 = vector.extract_strided_slice %286 {offsets = [0, 32], sizes = [12, 16], strides = [1, 1]} : vector<12x192xf32> to vector<12x16xf32>
    %333 = vector.extract_strided_slice %286 {offsets = [0, 96], sizes = [12, 16], strides = [1, 1]} : vector<12x192xf32> to vector<12x16xf32>
    %334 = vector.extract_strided_slice %286 {offsets = [0, 160], sizes = [12, 16], strides = [1, 1]} : vector<12x192xf32> to vector<12x16xf32>
    %cst_134 = arith.constant dense<0.000000e+00> : vector<12x12xf32>
    %335 = tpu.matmul %332, %333, %cst_134 {dimension_numbers = #tpu.dot_dimension_numbers<[1], [1], [0], [0], [0, 0, 1, 0], [], []>} : vector<12x16xf32>, vector<12x16xf32>, vector<12x12xf32> -> vector<12x12xf32>
    %cst_135 = arith.constant 2.500000e-01 : f32
    %336 = vector.broadcast %cst_135 : f32 to vector<12x12xf32>
    %337 = arith.mulf %335, %336 : vector<12x12xf32>
    %cst_136 = arith.constant -1.000000e+09 : f32
    %338 = vector.broadcast %cst_136 : f32 to vector<12x12xf32>
    %339 = arith.select %10, %337, %338 : vector<12x12xi1>, vector<12x12xf32>
    %cst_137 = arith.constant dense<0xFF800000> : vector<12xf32>
    %340 = vector.multi_reduction <maximumf>, %339, %cst_137 [1] : vector<12x12xf32> to vector<12xf32>
    %341 = vector.shape_cast %340 : vector<12xf32> to vector<12x1xf32>
    %342 = vector.broadcast %341 : vector<12x1xf32> to vector<12x12xf32>
    %343 = arith.subf %339, %342 : vector<12x12xf32>
    %344 = math.exp %343 : vector<12x12xf32>
    %cst_138 = arith.constant dense<0.000000e+00> : vector<12xf32>
    %345 = vector.multi_reduction <add>, %344, %cst_138 [1] : vector<12x12xf32> to vector<12xf32>
    %346 = vector.shape_cast %345 : vector<12xf32> to vector<12x1xf32>
    %347 = vector.broadcast %346 : vector<12x1xf32> to vector<12x12xf32>
    %348 = arith.divf %344, %347 : vector<12x12xf32>
    %cst_139 = arith.constant dense<0.000000e+00> : vector<12x16xf32>
    %349 = tpu.matmul %348, %334, %cst_139 {dimension_numbers = #tpu.dot_dimension_numbers<[1], [0], [0], [1], [0, 0, 1, 1], [], []>} : vector<12x12xf32>, vector<12x16xf32>, vector<12x16xf32> -> vector<12x16xf32>
    %350 = vector.extract_strided_slice %280 {offsets = [32, 0], sizes = [16, 64], strides = [1, 1]} : vector<64x64xf32> to vector<16x64xf32>
    %351 = arith.truncf %349 : vector<12x16xf32> to vector<12x16xbf16>
    %352 = arith.truncf %350 : vector<16x64xf32> to vector<16x64xbf16>
    %cst_140 = arith.constant dense<0.000000e+00> : vector<12x64xf32>
    %353 = tpu.matmul %351, %352, %cst_140 {dimension_numbers = #tpu.dot_dimension_numbers<[1], [0], [0], [1], [0, 0, 1, 1], [], []>} : vector<12x16xbf16>, vector<16x64xbf16>, vector<12x64xf32> -> vector<12x64xf32>
    %354 = arith.addf %331, %353 : vector<12x64xf32>
    %355 = vector.extract_strided_slice %286 {offsets = [0, 48], sizes = [12, 16], strides = [1, 1]} : vector<12x192xf32> to vector<12x16xf32>
    %356 = vector.extract_strided_slice %286 {offsets = [0, 112], sizes = [12, 16], strides = [1, 1]} : vector<12x192xf32> to vector<12x16xf32>
    %357 = vector.extract_strided_slice %286 {offsets = [0, 176], sizes = [12, 16], strides = [1, 1]} : vector<12x192xf32> to vector<12x16xf32>
    %cst_141 = arith.constant dense<0.000000e+00> : vector<12x12xf32>
    %358 = tpu.matmul %355, %356, %cst_141 {dimension_numbers = #tpu.dot_dimension_numbers<[1], [1], [0], [0], [0, 0, 1, 0], [], []>} : vector<12x16xf32>, vector<12x16xf32>, vector<12x12xf32> -> vector<12x12xf32>
    %cst_142 = arith.constant 2.500000e-01 : f32
    %359 = vector.broadcast %cst_142 : f32 to vector<12x12xf32>
    %360 = arith.mulf %358, %359 : vector<12x12xf32>
    %cst_143 = arith.constant -1.000000e+09 : f32
    %361 = vector.broadcast %cst_143 : f32 to vector<12x12xf32>
    %362 = arith.select %10, %360, %361 : vector<12x12xi1>, vector<12x12xf32>
    %cst_144 = arith.constant dense<0xFF800000> : vector<12xf32>
    %363 = vector.multi_reduction <maximumf>, %362, %cst_144 [1] : vector<12x12xf32> to vector<12xf32>
    %364 = vector.shape_cast %363 : vector<12xf32> to vector<12x1xf32>
    %365 = vector.broadcast %364 : vector<12x1xf32> to vector<12x12xf32>
    %366 = arith.subf %362, %365 : vector<12x12xf32>
    %367 = math.exp %366 : vector<12x12xf32>
    %cst_145 = arith.constant dense<0.000000e+00> : vector<12xf32>
    %368 = vector.multi_reduction <add>, %367, %cst_145 [1] : vector<12x12xf32> to vector<12xf32>
    %369 = vector.shape_cast %368 : vector<12xf32> to vector<12x1xf32>
    %370 = vector.broadcast %369 : vector<12x1xf32> to vector<12x12xf32>
    %371 = arith.divf %367, %370 : vector<12x12xf32>
    %cst_146 = arith.constant dense<0.000000e+00> : vector<12x16xf32>
    %372 = tpu.matmul %371, %357, %cst_146 {dimension_numbers = #tpu.dot_dimension_numbers<[1], [0], [0], [1], [0, 0, 1, 1], [], []>} : vector<12x12xf32>, vector<12x16xf32>, vector<12x16xf32> -> vector<12x16xf32>
    %373 = vector.extract_strided_slice %280 {offsets = [48, 0], sizes = [16, 64], strides = [1, 1]} : vector<64x64xf32> to vector<16x64xf32>
    %374 = arith.truncf %372 : vector<12x16xf32> to vector<12x16xbf16>
    %375 = arith.truncf %373 : vector<16x64xf32> to vector<16x64xbf16>
    %cst_147 = arith.constant dense<0.000000e+00> : vector<12x64xf32>
    %376 = tpu.matmul %374, %375, %cst_147 {dimension_numbers = #tpu.dot_dimension_numbers<[1], [0], [0], [1], [0, 0, 1, 1], [], []>} : vector<12x16xbf16>, vector<16x64xbf16>, vector<12x64xf32> -> vector<12x64xf32>
    %377 = arith.addf %354, %376 : vector<12x64xf32>
    %378 = vector.broadcast %281 : vector<1x64xf32> to vector<12x64xf32>
    %379 = arith.addf %377, %378 : vector<12x64xf32>
    %c0_148 = arith.constant 0 : index
    %c1920 = arith.constant 1920 : index
    %380 = vector.load %arg6[%c0_148, %c1920] : memref<128x2048xf32, #tpu.memory_space<vmem>>, vector<64x32xf32>
    %381 = arith.truncf %379 : vector<12x64xf32> to vector<12x64xbf16>
    %382 = arith.truncf %380 : vector<64x32xf32> to vector<64x32xbf16>
    %cst_149 = arith.constant dense<0.000000e+00> : vector<12x32xf32>
    %383 = tpu.matmul %381, %382, %cst_149 {dimension_numbers = #tpu.dot_dimension_numbers<[1], [0], [0], [1], [0, 0, 1, 1], [], []>} : vector<12x64xbf16>, vector<64x32xbf16>, vector<12x32xf32> -> vector<12x32xf32>
    %c18 = arith.constant 18 : index
    %c0_150 = arith.constant 0 : index
    %384 = vector.load %arg4[%c18, %c0_150] : memref<19x512xf32, #tpu.memory_space<vmem>>, vector<1x32xf32>
    %385 = vector.broadcast %384 : vector<1x32xf32> to vector<12x32xf32>
    %386 = arith.addf %383, %385 : vector<12x32xf32>
    %cst_151 = arith.constant 0.000000e+00 : f32
    %387 = vector.broadcast %cst_151 : f32 to vector<12x32xf32>
    %388 = arith.cmpf ogt, %386, %387 : vector<12x32xf32>
    %cst_152 = arith.constant 0.00999999977 : f32
    %389 = vector.broadcast %cst_152 : f32 to vector<12x32xf32>
    %390 = arith.mulf %389, %386 : vector<12x32xf32>
    %391 = arith.select %388, %386, %390 : vector<12x32xi1>, vector<12x32xf32>
    %cst_153 = arith.constant dense<0.000000e+00> : vector<2x32xf32>
    %392 = tpu.matmul %17, %391, %cst_153 {dimension_numbers = #tpu.dot_dimension_numbers<[1], [0], [0], [1], [0, 0, 1, 1], [], []>} : vector<2x12xf32>, vector<12x32xf32>, vector<2x32xf32> -> vector<2x32xf32>
    %c0_154 = arith.constant 0 : index
    %c0_155 = arith.constant 0 : index
    %393 = vector.load %arg8[%c0_154, %c0_155] : memref<2x32xf32, #tpu.memory_space<vmem>>, vector<2x32xf32>
    tpu.vector_store %arg8[%c0_154, %c0_155], %392 {strides = array<i32>} : memref<2x32xf32, #tpu.memory_space<vmem>>, vector<2x32xf32>,
    return
  }
}

</mosaic_0001>

<llo_original>
// kernel: backbone_forward.1
$region0: #{backbone_forward.1}
  #allocation0 [shape = 'u32[]', space=smem, size = 0x4, offset = 0x4, fixed_abs, tag = 'smem constant byte address 0x4 - core index']
  #allocation1 [shape = 'u32[72,128]{1,0:T(1,128)}', space=vmem, size = 0x9000, scoped, tag = 'internal scratch']
  #allocation2 [shape = 'f32[10,128]{1,0:T(8,128)}', space=vmem, size = 0x2000, scoped, tag = 'scratch operand']
  #allocation3 [shape = 'f32[12,64]{1,0:T(8,128)}', space=vmem, size = 0x2000, scoped, tag = 'scratch operand']
  %s0 = inlined_call_operand.vmem [shape: f32[2,178], index: 0, kind: input, shape index: {}]
  %s1 = inlined_call_operand.vmem [shape: f32[8,32], index: 1, kind: input, shape index: {}]
  %s2 = inlined_call_operand.hbm [shape: s32[12,1], index: 2, kind: input, shape index: {}]
  %s3 = inlined_call_operand.vmem [shape: s32[1,12], index: 3, kind: input, shape index: {}]
  %s4 = inlined_call_operand.hbm [shape: f32[19,512], index: 4, kind: input, shape index: {}]
  %s5 = inlined_call_operand.hbm [shape: f32[32,512], index: 5, kind: input, shape index: {}]
  %s6 = inlined_call_operand.hbm [shape: f32[128,2048], index: 6, kind: input, shape index: {}]
  %s7 = inlined_call_operand.hbm [shape: f32[512,256], index: 7, kind: input, shape index: {}]
  %s8 = inlined_call_operand.hbm [shape: f32[2,32], index: 8, kind: output, shape index: {}]
  %s9 = sld [smem:[#allocation0]]
  $region62: #{backbone_forward.1} parent=0
    _
  %s11 = ssub.s32 1, %s9
  %s12 = scalar_select 0, %s11, %s9
  $region1: #{backbone_forward.1} parent=0
    #allocation4 [shape = 'u8[8192]{0}', space=vmem, size = 0x2000, scoped, tag = 'input window, operand 2, single buffered']
    #allocation5 [shape = 's32[1]{0}', space=sflag, size = 0x4, scoped, tag = 'scoped memory for backbone_forward.1']
    #allocation6 [shape = 's32[1]{0}', space=sflag, size = 0x4, scoped, tag = 'scoped memory for backbone_forward.1']
    #allocation7 [shape = 'u8[49152]{0}', space=vmem, size = 0xc000, scoped, tag = 'input window, operand 4, single buffered']
    #allocation8 [shape = 's32[1]{0}', space=sflag, size = 0x4, scoped, tag = 'scoped memory for backbone_forward.1']
    #allocation9 [shape = 'u8[65536]{0}', space=vmem, size = 0x10000, scoped, tag = 'input window, operand 5, single buffered']
    #allocation10 [shape = 'u8[1048576]{0}', space=vmem, size = 0x100000, scoped, tag = 'input window, operand 6, single buffered']
    #allocation11 [shape = 's32[1]{0}', space=sflag, size = 0x4, scoped, tag = 'scoped memory for backbone_forward.1']
    #allocation12 [shape = 'u8[524288]{0}', space=vmem, size = 0x80000, scoped, tag = 'input window, operand 7, single buffered']
    #allocation13 [shape = 'u8[1024]{0}', space=vmem, size = 0x400, scoped, tag = 'output window, operand 0, single buffered']
    %13 = vsyncpa [#allocation5], 0
    %14 = vsyncpa [#allocation8], 0
    %15 = vsyncpa [#allocation11], 0
    %16 = vsyncpa [#allocation6], 0
    // Predicated region
    $region2: #{backbone_forward.1} parent=1 // pred_check
      _
    $region3: #{backbone_forward.1} parent=1 // pred_check_branch
      %18 = sbr.rel (0) target = $region5
    $region4: #{backbone_forward.1} parent=1 // pred_region
      _
    $region5: #{backbone_forward.1} parent=1 // pred_fallthru
      _
    // Predicated region
    $region6: #{backbone_forward.1} parent=1 // pred_check
      _
    $region7: #{backbone_forward.1} parent=1 // pred_check_branch
      %20 = sbr.rel (0) target = $region9
    $region8: #{backbone_forward.1} parent=1 // pred_region
      _
    $region9: #{backbone_forward.1} parent=1 // pred_fallthru
      _
    // Predicated region
    $region10: #{backbone_forward.1} parent=1 // pred_check
      _
    $region11: #{backbone_forward.1} parent=1 // pred_check_branch
      %22 = sbr.rel (0) target = $region13
    $region12: #{backbone_forward.1} parent=1 // pred_region
      %24 = vsyncadd [#allocation5], 0
      %s25 = sshll.u32 %s2, 4
      %s26 = int_to_ptr.hbm [resolvable:$true] %s25
      %s27 = sshll.u32 [#allocation4], 4
      %s28 = int_to_ptr.vmem [resolvable:$true] %s27
      %33 = dma.hbm_to_vmem [thread:$0]  %s26, 256, %s28, [#allocation5], 128, 128, 8
    $region13: #{backbone_forward.1} parent=1 // pred_fallthru
      _
    // Predicated region
    $region14: #{backbone_forward.1} parent=1 // pred_check
      _
    $region15: #{backbone_forward.1} parent=1 // pred_check_branch
      %35 = sbr.rel (0) target = $region17
    $region16: #{backbone_forward.1} parent=1 // pred_region
      _
    $region17: #{backbone_forward.1} parent=1 // pred_fallthru
      _
    // Predicated region
    $region18: #{backbone_forward.1} parent=1 // pred_check
      _
    $region19: #{backbone_forward.1} parent=1 // pred_check_branch
      %37 = sbr.rel (0) target = $region21
    $region20: #{backbone_forward.1} parent=1 // pred_region
      %39 = vsyncadd [#allocation8], 0
      %s40 = sshll.u32 %s4, 4
      %s41 = int_to_ptr.hbm [resolvable:$true] %s40
      %s42 = sshll.u32 [#allocation7], 4
      %s43 = int_to_ptr.vmem [resolvable:$true] %s42
      %48 = dma.hbm_to_vmem [thread:$0]  %s41, 1536, %s43, [#allocation8], 512, 512, 32
    $region21: #{backbone_forward.1} parent=1 // pred_fallthru
      _
    // Predicated region
    $region22: #{backbone_forward.1} parent=1 // pred_check
      _
    $region23: #{backbone_forward.1} parent=1 // pred_check_branch
      %50 = sbr.rel (0) target = $region25
    $region24: #{backbone_forward.1} parent=1 // pred_region
      %52 = vsyncadd [#allocation8], 0
      %s53 = sshll.u32 %s5, 4
      %s54 = int_to_ptr.hbm [resolvable:$true] %s53
      %s55 = sshll.u32 [#allocation9], 4
      %s56 = int_to_ptr.vmem [resolvable:$true] %s55
      %61 = dma.hbm_to_vmem [thread:$0]  %s54, 2048, %s56, [#allocation8], 512, 512, 32
    $region25: #{backbone_forward.1} parent=1 // pred_fallthru
      _
    // Predicated region
    $region26: #{backbone_forward.1} parent=1 // pred_check
      _
    $region27: #{backbone_forward.1} parent=1 // pred_check_branch
      %63 = sbr.rel (0) target = $region29
    $region28: #{backbone_forward.1} parent=1 // pred_region
      %65 = vsyncadd [#allocation11], 0
      %s66 = sshll.u32 %s6, 4
      %s67 = int_to_ptr.hbm [resolvable:$true] %s66
      %s68 = sshll.u32 [#allocation10], 4
      %s69 = int_to_ptr.vmem [resolvable:$true] %s68
      %74 = dma.hbm_to_vmem [thread:$0]  %s67, 32768, %s69, [#allocation11], 2048, 2048, 128
    $region29: #{backbone_forward.1} parent=1 // pred_fallthru
      _
    // Predicated region
    $region30: #{backbone_forward.1} parent=1 // pred_check
      _
    $region31: #{backbone_forward.1} parent=1 // pred_check_branch
      %76 = sbr.rel (0) target = $region33
    $region32: #{backbone_forward.1} parent=1 // pred_region
      %78 = vsyncadd [#allocation11], 0
      %s79 = sshll.u32 %s7, 4
      %s80 = int_to_ptr.hbm [resolvable:$true] %s79
      %s81 = sshll.u32 [#allocation12], 4
      %s82 = int_to_ptr.vmem [resolvable:$true] %s81
      %87 = dma.hbm_to_vmem [thread:$0]  %s80, 16384, %s82, [#allocation11], 256, 256, 16
    $region33: #{backbone_forward.1} parent=1 // pred_fallthru
      _
    // Predicated region
    $region34: #{backbone_forward.1} parent=1 // pred_check
      _
    $region35: #{backbone_forward.1} parent=1 // pred_check_branch
      %89 = sbr.rel (0) target = $region37
    $region36: #{backbone_forward.1} parent=1 // pred_region
      %91 = dma.done [#allocation5], 256
    $region37: #{backbone_forward.1} parent=1 // pred_fallthru
      _
    // Predicated region
    $region38: #{backbone_forward.1} parent=1 // pred_check
      _
    $region39: #{backbone_forward.1} parent=1 // pred_check_branch
      %93 = sbr.rel (0) target = $region41
    $region40: #{backbone_forward.1} parent=1 // pred_region
      %95 = dma.done [#allocation8], 1536
    $region41: #{backbone_forward.1} parent=1 // pred_fallthru
      _
    // Predicated region
    $region42: #{backbone_forward.1} parent=1 // pred_check
      _
    $region43: #{backbone_forward.1} parent=1 // pred_check_branch
      %97 = sbr.rel (0) target = $region45
    $region44: #{backbone_forward.1} parent=1 // pred_region
      %99 = dma.done [#allocation8], 2048
    $region45: #{backbone_forward.1} parent=1 // pred_fallthru
      _
    // Predicated region
    $region46: #{backbone_forward.1} parent=1 // pred_check
      _
    $region47: #{backbone_forward.1} parent=1 // pred_check_branch
      %101 = sbr.rel (0) target = $region49
    $region48: #{backbone_forward.1} parent=1 // pred_region
      %103 = dma.done [#allocation11], 32768
    $region49: #{backbone_forward.1} parent=1 // pred_fallthru
      _
    // Predicated region
    $region50: #{backbone_forward.1} parent=1 // pred_check
      _
    $region51: #{backbone_forward.1} parent=1 // pred_check_branch
      %105 = sbr.rel (0) target = $region53
    $region52: #{backbone_forward.1} parent=1 // pred_region
      %107 = dma.done [#allocation11], 16384
    $region53: #{backbone_forward.1} parent=1 // pred_fallthru
      _
    %v109 = vld [vmem:[%s0] sm:$0xf]
    %v110 = vld [vmem:[#allocation4] sm:$0xff]
    %v111 = vld [vmem:[#allocation4 + $0x8] sm:$0xf]
    %v112 = vld [vmem:[%s3] sm:$0x1]
    %113 = vset.pattern.permute.xlu0 0
    %114 = vperm.xlu0 %113, %v110
    %v115 = vpop.permute.xlu0 %114
    %116 = vset.pattern.permute.xlu0 0
    %117 = vperm.xlu0 %116, %v111
    %v118 = vpop.permute.xlu0 %117
    %v119 = vperm.slane %v112, 0
    %vm120 = vcmp.eq.s32.totalorder %v115, %v119
    %vm121 = vcmp.eq.s32.totalorder %v118, %v119
    %v122 = vsel %vm121, 1.0, 0.0
    %v123 = vld [vmem:[%s1] sm:$0xff]
    %v124 = vld [vmem:[#allocation9] sm:$0xff]
    %v125 = vld [vmem:[#allocation9 + $0x20] sm:$0xff]
    %v126 = vld [vmem:[#allocation9 + $0x40] sm:$0xff]
    %v127 = vld [vmem:[#allocation9 + $0x60] sm:$0xff]
    %v128 = vpack.c.bf16 %v123, %v123
    %v129 = vpack.c.bf16 %v125, %v124
    %v130 = vpack.c.bf16 %v127, %v126
    %v131 = vld [vmem:[#allocation7] ss:$0 sm:$0xff]
    %vm132 = vcmask 261120
    %v134 = vsel %vm132, %v128, 0
    %136 = vmatpush.bf16.msra.mxu0 0
    %137 = vmatpush.bf16.msra.mxu0 0
    %138 = vmatpush.bf16.msra.mxu0 0
    %139 = vmatpush.bf16.msra.mxu0 0
    %140 = vmatpush.bf16.msra.mxu0 0
    %141 = vmatpush.bf16.msra.mxu0 0
    %142 = vmatpush.bf16.msra.mxu0 %v130
    %143 = vmatpush.bf16.msra.mxu0 %v129
    %144 = vmatmul.bf16.gmra.mxu0 %v134
    %v145 = vpop.f32.mrf.mxu0
    %v146 = vadd.f32 %v131, %v145
    %v147 = vpop.f32.mrf.mxu0
    %148 = vdwg.mxu0
    %vm149 = vcmp.gt.f32.partialorder %v146, 0.0
    %v150 = vmul.f32 %v146, 0.01
    %v151 = vsel %vm149, %v146, %v150
    %v152 = vld [vmem:[#allocation9 + $0x8] sm:$0xff]
    %v153 = vld [vmem:[#allocation9 + $0x28] sm:$0xff]
    %v154 = vld [vmem:[#allocation9 + $0x48] sm:$0xff]
    %v155 = vld [vmem:[#allocation9 + $0x68] sm:$0xff]
    %v156 = vpack.c.bf16 %v109, %v109
    %v157 = vpack.c.bf16 %v153, %v152
    %v158 = vpack.c.bf16 %v155, %v154
    %v159 = vld [vmem:[#allocation7 + $0x1] ss:$0 sm:$0xff]
    %161 = vrot.lane.b32.xlu0 %v156, 122
    %v162 = vpop.permute.xlu0 %161
    %v164 = vsel %vm132, %v162, 0
    %166 = vmatpush.bf16.msra.mxu0 0
    %167 = vmatpush.bf16.msra.mxu0 0
    %168 = vmatpush.bf16.msra.mxu0 0
    %169 = vmatpush.bf16.msra.mxu0 0
    %170 = vmatpush.bf16.msra.mxu0 0
    %171 = vmatpush.bf16.msra.mxu0 0
    %172 = vmatpush.bf16.msra.mxu0 %v158
    %173 = vmatpush.bf16.msra.mxu0 %v157
    %174 = vmatmul.bf16.gmra.mxu0 %v164
    %v175 = vpop.f32.mrf.mxu0
    %v176 = vadd.f32 %v159, %v175
    %v177 = vpop.f32.mrf.mxu0
    %178 = vdwg.mxu0
    %vm179 = vcmp.gt.f32.partialorder %v176, 0.0
    %v180 = vmul.f32 %v176, 0.01
    %v181 = vsel %vm179, %v176, %v180
    %182 = vst [vmem:[#allocation2] sm:$0xff] %v151
    %183 = vst [vmem:[#allocation2 + $0x8] sm:$0x3] %v181
    %v184 = vld [vmem:[#allocation2] sm:$0xff]
    %v185 = vld [vmem:[#allocation2 + $0x8] sm:$0x3]
    %v186 = vld [vmem:[#allocation10] sm:$0xff]
    %v187 = vld [vmem:[#allocation10 + $0x8] sm:$0xff]
    %v188 = vld [vmem:[#allocation10 + $0x10] sm:$0xff]
    %v189 = vld [vmem:[#allocation10 + $0x80] sm:$0xff]
    %v190 = vld [vmem:[#allocation10 + $0x88] sm:$0xff]
    %v191 = vld [vmem:[#allocation10 + $0x90] sm:$0xff]
    %v192 = vld [vmem:[#allocation10 + $0x100] sm:$0xff]
    %v193 = vld [vmem:[#allocation10 + $0x108] sm:$0xff]
    %v194 = vld [vmem:[#allocation10 + $0x110] sm:$0xff]
    %v195 = vld [vmem:[#allocation10 + $0x180] sm:$0xff]
    %v196 = vld [vmem:[#allocation10 + $0x188] sm:$0xff]
    %v197 = vld [vmem:[#allocation10 + $0x190] sm:$0xff]
    %v198 = vld [vmem:[#allocation10 + $0x200] sm:$0xff]
    %v199 = vld [vmem:[#allocation10 + $0x208] sm:$0xff]
    %v200 = vld [vmem:[#allocation10 + $0x210] sm:$0xff]
    %v201 = vld [vmem:[#allocation10 + $0x280] sm:$0xff]
    %v202 = vld [vmem:[#allocation10 + $0x288] sm:$0xff]
    %v203 = vld [vmem:[#allocation10 + $0x290] sm:$0xff]
    %v204 = vld [vmem:[#allocation10 + $0x300] sm:$0xff]
    %v205 = vld [vmem:[#allocation10 + $0x308] sm:$0xff]
    %v206 = vld [vmem:[#allocation10 + $0x310] sm:$0xff]
    %v207 = vld [vmem:[#allocation10 + $0x380] sm:$0xff]
    %v208 = vld [vmem:[#allocation10 + $0x388] sm:$0xff]
    %v209 = vld [vmem:[#allocation10 + $0x390] sm:$0xff]
    %v210 = vld [vmem:[#allocation10 + $0x400] sm:$0xff]
    %v211 = vld [vmem:[#allocation10 + $0x408] sm:$0xff]
    %v212 = vld [vmem:[#allocation10 + $0x410] sm:$0xff]
    %v213 = vld [vmem:[#allocation10 + $0x480] sm:$0xff]
    %v214 = vld [vmem:[#allocation10 + $0x488] sm:$0xff]
    %v215 = vld [vmem:[#allocation10 + $0x490] sm:$0xff]
    %v216 = vld [vmem:[#allocation10 + $0x500] sm:$0xff]
    %v217 = vld [vmem:[#allocation10 + $0x508] sm:$0xff]
    %v218 = vld [vmem:[#allocation10 + $0x510] sm:$0xff]
    %v219 = vld [vmem:[#allocation10 + $0x580] sm:$0xff]
    %v220 = vld [vmem:[#allocation10 + $0x588] sm:$0xff]
    %v221 = vld [vmem:[#allocation10 + $0x590] sm:$0xff]
    %v222 = vld [vmem:[#allocation10 + $0x600] sm:$0xff]
    %v223 = vld [vmem:[#allocation10 + $0x608] sm:$0xff]
    %v224 = vld [vmem:[#allocation10 + $0x610] sm:$0xff]
    %v225 = vld [vmem:[#allocation10 + $0x680] sm:$0xff]
    %v226 = vld [vmem:[#allocation10 + $0x688] sm:$0xff]
    %v227 = vld [vmem:[#allocation10 + $0x690] sm:$0xff]
    %v228 = vld [vmem:[#allocation10 + $0x700] sm:$0xff]
    %v229 = vld [vmem:[#allocation10 + $0x708] sm:$0xff]
    %v230 = vld [vmem:[#allocation10 + $0x710] sm:$0xff]
    %v231 = vld [vmem:[#allocation10 + $0x780] sm:$0xff]
    %v232 = vld [vmem:[#allocation10 + $0x788] sm:$0xff]
    %v233 = vld [vmem:[#allocation10 + $0x790] sm:$0xff]
    %s234 = scalar_lea.vmem [#allocation7], 2
    %v235 = vld [vmem:[%s234] ss:$8 sm:$0x7]
    %v236 = vld [vmem:[#allocation10 + $0x18] sm:$0xff]
    %v237 = vld [vmem:[#allocation10 + $0x98] sm:$0xff]
    %v238 = vld [vmem:[#allocation10 + $0x118] sm:$0xff]
    %v239 = vld [vmem:[#allocation10 + $0x198] sm:$0xff]
    %v240 = vld [vmem:[#allocation10 + $0x218] sm:$0xff]
    %v241 = vld [vmem:[#allocation10 + $0x298] sm:$0xff]
    %v242 = vld [vmem:[#allocation10 + $0x318] sm:$0xff]
    %v243 = vld [vmem:[#allocation10 + $0x398] sm:$0xff]
    %v244 = vld [vmem:[#allocation10 + $0x418] sm:$0xff]
    %v245 = vld [vmem:[#allocation10 + $0x498] sm:$0xff]
    %v246 = vld [vmem:[#allocation10 + $0x518] sm:$0xff]
    %v247 = vld [vmem:[#allocation10 + $0x598] sm:$0xff]
    %v248 = vld [vmem:[#allocation10 + $0x618] sm:$0xff]
    %v249 = vld [vmem:[#allocation10 + $0x698] sm:$0xff]
    %v250 = vld [vmem:[#allocation10 + $0x718] sm:$0xff]
    %v251 = vld [vmem:[#allocation10 + $0x798] sm:$0xff]
    %v252 = vld [vmem:[#allocation7 + $0x3] ss:$0 sm:$0xff]
    %v253 = vpack.c.bf16 %v185, %v184
    %v254 = vpack.c.bf16 %v189, %v186
    %v255 = vpack.c.bf16 %v190, %v187
    %v256 = vpack.c.bf16 %v191, %v188
    %v257 = vpack.c.bf16 %v195, %v192
    %v258 = vpack.c.bf16 %v196, %v193
    %v259 = vpack.c.bf16 %v197, %v194
    %v260 = vpack.c.bf16 %v201, %v198
    %v261 = vpack.c.bf16 %v202, %v199
    %v262 = vpack.c.bf16 %v203, %v200
    %v263 = vpack.c.bf16 %v207, %v204
    %v264 = vpack.c.bf16 %v208, %v205
    %v265 = vpack.c.bf16 %v209, %v206
    %v266 = vpack.c.bf16 %v213, %v210
    %v267 = vpack.c.bf16 %v214, %v211
    %v268 = vpack.c.bf16 %v215, %v212
    %v269 = vpack.c.bf16 %v219, %v216
    %v270 = vpack.c.bf16 %v220, %v217
    %v271 = vpack.c.bf16 %v221, %v218
    %v272 = vpack.c.bf16 %v225, %v222
    %v273 = vpack.c.bf16 %v226, %v223
    %v274 = vpack.c.bf16 %v227, %v224
    %v275 = vpack.c.bf16 %v231, %v228
    %v276 = vpack.c.bf16 %v232, %v229
    %v277 = vpack.c.bf16 %v233, %v230
    %v279 = vperm.slane %v235, 0
    %v280 = vperm.slane %v235, 1
    %v281 = vperm.slane %v235, 2
    %285 = vmatpush.bf16.msra.mxu0 %v275
    %286 = vmatpush.bf16.msra.mxu0 %v272
    %287 = vmatpush.bf16.msra.mxu0 %v269
    %288 = vmatpush.bf16.msra.mxu0 %v266
    %289 = vmatpush.bf16.msra.mxu0 %v263
    %290 = vmatpush.bf16.msra.mxu0 %v260
    %291 = vmatpush.bf16.msra.mxu0 %v257
    %292 = vmatpush.bf16.msra.mxu0 %v254
    %293 = vmatmul.bf16.gmra.mxu0 %v253
    %v294 = vpop.f32.mrf.mxu0
    %v295 = vadd.f32 %v279, %v294
    %v296 = vpop.f32.mrf.mxu0
    %v297 = vadd.f32 %v279, %v296
    %298 = vdwg.mxu0
    %299 = vmatpush.bf16.msra.mxu0 %v276
    %300 = vmatpush.bf16.msra.mxu0 %v273
    %301 = vmatpush.bf16.msra.mxu0 %v270
    %302 = vmatpush.bf16.msra.mxu0 %v267
    %303 = vmatpush.bf16.msra.mxu0 %v264
    %304 = vmatpush.bf16.msra.mxu0 %v261
    %305 = vmatpush.bf16.msra.mxu0 %v258
    %306 = vmatpush.bf16.msra.mxu0 %v255
    %307 = vmatmul.bf16.gmra.mxu0 %v253
    %v308 = vpop.f32.mrf.mxu0
    %v309 = vadd.f32 %v280, %v308
    %v310 = vpop.f32.mrf.mxu0
    %v311 = vadd.f32 %v280, %v310
    %312 = vdwg.mxu0
    %313 = vmatpush.bf16.msra.mxu0 %v277
    %314 = vmatpush.bf16.msra.mxu0 %v274
    %315 = vmatpush.bf16.msra.mxu0 %v271
    %316 = vmatpush.bf16.msra.mxu0 %v268
    %317 = vmatpush.bf16.msra.mxu0 %v265
    %318 = vmatpush.bf16.msra.mxu0 %v262
    %319 = vmatpush.bf16.msra.mxu0 %v259
    %320 = vmatpush.bf16.msra.mxu0 %v256
    %321 = vmatmul.bf16.gmra.mxu0 %v253
    %v322 = vpop.f32.mrf.mxu0
    %v323 = vadd.f32 %v281, %v322
    %v324 = vpop.f32.mrf.mxu0
    %v325 = vadd.f32 %v281, %v324
    %326 = vdwg.mxu0
    %v328 = vsel %vm132, %v295, 0
    %v331 = vsel %vm132, %v297, 0
    %v334 = vsel %vm132, %v309, 0
    %v337 = vsel %vm132, %v311, 0
    %339 = vmatpush.xpose.msra.mxu0 0.0
    %340 = vmatpush.xpose.msra.mxu0 0.0
    %341 = vmatpush.xpose.msra.mxu0 0.0
    %342 = vmatpush.xpose.msra.mxu0 0.0
    %343 = vmatpush.xpose.msra.mxu0 0.0
    %344 = vmatpush.xpose.msra.mxu0 0.0
    %345 = vmatpush.xpose.msra.mxu0 0.0
    %346 = vmatpush.xpose.msra.mxu0 0.0
    %347 = vmatpush.xpose.msra.mxu0 0.0
    %348 = vmatpush.xpose.msra.mxu0 0.0
    %349 = vmatpush.xpose.msra.mxu0 0.0
    %350 = vmatpush.xpose.msra.mxu0 0.0
    %351 = vmatpush.xpose.msra.mxu0 0.0
    %352 = vmatpush.xpose.msra.mxu0 0.0
    %353 = vmatpush.xpose.msra.mxu0 %v337
    %354 = vmatpush.xpose.msra.mxu0 %v334
    %355 = vmatmul.f32.gmra.mxu0 %v328
    %v356 = vpop.f32.mrf.mxu0
    %v357 = vadd.f32 0.0, %v356
    %358 = vmatmul.f32.gmra.mxu0 %v331
    %v359 = vpop.f32.mrf.mxu0
    %v360 = vadd.f32 0.0, %v359
    %361 = vdwg.mxu0
    %v362 = vmul.f32 %v357, 0.17677669
    %v363 = vmul.f32 %v360, 0.17677669
    %v364 = vsel %vm120, %v362, -1e+09
    %v365 = vsel %vm121, %v363, -1e+09
    %vm366 = vcmask 80896
    %v367 = vsel %vm366, %v364, -inf
    %368 = vmax.xlane.f32.xlu0 %v367
    %v369 = vpop.xlane.xlu0 %368
    %vm370 = vcmask 74752
    %v371 = vsel %vm370, %v365, -inf
    %372 = vmax.xlane.f32.xlu0 %v371
    %v373 = vpop.xlane.xlu0 %372
    %v374 = vsub.f32 %v364, %v369
    %v375 = vsub.f32 %v365, %v373
    %v376 = vmul.f32 %v374, 1.442695
    %v377 = vpow.pop %v376
    %v378 = vmul.f32 %v375, 1.442695
    %v379 = vpow.pop %v378
    %v380 = vsel %vm366, %v377, 0.0
    %381 = vadd.xlane.f32.xlu0 %v380
    %v382 = vpop.xlane.xlu0 %381
    %v383 = vsel %vm370, %v379, 0.0
    %384 = vadd.xlane.f32.xlu0 %v383
    %v385 = vpop.xlane.xlu0 %384
    %v386 = vrcp.pop %v382
    %v387 = vmul.f32 %v382, %v386
    %v388 = vsub.f32 1.0, %v387
    %v389 = vmul.f32 %v386, %v388
    %v390 = vadd.f32 %v386, %v389
    %vm391 = vweird.f32 %v382
    %vm392 = vweird.f32 %v386
    %vm393 = vmor %vm391, %vm392
    %v394 = vsel %vm393, %v386, %v390
    %v395 = vand.u32 2147483647, %v382
    %vm396 = vcmp.eq.f32.partialorder %v395, 8.507059e+37
    %v397 = vand.u32 %v382, 2147483648
    %v398 = vor.u32 1.1754944e-38, %v397
    %v399 = vsel %vm396, %v398, %v394
    %v400 = vmul.f32 %v377, %v399
    %v401 = vrcp.pop %v385
    %v402 = vmul.f32 %v385, %v401
    %v403 = vsub.f32 1.0, %v402
    %v404 = vmul.f32 %v401, %v403
    %v405 = vadd.f32 %v401, %v404
    %vm406 = vweird.f32 %v385
    %vm407 = vweird.f32 %v401
    %vm408 = vmor %vm406, %vm407
    %v409 = vsel %vm408, %v401, %v405
    %v410 = vand.u32 2147483647, %v385
    %vm411 = vcmp.eq.f32.partialorder %v410, 8.507059e+37
    %v412 = vand.u32 %v385, 2147483648
    %v413 = vor.u32 1.1754944e-38, %v412
    %v414 = vsel %vm411, %v413, %v409
    %v415 = vmul.f32 %v379, %v414
    %v417 = vsel %vm366, %v400, 0
    %v420 = vsel %vm366, %v415, 0
    %vm422 = vcmask 1041408
    %v424 = vsel %vm422, %v325, 0
    %426 = vmatpush.msra.mxu0 0.0
    %427 = vmatpush.msra.mxu0 0.0
    %428 = vmatpush.msra.mxu0 0.0
    %429 = vmatpush.msra.mxu0 0.0
    %430 = vmatpush.msra.mxu0 0.0
    %431 = vmatpush.msra.mxu0 0.0
    %432 = vmatpush.msra.mxu0 0.0
    %433 = vmatpush.msra.mxu0 0.0
    %434 = vmatpush.msra.mxu0 0.0
    %435 = vmatpush.msra.mxu0 0.0
    %436 = vmatpush.msra.mxu0 0.0
    %437 = vmatpush.msra.mxu0 0.0
    %438 = vmatpush.msra.mxu0 0.0
    %439 = vmatpush.msra.mxu0 0.0
    %440 = vmatpush.msra.mxu0 %v424
    %441 = vmatpush.msra.mxu0 %v323
    %442 = vmatmul.f32.gmra.mxu0 %v417
    %v443 = vpop.f32.mrf.mxu0
    %v444 = vadd.f32 0.0, %v443
    %445 = vmatmul.f32.gmra.mxu0 %v420
    %v446 = vpop.f32.mrf.mxu0
    %v447 = vadd.f32 0.0, %v446
    %448 = vdwg.mxu0
    %v449 = vpack.c.bf16 %v447, %v444
    %v450 = vpack.c.bf16 %v237, %v236
    %v451 = vpack.c.bf16 %v239, %v238
    %452 = vrot.lane.b32.xlu0 %v295, 96
    %v453 = vpop.permute.xlu0 %452
    %454 = vrot.lane.b32.xlu0 %v297, 96
    %v455 = vpop.permute.xlu0 %454
    %456 = vrot.lane.b32.xlu0 %v309, 96
    %v457 = vpop.permute.xlu0 %456
    %458 = vrot.lane.b32.xlu0 %v311, 96
    %v459 = vpop.permute.xlu0 %458
    %v460 = vsel %vm132, %v453, 0
    %v462 = vsel %vm132, %v455, 0
    %v464 = vsel %vm132, %v457, 0
    %v466 = vsel %vm132, %v459, 0
    %468 = vmatpush.xpose.msra.mxu0 0.0
    %469 = vmatpush.xpose.msra.mxu0 0.0
    %470 = vmatpush.xpose.msra.mxu0 0.0
    %471 = vmatpush.xpose.msra.mxu0 0.0
    %472 = vmatpush.xpose.msra.mxu0 0.0
    %473 = vmatpush.xpose.msra.mxu0 0.0
    %474 = vmatpush.xpose.msra.mxu0 0.0
    %475 = vmatpush.xpose.msra.mxu0 0.0
    %476 = vmatpush.xpose.msra.mxu0 0.0
    %477 = vmatpush.xpose.msra.mxu0 0.0
    %478 = vmatpush.xpose.msra.mxu0 0.0
    %479 = vmatpush.xpose.msra.mxu0 0.0
    %480 = vmatpush.xpose.msra.mxu0 0.0
    %481 = vmatpush.xpose.msra.mxu0 0.0
    %482 = vmatpush.xpose.msra.mxu0 %v466
    %483 = vmatpush.xpose.msra.mxu0 %v464
    %484 = vmatmul.f32.gmra.mxu0 %v460
    %v485 = vpop.f32.mrf.mxu0
    %v486 = vadd.f32 0.0, %v485
    %487 = vmatmul.f32.gmra.mxu0 %v462
    %v488 = vpop.f32.mrf.mxu0
    %v489 = vadd.f32 0.0, %v488
    %490 = vdwg.mxu0
    %v491 = vmul.f32 %v486, 0.17677669
    %v492 = vmul.f32 %v489, 0.17677669
    %v493 = vsel %vm120, %v491, -1e+09
    %v494 = vsel %vm121, %v492, -1e+09
    %v495 = vsel %vm366, %v493, -inf
    %496 = vmax.xlane.f32.xlu0 %v495
    %v497 = vpop.xlane.xlu0 %496
    %v498 = vsel %vm370, %v494, -inf
    %499 = vmax.xlane.f32.xlu0 %v498
    %v500 = vpop.xlane.xlu0 %499
    %v501 = vsub.f32 %v493, %v497
    %v502 = vsub.f32 %v494, %v500
    %v503 = vmul.f32 %v501, 1.442695
    %v504 = vpow.pop %v503
    %v505 = vmul.f32 %v502, 1.442695
    %v506 = vpow.pop %v505
    %v507 = vsel %vm366, %v504, 0.0
    %508 = vadd.xlane.f32.xlu0 %v507
    %v509 = vpop.xlane.xlu0 %508
    %v510 = vsel %vm370, %v506, 0.0
    %511 = vadd.xlane.f32.xlu0 %v510
    %v512 = vpop.xlane.xlu0 %511
    %v513 = vrcp.pop %v509
    %v514 = vmul.f32 %v509, %v513
    %v515 = vsub.f32 1.0, %v514
    %v516 = vmul.f32 %v513, %v515
    %v517 = vadd.f32 %v513, %v516
    %vm518 = vweird.f32 %v509
    %vm519 = vweird.f32 %v513
    %vm520 = vmor %vm518, %vm519
    %v521 = vsel %vm520, %v513, %v517
    %v522 = vand.u32 2147483647, %v509
    %vm523 = vcmp.eq.f32.partialorder %v522, 8.507059e+37
    %v524 = vand.u32 %v509, 2147483648
    %v525 = vor.u32 1.1754944e-38, %v524
    %v526 = vsel %vm523, %v525, %v521
    %v527 = vmul.f32 %v504, %v526
    %v528 = vrcp.pop %v512
    %v529 = vmul.f32 %v512, %v528
    %v530 = vsub.f32 1.0, %v529
    %v531 = vmul.f32 %v528, %v530
    %v532 = vadd.f32 %v528, %v531
    %vm533 = vweird.f32 %v512
    %vm534 = vweird.f32 %v528
    %vm535 = vmor %vm533, %vm534
    %v536 = vsel %vm535, %v528, %v532
    %v537 = vand.u32 2147483647, %v512
    %vm538 = vcmp.eq.f32.partialorder %v537, 8.507059e+37
    %v539 = vand.u32 %v512, 2147483648
    %v540 = vor.u32 1.1754944e-38, %v539
    %v541 = vsel %vm538, %v540, %v536
    %v542 = vmul.f32 %v506, %v541
    %544 = vrot.lane.b32.xlu0 %v323, 96
    %v545 = vpop.permute.xlu0 %544
    %546 = vrot.lane.b32.xlu0 %v325, 96
    %v547 = vpop.permute.xlu0 %546
    %v550 = vsel %vm366, %v527, 0
    %v553 = vsel %vm366, %v542, 0
    %v555 = vsel %vm422, %v547, 0
    %557 = vmatpush.msra.mxu0 0.0
    %558 = vmatpush.msra.mxu0 0.0
    %559 = vmatpush.msra.mxu0 0.0
    %560 = vmatpush.msra.mxu0 0.0
    %561 = vmatpush.msra.mxu0 0.0
    %562 = vmatpush.msra.mxu0 0.0
    %563 = vmatpush.msra.mxu0 0.0
    %564 = vmatpush.msra.mxu0 0.0
    %565 = vmatpush.msra.mxu0 0.0
    %566 = vmatpush.msra.mxu0 0.0
    %567 = vmatpush.msra.mxu0 0.0
    %568 = vmatpush.msra.mxu0 0.0
    %569 = vmatpush.msra.mxu0 0.0
    %570 = vmatpush.msra.mxu0 0.0
    %571 = vmatpush.msra.mxu0 %v555
    %572 = vmatpush.msra.mxu0 %v545
    %573 = vmatmul.f32.gmra.mxu0 %v550
    %v574 = vpop.f32.mrf.mxu0
    %v575 = vadd.f32 0.0, %v574
    %576 = vmatmul.f32.gmra.mxu0 %v553
    %v577 = vpop.f32.mrf.mxu0
    %v578 = vadd.f32 0.0, %v577
    %579 = vdwg.mxu0
    %v580 = vpack.c.bf16 %v578, %v575
    %v581 = vpack.c.bf16 %v241, %v240
    %v582 = vpack.c.bf16 %v243, %v242
    %v584 = vsel %vm132, %v580, 0
    %586 = vmatpush.bf16.msra.mxu0 0
    %587 = vmatpush.bf16.msra.mxu0 0
    %588 = vmatpush.bf16.msra.mxu0 0
    %589 = vmatpush.bf16.msra.mxu0 0
    %590 = vmatpush.bf16.msra.mxu0 0
    %591 = vmatpush.bf16.msra.mxu0 0
    %592 = vmatpush.bf16.msra.mxu0 %v582
    %593 = vmatpush.bf16.msra.mxu0 %v581
    %594 = vmatmul.bf16.gmra.mxu0 %v584
    %v595 = vpop.f32.mrf.mxu0
    %v596 = vadd.f32 0.0, %v595
    %v597 = vpop.f32.mrf.mxu0
    %v598 = vadd.f32 0.0, %v597
    %599 = vdwg.mxu0
    %v601 = vsel %vm132, %v449, 0
    %603 = vmatpush.bf16.msra.mxu0 0
    %604 = vmatpush.bf16.msra.mxu0 0
    %605 = vmatpush.bf16.msra.mxu0 0
    %606 = vmatpush.bf16.msra.mxu0 0
    %607 = vmatpush.bf16.msra.mxu0 0
    %608 = vmatpush.bf16.msra.mxu0 0
    %609 = vmatpush.bf16.msra.mxu0 %v451
    %610 = vmatpush.bf16.msra.mxu0 %v450
    %611 = vmatmul.bf16.gmra.mxu0 %v601
    %v612 = vpop.f32.mrf.mxu0
    %v613 = vadd.f32 %v596, %v612
    %v614 = vpop.f32.mrf.mxu0
    %v615 = vadd.f32 %v598, %v614
    %616 = vdwg.mxu0
    %617 = vrot.lane.b32.xlu0 %v295, 64
    %v618 = vpop.permute.xlu0 %617
    %619 = vrot.lane.b32.xlu0 %v297, 64
    %v620 = vpop.permute.xlu0 %619
    %621 = vrot.lane.b32.xlu0 %v309, 64
    %v622 = vpop.permute.xlu0 %621
    %623 = vrot.lane.b32.xlu0 %v311, 64
    %v624 = vpop.permute.xlu0 %623
    %v625 = vsel %vm132, %v618, 0
    %v627 = vsel %vm132, %v620, 0
    %v629 = vsel %vm132, %v622, 0
    %v631 = vsel %vm132, %v624, 0
    %633 = vmatpush.xpose.msra.mxu0 0.0
    %634 = vmatpush.xpose.msra.mxu0 0.0
    %635 = vmatpush.xpose.msra.mxu0 0.0
    %636 = vmatpush.xpose.msra.mxu0 0.0
    %637 = vmatpush.xpose.msra.mxu0 0.0
    %638 = vmatpush.xpose.msra.mxu0 0.0
    %639 = vmatpush.xpose.msra.mxu0 0.0
    %640 = vmatpush.xpose.msra.mxu0 0.0
    %641 = vmatpush.xpose.msra.mxu0 0.0
    %642 = vmatpush.xpose.msra.mxu0 0.0
    %643 = vmatpush.xpose.msra.mxu0 0.0
    %644 = vmatpush.xpose.msra.mxu0 0.0
    %645 = vmatpush.xpose.msra.mxu0 0.0
    %646 = vmatpush.xpose.msra.mxu0 0.0
    %647 = vmatpush.xpose.msra.mxu0 %v631
    %648 = vmatpush.xpose.msra.mxu0 %v629
    %649 = vmatmul.f32.gmra.mxu0 %v625
    %v650 = vpop.f32.mrf.mxu0
    %v651 = vadd.f32 0.0, %v650
    %652 = vmatmul.f32.gmra.mxu0 %v627
    %v653 = vpop.f32.mrf.mxu0
    %v654 = vadd.f32 0.0, %v653
    %655 = vdwg.mxu0
    %v656 = vmul.f32 %v651, 0.17677669
    %v657 = vmul.f32 %v654, 0.17677669
    %v658 = vsel %vm120, %v656, -1e+09
    %v659 = vsel %vm121, %v657, -1e+09
    %v660 = vsel %vm366, %v658, -inf
    %661 = vmax.xlane.f32.xlu0 %v660
    %v662 = vpop.xlane.xlu0 %661
    %v663 = vsel %vm370, %v659, -inf
    %664 = vmax.xlane.f32.xlu0 %v663
    %v665 = vpop.xlane.xlu0 %664
    %v666 = vsub.f32 %v658, %v662
    %v667 = vsub.f32 %v659, %v665
    %v668 = vmul.f32 %v666, 1.442695
    %v669 = vpow.pop %v668
    %v670 = vmul.f32 %v667, 1.442695
    %v671 = vpow.pop %v670
    %v672 = vsel %vm366, %v669, 0.0
    %673 = vadd.xlane.f32.xlu0 %v672
    %v674 = vpop.xlane.xlu0 %673
    %v675 = vsel %vm370, %v671, 0.0
    %676 = vadd.xlane.f32.xlu0 %v675
    %v677 = vpop.xlane.xlu0 %676
    %v678 = vrcp.pop %v674
    %v679 = vmul.f32 %v674, %v678
    %v680 = vsub.f32 1.0, %v679
    %v681 = vmul.f32 %v678, %v680
    %v682 = vadd.f32 %v678, %v681
    %vm683 = vweird.f32 %v674
    %vm684 = vweird.f32 %v678
    %vm685 = vmor %vm683, %vm684
    %v686 = vsel %vm685, %v678, %v682
    %v687 = vand.u32 2147483647, %v674
    %vm688 = vcmp.eq.f32.partialorder %v687, 8.507059e+37
    %v689 = vand.u32 %v674, 2147483648
    %v690 = vor.u32 1.1754944e-38, %v689
    %v691 = vsel %vm688, %v690, %v686
    %v692 = vmul.f32 %v669, %v691
    %v693 = vrcp.pop %v677
    %v694 = vmul.f32 %v677, %v693
    %v695 = vsub.f32 1.0, %v694
    %v696 = vmul.f32 %v693, %v695
    %v697 = vadd.f32 %v693, %v696
    %vm698 = vweird.f32 %v677
    %vm699 = vweird.f32 %v693
    %vm700 = vmor %vm698, %vm699
    %v701 = vsel %vm700, %v693, %v697
    %v702 = vand.u32 2147483647, %v677
    %vm703 = vcmp.eq.f32.partialorder %v702, 8.507059e+37
    %v704 = vand.u32 %v677, 2147483648
    %v705 = vor.u32 1.1754944e-38, %v704
    %v706 = vsel %vm703, %v705, %v701
    %v707 = vmul.f32 %v671, %v706
    %708 = vrot.lane.b32.xlu0 %v323, 64
    %v709 = vpop.permute.xlu0 %708
    %710 = vrot.lane.b32.xlu0 %v325, 64
    %v711 = vpop.permute.xlu0 %710
    %v714 = vsel %vm366, %v692, 0
    %v717 = vsel %vm366, %v707, 0
    %v719 = vsel %vm422, %v711, 0
    %721 = vmatpush.msra.mxu0 0.0
    %722 = vmatpush.msra.mxu0 0.0
    %723 = vmatpush.msra.mxu0 0.0
    %724 = vmatpush.msra.mxu0 0.0
    %725 = vmatpush.msra.mxu0 0.0
    %726 = vmatpush.msra.mxu0 0.0
    %727 = vmatpush.msra.mxu0 0.0
    %728 = vmatpush.msra.mxu0 0.0
    %729 = vmatpush.msra.mxu0 0.0
    %730 = vmatpush.msra.mxu0 0.0
    %731 = vmatpush.msra.mxu0 0.0
    %732 = vmatpush.msra.mxu0 0.0
    %733 = vmatpush.msra.mxu0 0.0
    %734 = vmatpush.msra.mxu0 0.0
    %735 = vmatpush.msra.mxu0 %v719
    %736 = vmatpush.msra.mxu0 %v709
    %737 = vmatmul.f32.gmra.mxu0 %v714
    %v738 = vpop.f32.mrf.mxu0
    %v739 = vadd.f32 0.0, %v738
    %740 = vmatmul.f32.gmra.mxu0 %v717
    %v741 = vpop.f32.mrf.mxu0
    %v742 = vadd.f32 0.0, %v741
    %743 = vdwg.mxu0
    %v744 = vpack.c.bf16 %v742, %v739
    %v745 = vpack.c.bf16 %v245, %v244
    %v746 = vpack.c.bf16 %v247, %v246
    %v748 = vsel %vm132, %v744, 0
    %750 = vmatpush.bf16.msra.mxu0 0
    %751 = vmatpush.bf16.msra.mxu0 0
    %752 = vmatpush.bf16.msra.mxu0 0
    %753 = vmatpush.bf16.msra.mxu0 0
    %754 = vmatpush.bf16.msra.mxu0 0
    %755 = vmatpush.bf16.msra.mxu0 0
    %756 = vmatpush.bf16.msra.mxu0 %v746
    %757 = vmatpush.bf16.msra.mxu0 %v745
    %758 = vmatmul.bf16.gmra.mxu0 %v748
    %v759 = vpop.f32.mrf.mxu0
    %v760 = vadd.f32 0.0, %v759
    %v761 = vpop.f32.mrf.mxu0
    %v762 = vadd.f32 0.0, %v761
    %763 = vdwg.mxu0
    %v764 = vadd.f32 %v613, %v760
    %v765 = vadd.f32 %v615, %v762
    %766 = vrot.lane.b32.xlu0 %v295, 32
    %v767 = vpop.permute.xlu0 %766
    %768 = vrot.lane.b32.xlu0 %v297, 32
    %v769 = vpop.permute.xlu0 %768
    %770 = vrot.lane.b32.xlu0 %v309, 32
    %v771 = vpop.permute.xlu0 %770
    %772 = vrot.lane.b32.xlu0 %v311, 32
    %v773 = vpop.permute.xlu0 %772
    %v774 = vsel %vm132, %v767, 0
    %v776 = vsel %vm132, %v769, 0
    %v778 = vsel %vm132, %v771, 0
    %v780 = vsel %vm132, %v773, 0
    %782 = vmatpush.xpose.msra.mxu0 0.0
    %783 = vmatpush.xpose.msra.mxu0 0.0
    %784 = vmatpush.xpose.msra.mxu0 0.0
    %785 = vmatpush.xpose.msra.mxu0 0.0
    %786 = vmatpush.xpose.msra.mxu0 0.0
    %787 = vmatpush.xpose.msra.mxu0 0.0
    %788 = vmatpush.xpose.msra.mxu0 0.0
    %789 = vmatpush.xpose.msra.mxu0 0.0
    %790 = vmatpush.xpose.msra.mxu0 0.0
    %791 = vmatpush.xpose.msra.mxu0 0.0
    %792 = vmatpush.xpose.msra.mxu0 0.0
    %793 = vmatpush.xpose.msra.mxu0 0.0
    %794 = vmatpush.xpose.msra.mxu0 0.0
    %795 = vmatpush.xpose.msra.mxu0 0.0
    %796 = vmatpush.xpose.msra.mxu0 %v780
    %797 = vmatpush.xpose.msra.mxu0 %v778
    %798 = vmatmul.f32.gmra.mxu0 %v774
    %v799 = vpop.f32.mrf.mxu0
    %v800 = vadd.f32 0.0, %v799
    %801 = vmatmul.f32.gmra.mxu0 %v776
    %v802 = vpop.f32.mrf.mxu0
    %v803 = vadd.f32 0.0, %v802
    %804 = vdwg.mxu0
    %v805 = vmul.f32 %v800, 0.17677669
    %v806 = vmul.f32 %v803, 0.17677669
    %v807 = vsel %vm120, %v805, -1e+09
    %v808 = vsel %vm121, %v806, -1e+09
    %v809 = vsel %vm366, %v807, -inf
    %810 = vmax.xlane.f32.xlu0 %v809
    %v811 = vpop.xlane.xlu0 %810
    %v812 = vsel %vm370, %v808, -inf
    %813 = vmax.xlane.f32.xlu0 %v812
    %v814 = vpop.xlane.xlu0 %813
    %v815 = vsub.f32 %v807, %v811
    %v816 = vsub.f32 %v808, %v814
    %v817 = vmul.f32 %v815, 1.442695
    %v818 = vpow.pop %v817
    %v819 = vmul.f32 %v816, 1.442695
    %v820 = vpow.pop %v819
    %v821 = vsel %vm366, %v818, 0.0
    %822 = vadd.xlane.f32.xlu0 %v821
    %v823 = vpop.xlane.xlu0 %822
    %v824 = vsel %vm370, %v820, 0.0
    %825 = vadd.xlane.f32.xlu0 %v824
    %v826 = vpop.xlane.xlu0 %825
    %v827 = vrcp.pop %v823
    %v828 = vmul.f32 %v823, %v827
    %v829 = vsub.f32 1.0, %v828
    %v830 = vmul.f32 %v827, %v829
    %v831 = vadd.f32 %v827, %v830
    %vm832 = vweird.f32 %v823
    %vm833 = vweird.f32 %v827
    %vm834 = vmor %vm832, %vm833
    %v835 = vsel %vm834, %v827, %v831
    %v836 = vand.u32 2147483647, %v823
    %vm837 = vcmp.eq.f32.partialorder %v836, 8.507059e+37
    %v838 = vand.u32 %v823, 2147483648
    %v839 = vor.u32 1.1754944e-38, %v838
    %v840 = vsel %vm837, %v839, %v835
    %v841 = vmul.f32 %v818, %v840
    %v842 = vrcp.pop %v826
    %v843 = vmul.f32 %v826, %v842
    %v844 = vsub.f32 1.0, %v843
    %v845 = vmul.f32 %v842, %v844
    %v846 = vadd.f32 %v842, %v845
    %vm847 = vweird.f32 %v826
    %vm848 = vweird.f32 %v842
    %vm849 = vmor %vm847, %vm848
    %v850 = vsel %vm849, %v842, %v846
    %v851 = vand.u32 2147483647, %v826
    %vm852 = vcmp.eq.f32.partialorder %v851, 8.507059e+37
    %v853 = vand.u32 %v826, 2147483648
    %v854 = vor.u32 1.1754944e-38, %v853
    %v855 = vsel %vm852, %v854, %v850
    %v856 = vmul.f32 %v820, %v855
    %857 = vrot.lane.b32.xlu0 %v323, 32
    %v858 = vpop.permute.xlu0 %857
    %859 = vrot.lane.b32.xlu0 %v325, 32
    %v860 = vpop.permute.xlu0 %859
    %v863 = vsel %vm366, %v841, 0
    %v866 = vsel %vm366, %v856, 0
    %v868 = vsel %vm422, %v860, 0
    %870 = vmatpush.msra.mxu0 0.0
    %871 = vmatpush.msra.mxu0 0.0
    %872 = vmatpush.msra.mxu0 0.0
    %873 = vmatpush.msra.mxu0 0.0
    %874 = vmatpush.msra.mxu0 0.0
    %875 = vmatpush.msra.mxu0 0.0
    %876 = vmatpush.msra.mxu0 0.0
    %877 = vmatpush.msra.mxu0 0.0
    %878 = vmatpush.msra.mxu0 0.0
    %879 = vmatpush.msra.mxu0 0.0
    %880 = vmatpush.msra.mxu0 0.0
    %881 = vmatpush.msra.mxu0 0.0
    %882 = vmatpush.msra.mxu0 0.0
    %883 = vmatpush.msra.mxu0 0.0
    %884 = vmatpush.msra.mxu0 %v868
    %885 = vmatpush.msra.mxu0 %v858
    %886 = vmatmul.f32.gmra.mxu0 %v863
    %v887 = vpop.f32.mrf.mxu0
    %v888 = vadd.f32 0.0, %v887
    %889 = vmatmul.f32.gmra.mxu0 %v866
    %v890 = vpop.f32.mrf.mxu0
    %v891 = vadd.f32 0.0, %v890
    %892 = vdwg.mxu0
    %v893 = vpack.c.bf16 %v891, %v888
    %v894 = vpack.c.bf16 %v249, %v248
    %v895 = vpack.c.bf16 %v251, %v250
    %v897 = vsel %vm132, %v893, 0
    %899 = vmatpush.bf16.msra.mxu0 0
    %900 = vmatpush.bf16.msra.mxu0 0
    %901 = vmatpush.bf16.msra.mxu0 0
    %902 = vmatpush.bf16.msra.mxu0 0
    %903 = vmatpush.bf16.msra.mxu0 0
    %904 = vmatpush.bf16.msra.mxu0 0
    %905 = vmatpush.bf16.msra.mxu0 %v895
    %906 = vmatpush.bf16.msra.mxu0 %v894
    %907 = vmatmul.bf16.gmra.mxu0 %v897
    %v908 = vpop.f32.mrf.mxu0
    %v909 = vadd.f32 0.0, %v908
    %v910 = vpop.f32.mrf.mxu0
    %v911 = vadd.f32 0.0, %v910
    %912 = vdwg.mxu0
    %v913 = vadd.f32 %v764, %v909
    %v914 = vadd.f32 %v765, %v911
    %v915 = vadd.f32 %v913, %v252
    %v916 = vadd.f32 %v914, %v252
    %v917 = vadd.f32 %v184, %v915
    %v918 = vadd.f32 %v185, %v916
    %v919 = vld [vmem:[#allocation7 + $0x6] ss:$0 sm:$0xff]
    %v920 = vld [vmem:[#allocation7 + $0x7] ss:$0 sm:$0xff]
    %921 = vadd.xlane.f32.xlu0 %v917
    %v922 = vpop.xlane.xlu0 %921
    %v923 = vsel %vm422, %v918, 0.0
    %924 = vadd.xlane.f32.xlu0 %v923
    %v925 = vpop.xlane.xlu0 %924
    %v926 = vrcp.pop 128.0
    %v927 = vmul.f32 128.0, %v926
    %v928 = vsub.f32 1.0, %v927
    %v929 = vmul.f32 %v926, %v928
    %v930 = vadd.f32 %v926, %v929
    %vm931 = vweird.f32 %v926
    %v932 = vsel %vm931, %v926, %v930
    %v933 = vmul.f32 %v922, %v932
    %v934 = vmul.f32 %v925, %v932
    %v935 = vsub.f32 %v917, %v933
    %v936 = vsub.f32 %v918, %v934
    %v937 = vmul.f32 %v935, %v935
    %v938 = vmul.f32 %v936, %v936
    %939 = vadd.xlane.f32.xlu0 %v937
    %v940 = vpop.xlane.xlu0 %939
    %v941 = vsel %vm422, %v938, 0.0
    %942 = vadd.xlane.f32.xlu0 %v941
    %v943 = vpop.xlane.xlu0 %942
    %v944 = vmul.f32 %v940, %v932
    %v945 = vmul.f32 %v943, %v932
    %v946 = vadd.f32 %v944, 1e-05
    %v947 = vadd.f32 %v945, 1e-05
    %v948 = vrsqrt.pop %v946
    %v949 = vmul.f32 %v948, %v946
    %v950 = vmul.f32 %v949, %v948
    %v951 = vmul.f32 0.5, %v950
    %v952 = vsub.f32 1.5, %v951
    %v953 = vmul.f32 %v948, %v952
    %vm954 = vweird.f32 %v946
    %vm955 = vweird.f32 %v948
    %vm956 = vmor %vm954, %vm955
    %v957 = vsel %vm956, %v948, %v953
    %v958 = vrsqrt.pop %v947
    %v959 = vmul.f32 %v958, %v947
    %v960 = vmul.f32 %v959, %v958
    %v961 = vmul.f32 0.5, %v960
    %v962 = vsub.f32 1.5, %v961
    %v963 = vmul.f32 %v958, %v962
    %vm964 = vweird.f32 %v947
    %vm965 = vweird.f32 %v958
    %vm966 = vmor %vm964, %vm965
    %v967 = vsel %vm966, %v958, %v963
    %v968 = vmul.f32 %v935, %v957
    %v969 = vmul.f32 %v936, %v967
    %v970 = vmul.f32 %v968, %v919
    %v971 = vmul.f32 %v969, %v919
    %v972 = vadd.f32 %v970, %v920
    %v973 = vadd.f32 %v971, %v920
    %v974 = vld [vmem:[#allocation10 + $0x20] sm:$0xff]
    %v975 = vld [vmem:[#allocation10 + $0x28] sm:$0xff]
    %v976 = vld [vmem:[#allocation10 + $0x30] sm:$0xff]
    %v977 = vld [vmem:[#allocation10 + $0x38] sm:$0xff]
    %v978 = vld [vmem:[#allocation10 + $0xa0] sm:$0xff]
    %v979 = vld [vmem:[#allocation10 + $0xa8] sm:$0xff]
    %v980 = vld [vmem:[#allocation10 + $0xb0] sm:$0xff]
    %v981 = vld [vmem:[#allocation10 + $0xb8] sm:$0xff]
    %v982 = vld [vmem:[#allocation10 + $0x120] sm:$0xff]
    %v983 = vld [vmem:[#allocation10 + $0x128] sm:$0xff]
    %v984 = vld [vmem:[#allocation10 + $0x130] sm:$0xff]
    %v985 = vld [vmem:[#allocation10 + $0x138] sm:$0xff]
    %v986 = vld [vmem:[#allocation10 + $0x1a0] sm:$0xff]
    %v987 = vld [vmem:[#allocation10 + $0x1a8] sm:$0xff]
    %v988 = vld [vmem:[#allocation10 + $0x1b0] sm:$0xff]
    %v989 = vld [vmem:[#allocation10 + $0x1b8] sm:$0xff]
    %v990 = vld [vmem:[#allocation10 + $0x220] sm:$0xff]
    %v991 = vld [vmem:[#allocation10 + $0x228] sm:$0xff]
    %v992 = vld [vmem:[#allocation10 + $0x230] sm:$0xff]
    %v993 = vld [vmem:[#allocation10 + $0x238] sm:$0xff]
    %v994 = vld [vmem:[#allocation10 + $0x2a0] sm:$0xff]
    %v995 = vld [vmem:[#allocation10 + $0x2a8] sm:$0xff]
    %v996 = vld [vmem:[#allocation10 + $0x2b0] sm:$0xff]
    %v997 = vld [vmem:[#allocation10 + $0x2b8] sm:$0xff]
    %v998 = vld [vmem:[#allocation10 + $0x320] sm:$0xff]
    %v999 = vld [vmem:[#allocation10 + $0x328] sm:$0xff]
    %v1000 = vld [vmem:[#allocation10 + $0x330] sm:$0xff]
    %v1001 = vld [vmem:[#allocation10 + $0x338] sm:$0xff]
    %v1002 = vld [vmem:[#allocation10 + $0x3a0] sm:$0xff]
    %v1003 = vld [vmem:[#allocation10 + $0x3a8] sm:$0xff]
    %v1004 = vld [vmem:[#allocation10 + $0x3b0] sm:$0xff]
    %v1005 = vld [vmem:[#allocation10 + $0x3b8] sm:$0xff]
    %v1006 = vld [vmem:[#allocation10 + $0x420] sm:$0xff]
    %v1007 = vld [vmem:[#allocation10 + $0x428] sm:$0xff]
    %v1008 = vld [vmem:[#allocation10 + $0x430] sm:$0xff]
    %v1009 = vld [vmem:[#allocation10 + $0x438] sm:$0xff]
    %v1010 = vld [vmem:[#allocation10 + $0x4a0] sm:$0xff]
    %v1011 = vld [vmem:[#allocation10 + $0x4a8] sm:$0xff]
    %v1012 = vld [vmem:[#allocation10 + $0x4b0] sm:$0xff]
    %v1013 = vld [vmem:[#allocation10 + $0x4b8] sm:$0xff]
    %v1014 = vld [vmem:[#allocation10 + $0x520] sm:$0xff]
    %v1015 = vld [vmem:[#allocation10 + $0x528] sm:$0xff]
    %v1016 = vld [vmem:[#allocation10 + $0x530] sm:$0xff]
    %v1017 = vld [vmem:[#allocation10 + $0x538] sm:$0xff]
    %v1018 = vld [vmem:[#allocation10 + $0x5a0] sm:$0xff]
    %v1019 = vld [vmem:[#allocation10 + $0x5a8] sm:$0xff]
    %v1020 = vld [vmem:[#allocation10 + $0x5b0] sm:$0xff]
    %v1021 = vld [vmem:[#allocation10 + $0x5b8] sm:$0xff]
    %v1022 = vld [vmem:[#allocation10 + $0x620] sm:$0xff]
    %v1023 = vld [vmem:[#allocation10 + $0x628] sm:$0xff]
    %v1024 = vld [vmem:[#allocation10 + $0x630] sm:$0xff]
    %v1025 = vld [vmem:[#allocation10 + $0x638] sm:$0xff]
    %v1026 = vld [vmem:[#allocation10 + $0x6a0] sm:$0xff]
    %v1027 = vld [vmem:[#allocation10 + $0x6a8] sm:$0xff]
    %v1028 = vld [vmem:[#allocation10 + $0x6b0] sm:$0xff]
    %v1029 = vld [vmem:[#allocation10 + $0x6b8] sm:$0xff]
    %v1030 = vld [vmem:[#allocation10 + $0x720] sm:$0xff]
    %v1031 = vld [vmem:[#allocation10 + $0x728] sm:$0xff]
    %v1032 = vld [vmem:[#allocation10 + $0x730] sm:$0xff]
    %v1033 = vld [vmem:[#allocation10 + $0x738] sm:$0xff]
    %v1034 = vld [vmem:[#allocation10 + $0x7a0] sm:$0xff]
    %v1035 = vld [vmem:[#allocation10 + $0x7a8] sm:$0xff]
    %v1036 = vld [vmem:[#allocation10 + $0x7b0] sm:$0xff]
    %v1037 = vld [vmem:[#allocation10 + $0x7b8] sm:$0xff]
    %v1038 = vpack.c.bf16 %v973, %v972
    %v1039 = vpack.c.bf16 %v978, %v974
    %v1040 = vpack.c.bf16 %v979, %v975
    %v1041 = vpack.c.bf16 %v980, %v976
    %v1042 = vpack.c.bf16 %v981, %v977
    %v1043 = vpack.c.bf16 %v986, %v982
    %v1044 = vpack.c.bf16 %v987, %v983
    %v1045 = vpack.c.bf16 %v988, %v984
    %v1046 = vpack.c.bf16 %v989, %v985
    %v1047 = vpack.c.bf16 %v994, %v990
    %v1048 = vpack.c.bf16 %v995, %v991
    %v1049 = vpack.c.bf16 %v996, %v992
    %v1050 = vpack.c.bf16 %v997, %v993
    %v1051 = vpack.c.bf16 %v1002, %v998
    %v1052 = vpack.c.bf16 %v1003, %v999
    %v1053 = vpack.c.bf16 %v1004, %v1000
    %v1054 = vpack.c.bf16 %v1005, %v1001
    %v1055 = vpack.c.bf16 %v1010, %v1006
    %v1056 = vpack.c.bf16 %v1011, %v1007
    %v1057 = vpack.c.bf16 %v1012, %v1008
    %v1058 = vpack.c.bf16 %v1013, %v1009
    %v1059 = vpack.c.bf16 %v1018, %v1014
    %v1060 = vpack.c.bf16 %v1019, %v1015
    %v1061 = vpack.c.bf16 %v1020, %v1016
    %v1062 = vpack.c.bf16 %v1021, %v1017
    %v1063 = vpack.c.bf16 %v1026, %v1022
    %v1064 = vpack.c.bf16 %v1027, %v1023
    %v1065 = vpack.c.bf16 %v1028, %v1024
    %v1066 = vpack.c.bf16 %v1029, %v1025
    %v1067 = vpack.c.bf16 %v1034, %v1030
    %v1068 = vpack.c.bf16 %v1035, %v1031
    %v1069 = vpack.c.bf16 %v1036, %v1032
    %v1070 = vpack.c.bf16 %v1037, %v1033
    %s1071 = scalar_lea.vmem [#allocation7], 4
    %v1072 = vld [vmem:[%s1071] ss:$8 sm:$0xf]
    %v1074 = vperm.slane %v1072, 0
    %v1075 = vperm.slane %v1072, 1
    %v1076 = vperm.slane %v1072, 2
    %v1077 = vperm.slane %v1072, 3
    %1082 = vmatpush.bf16.msra.mxu0 %v1067
    %1083 = vmatpush.bf16.msra.mxu0 %v1063
    %1084 = vmatpush.bf16.msra.mxu0 %v1059
    %1085 = vmatpush.bf16.msra.mxu0 %v1055
    %1086 = vmatpush.bf16.msra.mxu0 %v1051
    %1087 = vmatpush.bf16.msra.mxu0 %v1047
    %1088 = vmatpush.bf16.msra.mxu0 %v1043
    %1089 = vmatpush.bf16.msra.mxu0 %v1039
    %1090 = vmatmul.bf16.gmra.mxu0 %v1038
    %v1091 = vpop.f32.mrf.mxu0
    %v1092 = vadd.f32 %v1074, %v1091
    %v1093 = vpop.f32.mrf.mxu0
    %v1094 = vadd.f32 %v1074, %v1093
    %1095 = vdwg.mxu0
    %1096 = vmatpush.bf16.msra.mxu0 %v1068
    %1097 = vmatpush.bf16.msra.mxu0 %v1064
    %1098 = vmatpush.bf16.msra.mxu0 %v1060
    %1099 = vmatpush.bf16.msra.mxu0 %v1056
    %1100 = vmatpush.bf16.msra.mxu0 %v1052
    %1101 = vmatpush.bf16.msra.mxu0 %v1048
    %1102 = vmatpush.bf16.msra.mxu0 %v1044
    %1103 = vmatpush.bf16.msra.mxu0 %v1040
    %1104 = vmatmul.bf16.gmra.mxu0 %v1038
    %v1105 = vpop.f32.mrf.mxu0
    %v1106 = vadd.f32 %v1075, %v1105
    %v1107 = vpop.f32.mrf.mxu0
    %v1108 = vadd.f32 %v1075, %v1107
    %1109 = vdwg.mxu0
    %1110 = vmatpush.bf16.msra.mxu0 %v1069
    %1111 = vmatpush.bf16.msra.mxu0 %v1065
    %1112 = vmatpush.bf16.msra.mxu0 %v1061
    %1113 = vmatpush.bf16.msra.mxu0 %v1057
    %1114 = vmatpush.bf16.msra.mxu0 %v1053
    %1115 = vmatpush.bf16.msra.mxu0 %v1049
    %1116 = vmatpush.bf16.msra.mxu0 %v1045
    %1117 = vmatpush.bf16.msra.mxu0 %v1041
    %1118 = vmatmul.bf16.gmra.mxu0 %v1038
    %v1119 = vpop.f32.mrf.mxu0
    %v1120 = vadd.f32 %v1076, %v1119
    %v1121 = vpop.f32.mrf.mxu0
    %v1122 = vadd.f32 %v1076, %v1121
    %1123 = vdwg.mxu0
    %1124 = vmatpush.bf16.msra.mxu0 %v1070
    %1125 = vmatpush.bf16.msra.mxu0 %v1066
    %1126 = vmatpush.bf16.msra.mxu0 %v1062
    %1127 = vmatpush.bf16.msra.mxu0 %v1058
    %1128 = vmatpush.bf16.msra.mxu0 %v1054
    %1129 = vmatpush.bf16.msra.mxu0 %v1050
    %1130 = vmatpush.bf16.msra.mxu0 %v1046
    %1131 = vmatpush.bf16.msra.mxu0 %v1042
    %1132 = vmatmul.bf16.gmra.mxu0 %v1038
    %v1133 = vpop.f32.mrf.mxu0
    %v1134 = vadd.f32 %v1077, %v1133
    %v1135 = vpop.f32.mrf.mxu0
    %v1136 = vadd.f32 %v1077, %v1135
    %1137 = vdwg.mxu0
    %v1138 = vmax.f32 %v1092, 0.0
    %v1139 = vmax.f32 %v1106, 0.0
    %v1140 = vmax.f32 %v1120, 0.0
    %v1141 = vmax.f32 %v1134, 0.0
    %v1142 = vmax.f32 %v1094, 0.0
    %v1143 = vmax.f32 %v1108, 0.0
    %v1144 = vmax.f32 %v1122, 0.0
    %v1145 = vmax.f32 %v1136, 0.0
    %v1146 = vld [vmem:[#allocation12] sm:$0xff]
    %v1147 = vld [vmem:[#allocation12 + $0x10] sm:$0xff]
    %v1148 = vld [vmem:[#allocation12 + $0x20] sm:$0xff]
    %v1149 = vld [vmem:[#allocation12 + $0x30] sm:$0xff]
    %v1150 = vld [vmem:[#allocation12 + $0x40] sm:$0xff]
    %v1151 = vld [vmem:[#allocation12 + $0x50] sm:$0xff]
    %v1152 = vld [vmem:[#allocation12 + $0x60] sm:$0xff]
    %v1153 = vld [vmem:[#allocation12 + $0x70] sm:$0xff]
    %v1154 = vld [vmem:[#allocation12 + $0x80] sm:$0xff]
    %v1155 = vld [vmem:[#allocation12 + $0x90] sm:$0xff]
    %v1156 = vld [vmem:[#allocation12 + $0xa0] sm:$0xff]
    %v1157 = vld [vmem:[#allocation12 + $0xb0] sm:$0xff]
    %v1158 = vld [vmem:[#allocation12 + $0xc0] sm:$0xff]
    %v1159 = vld [vmem:[#allocation12 + $0xd0] sm:$0xff]
    %v1160 = vld [vmem:[#allocation12 + $0xe0] sm:$0xff]
    %v1161 = vld [vmem:[#allocation12 + $0xf0] sm:$0xff]
    %v1162 = vld [vmem:[#allocation12 + $0x100] sm:$0xff]
    %v1163 = vld [vmem:[#allocation12 + $0x110] sm:$0xff]
    %v1164 = vld [vmem:[#allocation12 + $0x120] sm:$0xff]
    %v1165 = vld [vmem:[#allocation12 + $0x130] sm:$0xff]
    %v1166 = vld [vmem:[#allocation12 + $0x140] sm:$0xff]
    %v1167 = vld [vmem:[#allocation12 + $0x150] sm:$0xff]
    %v1168 = vld [vmem:[#allocation12 + $0x160] sm:$0xff]
    %v1169 = vld [vmem:[#allocation12 + $0x170] sm:$0xff]
    %v1170 = vld [vmem:[#allocation12 + $0x180] sm:$0xff]
    %v1171 = vld [vmem:[#allocation12 + $0x190] sm:$0xff]
    %v1172 = vld [vmem:[#allocation12 + $0x1a0] sm:$0xff]
    %v1173 = vld [vmem:[#allocation12 + $0x1b0] sm:$0xff]
    %v1174 = vld [vmem:[#allocation12 + $0x1c0] sm:$0xff]
    %v1175 = vld [vmem:[#allocation12 + $0x1d0] sm:$0xff]
    %v1176 = vld [vmem:[#allocation12 + $0x1e0] sm:$0xff]
    %v1177 = vld [vmem:[#allocation12 + $0x1f0] sm:$0xff]
    %v1178 = vld [vmem:[#allocation12 + $0x200] sm:$0xff]
    %v1179 = vld [vmem:[#allocation12 + $0x210] sm:$0xff]
    %v1180 = vld [vmem:[#allocation12 + $0x220] sm:$0xff]
    %v1181 = vld [vmem:[#allocation12 + $0x230] sm:$0xff]
    %v1182 = vld [vmem:[#allocation12 + $0x240] sm:$0xff]
    %v1183 = vld [vmem:[#allocation12 + $0x250] sm:$0xff]
    %v1184 = vld [vmem:[#allocation12 + $0x260] sm:$0xff]
    %v1185 = vld [vmem:[#allocation12 + $0x270] sm:$0xff]
    %v1186 = vld [vmem:[#allocation12 + $0x280] sm:$0xff]
    %v1187 = vld [vmem:[#allocation12 + $0x290] sm:$0xff]
    %v1188 = vld [vmem:[#allocation12 + $0x2a0] sm:$0xff]
    %v1189 = vld [vmem:[#allocation12 + $0x2b0] sm:$0xff]
    %v1190 = vld [vmem:[#allocation12 + $0x2c0] sm:$0xff]
    %v1191 = vld [vmem:[#allocation12 + $0x2d0] sm:$0xff]
    %v1192 = vld [vmem:[#allocation12 + $0x2e0] sm:$0xff]
    %v1193 = vld [vmem:[#allocation12 + $0x2f0] sm:$0xff]
    %v1194 = vld [vmem:[#allocation12 + $0x300] sm:$0xff]
    %v1195 = vld [vmem:[#allocation12 + $0x310] sm:$0xff]
    %v1196 = vld [vmem:[#allocation12 + $0x320] sm:$0xff]
    %v1197 = vld [vmem:[#allocation12 + $0x330] sm:$0xff]
    %v1198 = vld [vmem:[#allocation12 + $0x340] sm:$0xff]
    %v1199 = vld [vmem:[#allocation12 + $0x350] sm:$0xff]
    %v1200 = vld [vmem:[#allocation12 + $0x360] sm:$0xff]
    %v1201 = vld [vmem:[#allocation12 + $0x370] sm:$0xff]
    %v1202 = vld [vmem:[#allocation12 + $0x380] sm:$0xff]
    %v1203 = vld [vmem:[#allocation12 + $0x390] sm:$0xff]
    %v1204 = vld [vmem:[#allocation12 + $0x3a0] sm:$0xff]
    %v1205 = vld [vmem:[#allocation12 + $0x3b0] sm:$0xff]
    %v1206 = vld [vmem:[#allocation12 + $0x3c0] sm:$0xff]
    %v1207 = vld [vmem:[#allocation12 + $0x3d0] sm:$0xff]
    %v1208 = vld [vmem:[#allocation12 + $0x3e0] sm:$0xff]
    %v1209 = vld [vmem:[#allocation12 + $0x3f0] sm:$0xff]
    %v1210 = vpack.c.bf16 %v1142, %v1138
    %v1211 = vpack.c.bf16 %v1143, %v1139
    %v1212 = vpack.c.bf16 %v1144, %v1140
    %v1213 = vpack.c.bf16 %v1145, %v1141
    %v1214 = vpack.c.bf16 %v1147, %v1146
    %v1215 = vpack.c.bf16 %v1149, %v1148
    %v1216 = vpack.c.bf16 %v1151, %v1150
    %v1217 = vpack.c.bf16 %v1153, %v1152
    %v1218 = vpack.c.bf16 %v1155, %v1154
    %v1219 = vpack.c.bf16 %v1157, %v1156
    %v1220 = vpack.c.bf16 %v1159, %v1158
    %v1221 = vpack.c.bf16 %v1161, %v1160
    %v1222 = vpack.c.bf16 %v1163, %v1162
    %v1223 = vpack.c.bf16 %v1165, %v1164
    %v1224 = vpack.c.bf16 %v1167, %v1166
    %v1225 = vpack.c.bf16 %v1169, %v1168
    %v1226 = vpack.c.bf16 %v1171, %v1170
    %v1227 = vpack.c.bf16 %v1173, %v1172
    %v1228 = vpack.c.bf16 %v1175, %v1174
    %v1229 = vpack.c.bf16 %v1177, %v1176
    %v1230 = vpack.c.bf16 %v1179, %v1178
    %v1231 = vpack.c.bf16 %v1181, %v1180
    %v1232 = vpack.c.bf16 %v1183, %v1182
    %v1233 = vpack.c.bf16 %v1185, %v1184
    %v1234 = vpack.c.bf16 %v1187, %v1186
    %v1235 = vpack.c.bf16 %v1189, %v1188
    %v1236 = vpack.c.bf16 %v1191, %v1190
    %v1237 = vpack.c.bf16 %v1193, %v1192
    %v1238 = vpack.c.bf16 %v1195, %v1194
    %v1239 = vpack.c.bf16 %v1197, %v1196
    %v1240 = vpack.c.bf16 %v1199, %v1198
    %v1241 = vpack.c.bf16 %v1201, %v1200
    %v1242 = vpack.c.bf16 %v1203, %v1202
    %v1243 = vpack.c.bf16 %v1205, %v1204
    %v1244 = vpack.c.bf16 %v1207, %v1206
    %v1245 = vpack.c.bf16 %v1209, %v1208
    %v1246 = vld [vmem:[#allocation7 + $0x5] ss:$0 sm:$0xff]
    %1247 = vmatpush.bf16.msra.mxu0 %v1221
    %1248 = vmatpush.bf16.msra.mxu0 %v1220
    %1249 = vmatpush.bf16.msra.mxu0 %v1219
    %1250 = vmatpush.bf16.msra.mxu0 %v1218
    %1251 = vmatpush.bf16.msra.mxu0 %v1217
    %1252 = vmatpush.bf16.msra.mxu0 %v1216
    %1253 = vmatpush.bf16.msra.mxu0 %v1215
    %1254 = vmatpush.bf16.msra.mxu0 %v1214
    %1255 = vmatmul.bf16.gmra.mxu0 %v1210
    %v1256 = vpop.f32.mrf.mxu0
    %v1257 = vadd.f32 %v1246, %v1256
    %v1258 = vpop.f32.mrf.mxu0
    %v1259 = vadd.f32 %v1246, %v1258
    %1260 = vdwg.mxu0
    %1261 = vmatpush.bf16.msra.mxu0 %v1229
    %1262 = vmatpush.bf16.msra.mxu0 %v1228
    %1263 = vmatpush.bf16.msra.mxu0 %v1227
    %1264 = vmatpush.bf16.msra.mxu0 %v1226
    %1265 = vmatpush.bf16.msra.mxu0 %v1225
    %1266 = vmatpush.bf16.msra.mxu0 %v1224
    %1267 = vmatpush.bf16.msra.mxu0 %v1223
    %1268 = vmatpush.bf16.msra.mxu0 %v1222
    %1269 = vmatmul.bf16.gmra.mxu0 %v1211
    %v1270 = vpop.f32.mrf.mxu0
    %v1271 = vadd.f32 %v1257, %v1270
    %v1272 = vpop.f32.mrf.mxu0
    %v1273 = vadd.f32 %v1259, %v1272
    %1274 = vdwg.mxu0
    %1275 = vmatpush.bf16.msra.mxu0 %v1237
    %1276 = vmatpush.bf16.msra.mxu0 %v1236
    %1277 = vmatpush.bf16.msra.mxu0 %v1235
    %1278 = vmatpush.bf16.msra.mxu0 %v1234
    %1279 = vmatpush.bf16.msra.mxu0 %v1233
    %1280 = vmatpush.bf16.msra.mxu0 %v1232
    %1281 = vmatpush.bf16.msra.mxu0 %v1231
    %1282 = vmatpush.bf16.msra.mxu0 %v1230
    %1283 = vmatmul.bf16.gmra.mxu0 %v1212
    %v1284 = vpop.f32.mrf.mxu0
    %v1285 = vadd.f32 %v1271, %v1284
    %v1286 = vpop.f32.mrf.mxu0
    %v1287 = vadd.f32 %v1273, %v1286
    %1288 = vdwg.mxu0
    %1289 = vmatpush.bf16.msra.mxu0 %v1245
    %1290 = vmatpush.bf16.msra.mxu0 %v1244
    %1291 = vmatpush.bf16.msra.mxu0 %v1243
    %1292 = vmatpush.bf16.msra.mxu0 %v1242
    %1293 = vmatpush.bf16.msra.mxu0 %v1241
    %1294 = vmatpush.bf16.msra.mxu0 %v1240
    %1295 = vmatpush.bf16.msra.mxu0 %v1239
    %1296 = vmatpush.bf16.msra.mxu0 %v1238
    %1297 = vmatmul.bf16.gmra.mxu0 %v1213
    %v1298 = vpop.f32.mrf.mxu0
    %v1299 = vadd.f32 %v1285, %v1298
    %v1300 = vpop.f32.mrf.mxu0
    %v1301 = vadd.f32 %v1287, %v1300
    %1302 = vdwg.mxu0
    %v1303 = vadd.f32 %v972, %v1299
    %v1304 = vadd.f32 %v973, %v1301
    %v1305 = vld [vmem:[#allocation7 + $0x20] ss:$0 sm:$0xff]
    %v1306 = vld [vmem:[#allocation7 + $0x21] ss:$0 sm:$0xff]
    %1307 = vadd.xlane.f32.xlu0 %v1303
    %v1308 = vpop.xlane.xlu0 %1307
    %v1309 = vsel %vm422, %v1304, 0.0
    %1310 = vadd.xlane.f32.xlu0 %v1309
    %v1311 = vpop.xlane.xlu0 %1310
    %v1312 = vmul.f32 %v1308, %v932
    %v1313 = vmul.f32 %v1311, %v932
    %v1314 = vsub.f32 %v1303, %v1312
    %v1315 = vsub.f32 %v1304, %v1313
    %v1316 = vmul.f32 %v1314, %v1314
    %v1317 = vmul.f32 %v1315, %v1315
    %1318 = vadd.xlane.f32.xlu0 %v1316
    %v1319 = vpop.xlane.xlu0 %1318
    %v1320 = vsel %vm422, %v1317, 0.0
    %1321 = vadd.xlane.f32.xlu0 %v1320
    %v1322 = vpop.xlane.xlu0 %1321
    %v1323 = vmul.f32 %v1319, %v932
    %v1324 = vmul.f32 %v1322, %v932
    %v1325 = vadd.f32 %v1323, 1e-05
    %v1326 = vadd.f32 %v1324, 1e-05
    %v1327 = vrsqrt.pop %v1325
    %v1328 = vmul.f32 %v1327, %v1325
    %v1329 = vmul.f32 %v1328, %v1327
    %v1330 = vmul.f32 0.5, %v1329
    %v1331 = vsub.f32 1.5, %v1330
    %v1332 = vmul.f32 %v1327, %v1331
    %vm1333 = vweird.f32 %v1325
    %vm1334 = vweird.f32 %v1327
    %vm1335 = vmor %vm1333, %vm1334
    %v1336 = vsel %vm1335, %v1327, %v1332
    %v1337 = vrsqrt.pop %v1326
    %v1338 = vmul.f32 %v1337, %v1326
    %v1339 = vmul.f32 %v1338, %v1337
    %v1340 = vmul.f32 0.5, %v1339
    %v1341 = vsub.f32 1.5, %v1340
    %v1342 = vmul.f32 %v1337, %v1341
    %vm1343 = vweird.f32 %v1326
    %vm1344 = vweird.f32 %v1337
    %vm1345 = vmor %vm1343, %vm1344
    %v1346 = vsel %vm1345, %v1337, %v1342
    %v1347 = vmul.f32 %v1314, %v1336
    %v1348 = vmul.f32 %v1315, %v1346
    %v1349 = vmul.f32 %v1347, %v1305
    %v1350 = vmul.f32 %v1348, %v1305
    %v1351 = vadd.f32 %v1349, %v1306
    %v1352 = vadd.f32 %v1350, %v1306
    %v1353 = vld [vmem:[#allocation10 + $0x40] sm:$0xff]
    %v1354 = vld [vmem:[#allocation10 + $0xc0] sm:$0xff]
    %v1355 = vld [vmem:[#allocation10 + $0x140] sm:$0xff]
    %v1356 = vld [vmem:[#allocation10 + $0x1c0] sm:$0xff]
    %v1357 = vld [vmem:[#allocation10 + $0x240] sm:$0xff]
    %v1358 = vld [vmem:[#allocation10 + $0x2c0] sm:$0xff]
    %v1359 = vld [vmem:[#allocation10 + $0x340] sm:$0xff]
    %v1360 = vld [vmem:[#allocation10 + $0x3c0] sm:$0xff]
    %v1361 = vld [vmem:[#allocation10 + $0x440] sm:$0xff]
    %v1362 = vld [vmem:[#allocation10 + $0x4c0] sm:$0xff]
    %v1363 = vld [vmem:[#allocation10 + $0x540] sm:$0xff]
    %v1364 = vld [vmem:[#allocation10 + $0x5c0] sm:$0xff]
    %v1365 = vld [vmem:[#allocation10 + $0x640] sm:$0xff]
    %v1366 = vld [vmem:[#allocation10 + $0x6c0] sm:$0xff]
    %v1367 = vld [vmem:[#allocation10 + $0x740] sm:$0xff]
    %v1368 = vld [vmem:[#allocation10 + $0x7c0] sm:$0xff]
    %v1369 = vpack.c.bf16 %v1352, %v1351
    %v1370 = vpack.c.bf16 %v1354, %v1353
    %v1371 = vpack.c.bf16 %v1356, %v1355
    %v1372 = vpack.c.bf16 %v1358, %v1357
    %v1373 = vpack.c.bf16 %v1360, %v1359
    %v1374 = vpack.c.bf16 %v1362, %v1361
    %v1375 = vpack.c.bf16 %v1364, %v1363
    %v1376 = vpack.c.bf16 %v1366, %v1365
    %v1377 = vpack.c.bf16 %v1368, %v1367
    %v1378 = vld [vmem:[#allocation7 + $0x22] ss:$0 sm:$0xff]
    %1379 = vmatpush.bf16.msra.mxu0 %v1377
    %1380 = vmatpush.bf16.msra.mxu0 %v1376
    %1381 = vmatpush.bf16.msra.mxu0 %v1375
    %1382 = vmatpush.bf16.msra.mxu0 %v1374
    %1383 = vmatpush.bf16.msra.mxu0 %v1373
    %1384 = vmatpush.bf16.msra.mxu0 %v1372
    %1385 = vmatpush.bf16.msra.mxu0 %v1371
    %1386 = vmatpush.bf16.msra.mxu0 %v1370
    %1387 = vmatmul.bf16.gmra.mxu0 %v1369
    %v1388 = vpop.f32.mrf.mxu0
    %v1389 = vadd.f32 %v1378, %v1388
    %v1390 = vpop.f32.mrf.mxu0
    %v1391 = vadd.f32 %v1378, %v1390
    %1392 = vdwg.mxu0
    %v1393 = vld [vmem:[#allocation9 + $0x10] sm:$0x3f]
    %v1394 = vpack.c.bf16 %v1393, %v1393
    %v1395 = vld [vmem:[#allocation7 + $0x23] ss:$0 sm:$0xff]
    %vm1396 = vcmask 48128
    %v1398 = vsel %vm1396, %v156, 0
    %vm1400 = vcmask 1042432
    %v1402 = vsel %vm1400, %v1394, 0
    %1404 = vmatpush.bf16.msra.mxu0 0
    %1405 = vmatpush.bf16.msra.mxu0 0
    %1406 = vmatpush.bf16.msra.mxu0 0
    %1407 = vmatpush.bf16.msra.mxu0 0
    %1408 = vmatpush.bf16.msra.mxu0 0
    %1409 = vmatpush.bf16.msra.mxu0 0
    %1410 = vmatpush.bf16.msra.mxu0 0
    %1411 = vmatpush.bf16.msra.mxu0 %v1402
    %1412 = vmatmul.bf16.gmra.mxu0 %v1398
    %v1413 = vpop.f32.mrf.mxu0
    %v1414 = vadd.f32 %v1395, %v1413
    %v1415 = vpop.f32.mrf.mxu0
    %1416 = vdwg.mxu0
    %vm1417 = vcmp.gt.f32.partialorder %v1414, 0.0
    %v1418 = vmul.f32 %v1414, 0.01
    %v1419 = vsel %vm1417, %v1414, %v1418
    %v1420 = vld [vmem:[#allocation10 + $0x48] sm:$0xff]
    %v1421 = vld [vmem:[#allocation10 + $0x50] sm:$0xff]
    %v1422 = vld [vmem:[#allocation10 + $0xc8] sm:$0xff]
    %v1423 = vld [vmem:[#allocation10 + $0xd0] sm:$0xff]
    %v1424 = vld [vmem:[#allocation10 + $0x148] sm:$0xff]
    %v1425 = vld [vmem:[#allocation10 + $0x150] sm:$0xff]
    %v1426 = vld [vmem:[#allocation10 + $0x1c8] sm:$0xff]
    %v1427 = vld [vmem:[#allocation10 + $0x1d0] sm:$0xff]
    %v1428 = vld [vmem:[#allocation10 + $0x248] sm:$0xff]
    %v1429 = vld [vmem:[#allocation10 + $0x250] sm:$0xff]
    %v1430 = vld [vmem:[#allocation10 + $0x2c8] sm:$0xff]
    %v1431 = vld [vmem:[#allocation10 + $0x2d0] sm:$0xff]
    %v1432 = vld [vmem:[#allocation10 + $0x348] sm:$0xff]
    %v1433 = vld [vmem:[#allocation10 + $0x350] sm:$0xff]
    %v1434 = vld [vmem:[#allocation10 + $0x3c8] sm:$0xff]
    %v1435 = vld [vmem:[#allocation10 + $0x3d0] sm:$0xff]
    %v1436 = vld [vmem:[#allocation10 + $0x448] sm:$0xff]
    %v1437 = vld [vmem:[#allocation10 + $0x450] sm:$0xff]
    %v1438 = vld [vmem:[#allocation10 + $0x4c8] sm:$0xff]
    %v1439 = vld [vmem:[#allocation10 + $0x4d0] sm:$0xff]
    %v1440 = vld [vmem:[#allocation10 + $0x548] sm:$0xff]
    %v1441 = vld [vmem:[#allocation10 + $0x550] sm:$0xff]
    %v1442 = vld [vmem:[#allocation10 + $0x5c8] sm:$0xff]
    %v1443 = vld [vmem:[#allocation10 + $0x5d0] sm:$0xff]
    %v1444 = vld [vmem:[#allocation10 + $0x648] sm:$0xff]
    %v1445 = vld [vmem:[#allocation10 + $0x650] sm:$0xff]
    %v1446 = vld [vmem:[#allocation10 + $0x6c8] sm:$0xff]
    %v1447 = vld [vmem:[#allocation10 + $0x6d0] sm:$0xff]
    %v1448 = vld [vmem:[#allocation10 + $0x748] sm:$0xff]
    %v1449 = vld [vmem:[#allocation10 + $0x750] sm:$0xff]
    %v1450 = vld [vmem:[#allocation10 + $0x7c8] sm:$0xff]
    %v1451 = vld [vmem:[#allocation10 + $0x7d0] sm:$0xff]
    %v1452 = vpack.c.bf16 %v1419, %v1419
    %v1453 = vpack.c.bf16 %v1422, %v1420
    %v1454 = vpack.c.bf16 %v1423, %v1421
    %v1455 = vpack.c.bf16 %v1426, %v1424
    %v1456 = vpack.c.bf16 %v1427, %v1425
    %v1457 = vpack.c.bf16 %v1430, %v1428
    %v1458 = vpack.c.bf16 %v1431, %v1429
    %v1459 = vpack.c.bf16 %v1434, %v1432
    %v1460 = vpack.c.bf16 %v1435, %v1433
    %v1461 = vpack.c.bf16 %v1438, %v1436
    %v1462 = vpack.c.bf16 %v1439, %v1437
    %v1463 = vpack.c.bf16 %v1442, %v1440
    %v1464 = vpack.c.bf16 %v1443, %v1441
    %v1465 = vpack.c.bf16 %v1446, %v1444
    %v1466 = vpack.c.bf16 %v1447, %v1445
    %v1467 = vpack.c.bf16 %v1450, %v1448
    %v1468 = vpack.c.bf16 %v1451, %v1449
    %s1469 = scalar_lea.vmem [#allocation7], 36
    %v1470 = vld [vmem:[%s1469] ss:$8 sm:$0x3]
    %v1472 = vperm.slane %v1470, 0
    %v1473 = vperm.slane %v1470, 1
    %1476 = vmatpush.bf16.msra.mxu0 %v1467
    %1477 = vmatpush.bf16.msra.mxu0 %v1465
    %1478 = vmatpush.bf16.msra.mxu0 %v1463
    %1479 = vmatpush.bf16.msra.mxu0 %v1461
    %1480 = vmatpush.bf16.msra.mxu0 %v1459
    %1481 = vmatpush.bf16.msra.mxu0 %v1457
    %1482 = vmatpush.bf16.msra.mxu0 %v1455
    %1483 = vmatpush.bf16.msra.mxu0 %v1453
    %1484 = vmatmul.bf16.gmra.mxu0 %v1452
    %v1485 = vpop.f32.mrf.mxu0
    %v1486 = vadd.f32 %v1472, %v1485
    %v1487 = vpop.f32.mrf.mxu0
    %1488 = vdwg.mxu0
    %1489 = vmatpush.bf16.msra.mxu0 %v1468
    %1490 = vmatpush.bf16.msra.mxu0 %v1466
    %1491 = vmatpush.bf16.msra.mxu0 %v1464
    %1492 = vmatpush.bf16.msra.mxu0 %v1462
    %1493 = vmatpush.bf16.msra.mxu0 %v1460
    %1494 = vmatpush.bf16.msra.mxu0 %v1458
    %1495 = vmatpush.bf16.msra.mxu0 %v1456
    %1496 = vmatpush.bf16.msra.mxu0 %v1454
    %1497 = vmatmul.bf16.gmra.mxu0 %v1452
    %v1498 = vpop.f32.mrf.mxu0
    %v1499 = vadd.f32 %v1473, %v1498
    %v1500 = vpop.f32.mrf.mxu0
    %1501 = vdwg.mxu0
    %vm1502 = vcmp.gt.f32.partialorder %v1486, 0.0
    %vm1503 = vcmp.gt.f32.partialorder %v1499, 0.0
    %v1504 = vmul.f32 %v1486, 0.01
    %v1505 = vmul.f32 %v1499, 0.01
    %v1506 = vsel %vm1502, %v1486, %v1504
    %v1507 = vsel %vm1503, %v1499, %v1505
    %v1508 = vld [vmem:[#allocation12 + $0x8] sm:$0xff]
    %v1509 = vld [vmem:[#allocation12 + $0x18] sm:$0xff]
    %v1510 = vld [vmem:[#allocation12 + $0x28] sm:$0xff]
    %v1511 = vld [vmem:[#allocation12 + $0x38] sm:$0xff]
    %v1512 = vld [vmem:[#allocation12 + $0x48] sm:$0xff]
    %v1513 = vld [vmem:[#allocation12 + $0x58] sm:$0xff]
    %v1514 = vld [vmem:[#allocation12 + $0x68] sm:$0xff]
    %v1515 = vld [vmem:[#allocation12 + $0x78] sm:$0xff]
    %v1516 = vld [vmem:[#allocation12 + $0x88] sm:$0xff]
    %v1517 = vld [vmem:[#allocation12 + $0x98] sm:$0xff]
    %v1518 = vld [vmem:[#allocation12 + $0xa8] sm:$0xff]
    %v1519 = vld [vmem:[#allocation12 + $0xb8] sm:$0xff]
    %v1520 = vld [vmem:[#allocation12 + $0xc8] sm:$0xff]
    %v1521 = vld [vmem:[#allocation12 + $0xd8] sm:$0xff]
    %v1522 = vld [vmem:[#allocation12 + $0xe8] sm:$0xff]
    %v1523 = vld [vmem:[#allocation12 + $0xf8] sm:$0xff]
    %v1524 = vld [vmem:[#allocation12 + $0x108] sm:$0xff]
    %v1525 = vld [vmem:[#allocation12 + $0x118] sm:$0xff]
    %v1526 = vld [vmem:[#allocation12 + $0x128] sm:$0xff]
    %v1527 = vld [vmem:[#allocation12 + $0x138] sm:$0xff]
    %v1528 = vld [vmem:[#allocation12 + $0x148] sm:$0xff]
    %v1529 = vld [vmem:[#allocation12 + $0x158] sm:$0xff]
    %v1530 = vld [vmem:[#allocation12 + $0x168] sm:$0xff]
    %v1531 = vld [vmem:[#allocation12 + $0x178] sm:$0xff]
    %v1532 = vld [vmem:[#allocation12 + $0x188] sm:$0xff]
    %v1533 = vld [vmem:[#allocation12 + $0x198] sm:$0xff]
    %v1534 = vld [vmem:[#allocation12 + $0x1a8] sm:$0xff]
    %v1535 = vld [vmem:[#allocation12 + $0x1b8] sm:$0xff]
    %v1536 = vld [vmem:[#allocation12 + $0x1c8] sm:$0xff]
    %v1537 = vld [vmem:[#allocation12 + $0x1d8] sm:$0xff]
    %v1538 = vld [vmem:[#allocation12 + $0x1e8] sm:$0xff]
    %v1539 = vld [vmem:[#allocation12 + $0x1f8] sm:$0xff]
    %v1540 = vpack.c.bf16 %v1506, %v1506
    %v1541 = vpack.c.bf16 %v1507, %v1507
    %v1542 = vpack.c.bf16 %v1509, %v1508
    %v1543 = vpack.c.bf16 %v1511, %v1510
    %v1544 = vpack.c.bf16 %v1513, %v1512
    %v1545 = vpack.c.bf16 %v1515, %v1514
    %v1546 = vpack.c.bf16 %v1517, %v1516
    %v1547 = vpack.c.bf16 %v1519, %v1518
    %v1548 = vpack.c.bf16 %v1521, %v1520
    %v1549 = vpack.c.bf16 %v1523, %v1522
    %v1550 = vpack.c.bf16 %v1525, %v1524
    %v1551 = vpack.c.bf16 %v1527, %v1526
    %v1552 = vpack.c.bf16 %v1529, %v1528
    %v1553 = vpack.c.bf16 %v1531, %v1530
    %v1554 = vpack.c.bf16 %v1533, %v1532
    %v1555 = vpack.c.bf16 %v1535, %v1534
    %v1556 = vpack.c.bf16 %v1537, %v1536
    %v1557 = vpack.c.bf16 %v1539, %v1538
    %v1558 = vld [vmem:[#allocation7 + $0x25] ss:$0 sm:$0xff]
    %1559 = vmatpush.bf16.msra.mxu0 %v1549
    %1560 = vmatpush.bf16.msra.mxu0 %v1548
    %1561 = vmatpush.bf16.msra.mxu0 %v1547
    %1562 = vmatpush.bf16.msra.mxu0 %v1546
    %1563 = vmatpush.bf16.msra.mxu0 %v1545
    %1564 = vmatpush.bf16.msra.mxu0 %v1544
    %1565 = vmatpush.bf16.msra.mxu0 %v1543
    %1566 = vmatpush.bf16.msra.mxu0 %v1542
    %1567 = vmatmul.bf16.gmra.mxu0 %v1540
    %v1568 = vpop.f32.mrf.mxu0
    %v1569 = vadd.f32 %v1558, %v1568
    %v1570 = vpop.f32.mrf.mxu0
    %1571 = vdwg.mxu0
    %1572 = vmatpush.bf16.msra.mxu0 %v1557
    %1573 = vmatpush.bf16.msra.mxu0 %v1556
    %1574 = vmatpush.bf16.msra.mxu0 %v1555
    %1575 = vmatpush.bf16.msra.mxu0 %v1554
    %1576 = vmatpush.bf16.msra.mxu0 %v1553
    %1577 = vmatpush.bf16.msra.mxu0 %v1552
    %1578 = vmatpush.bf16.msra.mxu0 %v1551
    %1579 = vmatpush.bf16.msra.mxu0 %v1550
    %1580 = vmatmul.bf16.gmra.mxu0 %v1541
    %v1581 = vpop.f32.mrf.mxu0
    %v1582 = vadd.f32 %v1569, %v1581
    %v1583 = vpop.f32.mrf.mxu0
    %1584 = vdwg.mxu0
    %vm1585 = vcmp.gt.f32.partialorder %v1582, 0.0
    %v1586 = vmul.f32 %v1582, 0.01
    %v1587 = vsel %vm1585, %v1582, %v1586
    %v1588 = vld [vmem:[#allocation10 + $0x58] sm:$0xff]
    %v1589 = vld [vmem:[#allocation10 + $0xd8] sm:$0xff]
    %v1590 = vld [vmem:[#allocation10 + $0x158] sm:$0xff]
    %v1591 = vld [vmem:[#allocation10 + $0x1d8] sm:$0xff]
    %v1592 = vld [vmem:[#allocation10 + $0x258] sm:$0xff]
    %v1593 = vld [vmem:[#allocation10 + $0x2d8] sm:$0xff]
    %v1594 = vld [vmem:[#allocation10 + $0x358] sm:$0xff]
    %v1595 = vld [vmem:[#allocation10 + $0x3d8] sm:$0xff]
    %v1596 = vld [vmem:[#allocation10 + $0x458] sm:$0xff]
    %v1597 = vld [vmem:[#allocation10 + $0x4d8] sm:$0xff]
    %v1598 = vld [vmem:[#allocation10 + $0x558] sm:$0xff]
    %v1599 = vld [vmem:[#allocation10 + $0x5d8] sm:$0xff]
    %v1600 = vld [vmem:[#allocation10 + $0x658] sm:$0xff]
    %v1601 = vld [vmem:[#allocation10 + $0x6d8] sm:$0xff]
    %v1602 = vld [vmem:[#allocation10 + $0x758] sm:$0xff]
    %v1603 = vld [vmem:[#allocation10 + $0x7d8] sm:$0xff]
    %v1604 = vpack.c.bf16 %v1587, %v1587
    %v1605 = vpack.c.bf16 %v1589, %v1588
    %v1606 = vpack.c.bf16 %v1591, %v1590
    %v1607 = vpack.c.bf16 %v1593, %v1592
    %v1608 = vpack.c.bf16 %v1595, %v1594
    %v1609 = vpack.c.bf16 %v1597, %v1596
    %v1610 = vpack.c.bf16 %v1599, %v1598
    %v1611 = vpack.c.bf16 %v1601, %v1600
    %v1612 = vpack.c.bf16 %v1603, %v1602
    %v1613 = vld [vmem:[#allocation7 + $0x26] ss:$0 sm:$0xff]
    %1614 = vmatpush.bf16.msra.mxu0 %v1612
    %1615 = vmatpush.bf16.msra.mxu0 %v1611
    %1616 = vmatpush.bf16.msra.mxu0 %v1610
    %1617 = vmatpush.bf16.msra.mxu0 %v1609
    %1618 = vmatpush.bf16.msra.mxu0 %v1608
    %1619 = vmatpush.bf16.msra.mxu0 %v1607
    %1620 = vmatpush.bf16.msra.mxu0 %v1606
    %1621 = vmatpush.bf16.msra.mxu0 %v1605
    %1622 = vmatmul.bf16.gmra.mxu0 %v1604
    %v1623 = vpop.f32.mrf.mxu0
    %v1624 = vadd.f32 %v1613, %v1623
    %v1625 = vpop.f32.mrf.mxu0
    %1626 = vdwg.mxu0
    %v1627 = vld [vmem:[#allocation9 + $0x18] sm:$0xff]
    %v1628 = vld [vmem:[#allocation9 + $0x38] sm:$0xf]
    %1630 = vst [vmem:[#allocation1] ss:$4 sm:$0xff] %v109
    %v1631 = vld.sshfl [vmem:[#allocation1 + $0x8] sm:$0xff pattern:$0x73625140]
    %1632 = vrot.lane.b32.xlu0 %v1631, 90
    %v1633 = vpop.permute.xlu0 %1632
    %v1635 = vpack.c.bf16 %v1633, %v1633
    %v1636 = vpack.c.bf16 %v1628, %v1627
    %v1637 = vld [vmem:[#allocation7 + $0x27] ss:$0 sm:$0xff]
    %vm1638 = vcmask 97280
    %v1640 = vsel %vm1638, %v1635, 0
    %vm1642 = vcmask 1045504
    %v1644 = vsel %vm1642, %v1636, 0
    %1646 = vmatpush.bf16.msra.mxu0 0
    %1647 = vmatpush.bf16.msra.mxu0 0
    %1648 = vmatpush.bf16.msra.mxu0 0
    %1649 = vmatpush.bf16.msra.mxu0 0
    %1650 = vmatpush.bf16.msra.mxu0 0
    %1651 = vmatpush.bf16.msra.mxu0 0
    %1652 = vmatpush.bf16.msra.mxu0 0
    %1653 = vmatpush.bf16.msra.mxu0 %v1644
    %1654 = vmatmul.bf16.gmra.mxu0 %v1640
    %v1655 = vpop.f32.mrf.mxu0
    %v1656 = vadd.f32 %v1637, %v1655
    %v1657 = vpop.f32.mrf.mxu0
    %1658 = vdwg.mxu0
    %vm1659 = vcmask 523264
    %1660 = vst.msk [vmem:[#allocation3] sm:$0xff] %vm1659, %v1389
    %vm1661 = vcmask 517120
    %1662 = vst.msk [vmem:[#allocation3 + $0x8] sm:$0x3] %vm1661, %v1391
    %vm1663 = vcmask 254976
    %1664 = vst.msk [vmem:[#allocation3 + $0xa] sm:$0x3] %vm1663, %v1624
    %1666 = vrot.lane.b32.xlu0 %v1656, 32
    %v1667 = vpop.permute.xlu0 %1666
    %vm1669 = vcmask 517376
    %1670 = vst.msk [vmem:[#allocation3 + $0xa] sm:$0x3] %vm1669, %v1667
    %v1671 = vld [vmem:[#allocation3] sm:$0xff]
    %v1672 = vld [vmem:[#allocation3 + $0x8] sm:$0xf]
    %v1673 = vld [vmem:[#allocation10 + $0x60] sm:$0xff]
    %v1674 = vld [vmem:[#allocation10 + $0x68] sm:$0xff]
    %v1675 = vld [vmem:[#allocation10 + $0xe0] sm:$0xff]
    %v1676 = vld [vmem:[#allocation10 + $0xe8] sm:$0xff]
    %v1677 = vld [vmem:[#allocation10 + $0x160] sm:$0xff]
    %v1678 = vld [vmem:[#allocation10 + $0x168] sm:$0xff]
    %v1679 = vld [vmem:[#allocation10 + $0x1e0] sm:$0xff]
    %v1680 = vld [vmem:[#allocation10 + $0x1e8] sm:$0xff]
    %v1681 = vld [vmem:[#allocation10 + $0x260] sm:$0xff]
    %v1682 = vld [vmem:[#allocation10 + $0x268] sm:$0xff]
    %v1683 = vld [vmem:[#allocation10 + $0x2e0] sm:$0xff]
    %v1684 = vld [vmem:[#allocation10 + $0x2e8] sm:$0xff]
    %v1685 = vld [vmem:[#allocation10 + $0x360] sm:$0xff]
    %v1686 = vld [vmem:[#allocation10 + $0x368] sm:$0xff]
    %v1687 = vld [vmem:[#allocation10 + $0x3e0] sm:$0xff]
    %v1688 = vld [vmem:[#allocation10 + $0x3e8] sm:$0xff]
    %s1689 = scalar_lea.vmem [#allocation7], 64
    %v1690 = vld [vmem:[%s1689] ss:$8 sm:$0x3]
    %v1691 = vld [vmem:[#allocation10 + $0x70] sm:$0xff]
    %v1692 = vld [vmem:[#allocation10 + $0xf0] sm:$0xff]
    %v1693 = vld [vmem:[#allocation10 + $0x170] sm:$0xff]
    %v1694 = vld [vmem:[#allocation10 + $0x1f0] sm:$0xff]
    %v1695 = vld [vmem:[#allocation10 + $0x270] sm:$0xff]
    %v1696 = vld [vmem:[#allocation10 + $0x2f0] sm:$0xff]
    %v1697 = vld [vmem:[#allocation10 + $0x370] sm:$0xff]
    %v1698 = vld [vmem:[#allocation10 + $0x3f0] sm:$0xff]
    %v1699 = vld [vmem:[#allocation7 + $0x41] ss:$0 sm:$0xff]
    %v1700 = vpack.c.bf16 %v1672, %v1671
    %v1701 = vpack.c.bf16 %v1675, %v1673
    %v1702 = vpack.c.bf16 %v1676, %v1674
    %v1703 = vpack.c.bf16 %v1679, %v1677
    %v1704 = vpack.c.bf16 %v1680, %v1678
    %v1705 = vpack.c.bf16 %v1683, %v1681
    %v1706 = vpack.c.bf16 %v1684, %v1682
    %v1707 = vpack.c.bf16 %v1687, %v1685
    %v1708 = vpack.c.bf16 %v1688, %v1686
    %v1710 = vperm.slane %v1690, 0
    %v1711 = vperm.slane %v1690, 1
    %v1715 = vsel %vm1659, %v1700, 0
    %1717 = vmatpush.bf16.msra.mxu0 0
    %1718 = vmatpush.bf16.msra.mxu0 0
    %1719 = vmatpush.bf16.msra.mxu0 0
    %1720 = vmatpush.bf16.msra.mxu0 0
    %1721 = vmatpush.bf16.msra.mxu0 %v1707
    %1722 = vmatpush.bf16.msra.mxu0 %v1705
    %1723 = vmatpush.bf16.msra.mxu0 %v1703
    %1724 = vmatpush.bf16.msra.mxu0 %v1701
    %1725 = vmatmul.bf16.gmra.mxu0 %v1715
    %v1726 = vpop.f32.mrf.mxu0
    %v1727 = vadd.f32 %v1710, %v1726
    %v1728 = vpop.f32.mrf.mxu0
    %v1729 = vadd.f32 %v1710, %v1728
    %1730 = vdwg.mxu0
    %1731 = vmatpush.bf16.msra.mxu0 0
    %1732 = vmatpush.bf16.msra.mxu0 0
    %1733 = vmatpush.bf16.msra.mxu0 0
    %1734 = vmatpush.bf16.msra.mxu0 0
    %1735 = vmatpush.bf16.msra.mxu0 %v1708
    %1736 = vmatpush.bf16.msra.mxu0 %v1706
    %1737 = vmatpush.bf16.msra.mxu0 %v1704
    %1738 = vmatpush.bf16.msra.mxu0 %v1702
    %1739 = vmatmul.bf16.gmra.mxu0 %v1715
    %v1740 = vpop.f32.mrf.mxu0
    %v1741 = vadd.f32 %v1711, %v1740
    %v1742 = vpop.f32.mrf.mxu0
    %v1743 = vadd.f32 %v1711, %v1742
    %1744 = vdwg.mxu0
    %1747 = vrot.lane.b32.xlu0 %v1727, 64
    %v1748 = vpop.permute.xlu0 %1747
    %1749 = vrot.lane.b32.xlu0 %v1729, 64
    %v1750 = vpop.permute.xlu0 %1749
    %vm1751 = vcmask 130048
    %v1752 = vsel %vm1751, %v1727, 0
    %v1754 = vsel %vm1751, %v1729, 0
    %v1756 = vsel %vm1751, %v1748, 0
    %v1758 = vsel %vm1751, %v1750, 0
    %1760 = vmatpush.xpose.msra.mxu0 0.0
    %1761 = vmatpush.xpose.msra.mxu0 0.0
    %1762 = vmatpush.xpose.msra.mxu0 0.0
    %1763 = vmatpush.xpose.msra.mxu0 0.0
    %1764 = vmatpush.xpose.msra.mxu0 0.0
    %1765 = vmatpush.xpose.msra.mxu0 0.0
    %1766 = vmatpush.xpose.msra.mxu0 0.0
    %1767 = vmatpush.xpose.msra.mxu0 0.0
    %1768 = vmatpush.xpose.msra.mxu0 0.0
    %1769 = vmatpush.xpose.msra.mxu0 0.0
    %1770 = vmatpush.xpose.msra.mxu0 0.0
    %1771 = vmatpush.xpose.msra.mxu0 0.0
    %1772 = vmatpush.xpose.msra.mxu0 0.0
    %1773 = vmatpush.xpose.msra.mxu0 0.0
    %1774 = vmatpush.xpose.msra.mxu0 %v1758
    %1775 = vmatpush.xpose.msra.mxu0 %v1756
    %1776 = vmatmul.f32.gmra.mxu0 %v1752
    %v1777 = vpop.f32.mrf.mxu0
    %v1778 = vadd.f32 0.0, %v1777
    %1779 = vmatmul.f32.gmra.mxu0 %v1754
    %v1780 = vpop.f32.mrf.mxu0
    %v1781 = vadd.f32 0.0, %v1780
    %1782 = vdwg.mxu0
    %v1783 = vmul.f32 %v1778, 0.25
    %v1784 = vmul.f32 %v1781, 0.25
    %v1785 = vsel %vm120, %v1783, -1e+09
    %v1786 = vsel %vm121, %v1784, -1e+09
    %v1787 = vsel %vm1638, %v1785, -inf
    %1788 = vmax.xlane.f32.xlu0 %v1787
    %v1789 = vpop.xlane.xlu0 %1788
    %vm1790 = vcmask 93184
    %v1791 = vsel %vm1790, %v1786, -inf
    %1792 = vmax.xlane.f32.xlu0 %v1791
    %v1793 = vpop.xlane.xlu0 %1792
    %v1794 = vsub.f32 %v1785, %v1789
    %v1795 = vsub.f32 %v1786, %v1793
    %v1796 = vmul.f32 %v1794, 1.442695
    %v1797 = vpow.pop %v1796
    %v1798 = vmul.f32 %v1795, 1.442695
    %v1799 = vpow.pop %v1798
    %v1800 = vsel %vm1638, %v1797, 0.0
    %1801 = vadd.xlane.f32.xlu0 %v1800
    %v1802 = vpop.xlane.xlu0 %1801
    %v1803 = vsel %vm1790, %v1799, 0.0
    %1804 = vadd.xlane.f32.xlu0 %v1803
    %v1805 = vpop.xlane.xlu0 %1804
    %v1806 = vrcp.pop %v1802
    %v1807 = vmul.f32 %v1802, %v1806
    %v1808 = vsub.f32 1.0, %v1807
    %v1809 = vmul.f32 %v1806, %v1808
    %v1810 = vadd.f32 %v1806, %v1809
    %vm1811 = vweird.f32 %v1802
    %vm1812 = vweird.f32 %v1806
    %vm1813 = vmor %vm1811, %vm1812
    %v1814 = vsel %vm1813, %v1806, %v1810
    %v1815 = vand.u32 2147483647, %v1802
    %vm1816 = vcmp.eq.f32.partialorder %v1815, 8.507059e+37
    %v1817 = vand.u32 %v1802, 2147483648
    %v1818 = vor.u32 1.1754944e-38, %v1817
    %v1819 = vsel %vm1816, %v1818, %v1814
    %v1820 = vmul.f32 %v1797, %v1819
    %v1821 = vrcp.pop %v1805
    %v1822 = vmul.f32 %v1805, %v1821
    %v1823 = vsub.f32 1.0, %v1822
    %v1824 = vmul.f32 %v1821, %v1823
    %v1825 = vadd.f32 %v1821, %v1824
    %vm1826 = vweird.f32 %v1805
    %vm1827 = vweird.f32 %v1821
    %vm1828 = vmor %vm1826, %vm1827
    %v1829 = vsel %vm1828, %v1821, %v1825
    %v1830 = vand.u32 2147483647, %v1805
    %vm1831 = vcmp.eq.f32.partialorder %v1830, 8.507059e+37
    %v1832 = vand.u32 %v1805, 2147483648
    %v1833 = vor.u32 1.1754944e-38, %v1832
    %v1834 = vsel %vm1831, %v1833, %v1829
    %v1835 = vmul.f32 %v1799, %v1834
    %v1837 = vsel %vm1638, %v1820, 0
    %v1840 = vsel %vm1638, %v1835, 0
    %vm1842 = vcmask 1043456
    %v1844 = vsel %vm1842, %v1743, 0
    %1846 = vmatpush.msra.mxu0 0.0
    %1847 = vmatpush.msra.mxu0 0.0
    %1848 = vmatpush.msra.mxu0 0.0
    %1849 = vmatpush.msra.mxu0 0.0
    %1850 = vmatpush.msra.mxu0 0.0
    %1851 = vmatpush.msra.mxu0 0.0
    %1852 = vmatpush.msra.mxu0 0.0
    %1853 = vmatpush.msra.mxu0 0.0
    %1854 = vmatpush.msra.mxu0 0.0
    %1855 = vmatpush.msra.mxu0 0.0
    %1856 = vmatpush.msra.mxu0 0.0
    %1857 = vmatpush.msra.mxu0 0.0
    %1858 = vmatpush.msra.mxu0 0.0
    %1859 = vmatpush.msra.mxu0 0.0
    %1860 = vmatpush.msra.mxu0 %v1844
    %1861 = vmatpush.msra.mxu0 %v1741
    %1862 = vmatmul.f32.gmra.mxu0 %v1837
    %v1863 = vpop.f32.mrf.mxu0
    %v1864 = vadd.f32 0.0, %v1863
    %1865 = vmatmul.f32.gmra.mxu0 %v1840
    %v1866 = vpop.f32.mrf.mxu0
    %v1867 = vadd.f32 0.0, %v1866
    %1868 = vdwg.mxu0
    %v1869 = vpack.c.bf16 %v1867, %v1864
    %v1870 = vpack.c.bf16 %v1692, %v1691
    %1871 = vrot.lane.b32.xlu0 %v1727, 112
    %v1872 = vpop.permute.xlu0 %1871
    %1873 = vrot.lane.b32.xlu0 %v1729, 112
    %v1874 = vpop.permute.xlu0 %1873
    %1875 = vrot.lane.b32.xlu0 %v1727, 48
    %v1876 = vpop.permute.xlu0 %1875
    %1877 = vrot.lane.b32.xlu0 %v1729, 48
    %v1878 = vpop.permute.xlu0 %1877
    %v1879 = vsel %vm1751, %v1872, 0
    %v1881 = vsel %vm1751, %v1874, 0
    %v1883 = vsel %vm1751, %v1876, 0
    %v1885 = vsel %vm1751, %v1878, 0
    %1887 = vmatpush.xpose.msra.mxu0 0.0
    %1888 = vmatpush.xpose.msra.mxu0 0.0
    %1889 = vmatpush.xpose.msra.mxu0 0.0
    %1890 = vmatpush.xpose.msra.mxu0 0.0
    %1891 = vmatpush.xpose.msra.mxu0 0.0
    %1892 = vmatpush.xpose.msra.mxu0 0.0
    %1893 = vmatpush.xpose.msra.mxu0 0.0
    %1894 = vmatpush.xpose.msra.mxu0 0.0
    %1895 = vmatpush.xpose.msra.mxu0 0.0
    %1896 = vmatpush.xpose.msra.mxu0 0.0
    %1897 = vmatpush.xpose.msra.mxu0 0.0
    %1898 = vmatpush.xpose.msra.mxu0 0.0
    %1899 = vmatpush.xpose.msra.mxu0 0.0
    %1900 = vmatpush.xpose.msra.mxu0 0.0
    %1901 = vmatpush.xpose.msra.mxu0 %v1885
    %1902 = vmatpush.xpose.msra.mxu0 %v1883
    %1903 = vmatmul.f32.gmra.mxu0 %v1879
    %v1904 = vpop.f32.mrf.mxu0
    %v1905 = vadd.f32 0.0, %v1904
    %1906 = vmatmul.f32.gmra.mxu0 %v1881
    %v1907 = vpop.f32.mrf.mxu0
    %v1908 = vadd.f32 0.0, %v1907
    %1909 = vdwg.mxu0
    %v1910 = vmul.f32 %v1905, 0.25
    %v1911 = vmul.f32 %v1908, 0.25
    %v1912 = vsel %vm120, %v1910, -1e+09
    %v1913 = vsel %vm121, %v1911, -1e+09
    %v1914 = vsel %vm1638, %v1912, -inf
    %1915 = vmax.xlane.f32.xlu0 %v1914
    %v1916 = vpop.xlane.xlu0 %1915
    %v1917 = vsel %vm1790, %v1913, -inf
    %1918 = vmax.xlane.f32.xlu0 %v1917
    %v1919 = vpop.xlane.xlu0 %1918
    %v1920 = vsub.f32 %v1912, %v1916
    %v1921 = vsub.f32 %v1913, %v1919
    %v1922 = vmul.f32 %v1920, 1.442695
    %v1923 = vpow.pop %v1922
    %v1924 = vmul.f32 %v1921, 1.442695
    %v1925 = vpow.pop %v1924
    %v1926 = vsel %vm1638, %v1923, 0.0
    %1927 = vadd.xlane.f32.xlu0 %v1926
    %v1928 = vpop.xlane.xlu0 %1927
    %v1929 = vsel %vm1790, %v1925, 0.0
    %1930 = vadd.xlane.f32.xlu0 %v1929
    %v1931 = vpop.xlane.xlu0 %1930
    %v1932 = vrcp.pop %v1928
    %v1933 = vmul.f32 %v1928, %v1932
    %v1934 = vsub.f32 1.0, %v1933
    %v1935 = vmul.f32 %v1932, %v1934
    %v1936 = vadd.f32 %v1932, %v1935
    %vm1937 = vweird.f32 %v1928
    %vm1938 = vweird.f32 %v1932
    %vm1939 = vmor %vm1937, %vm1938
    %v1940 = vsel %vm1939, %v1932, %v1936
    %v1941 = vand.u32 2147483647, %v1928
    %vm1942 = vcmp.eq.f32.partialorder %v1941, 8.507059e+37
    %v1943 = vand.u32 %v1928, 2147483648
    %v1944 = vor.u32 1.1754944e-38, %v1943
    %v1945 = vsel %vm1942, %v1944, %v1940
    %v1946 = vmul.f32 %v1923, %v1945
    %v1947 = vrcp.pop %v1931
    %v1948 = vmul.f32 %v1931, %v1947
    %v1949 = vsub.f32 1.0, %v1948
    %v1950 = vmul.f32 %v1947, %v1949
    %v1951 = vadd.f32 %v1947, %v1950
    %vm1952 = vweird.f32 %v1931
    %vm1953 = vweird.f32 %v1947
    %vm1954 = vmor %vm1952, %vm1953
    %v1955 = vsel %vm1954, %v1947, %v1951
    %v1956 = vand.u32 2147483647, %v1931
    %vm1957 = vcmp.eq.f32.partialorder %v1956, 8.507059e+37
    %v1958 = vand.u32 %v1931, 2147483648
    %v1959 = vor.u32 1.1754944e-38, %v1958
    %v1960 = vsel %vm1957, %v1959, %v1955
    %v1961 = vmul.f32 %v1925, %v1960
    %1963 = vrot.lane.b32.xlu0 %v1741, 112
    %v1964 = vpop.permute.xlu0 %1963
    %1965 = vrot.lane.b32.xlu0 %v1743, 112
    %v1966 = vpop.permute.xlu0 %1965
    %v1969 = vsel %vm1638, %v1946, 0
    %v1972 = vsel %vm1638, %v1961, 0
    %v1974 = vsel %vm1842, %v1966, 0
    %1976 = vmatpush.msra.mxu0 0.0
    %1977 = vmatpush.msra.mxu0 0.0
    %1978 = vmatpush.msra.mxu0 0.0
    %1979 = vmatpush.msra.mxu0 0.0
    %1980 = vmatpush.msra.mxu0 0.0
    %1981 = vmatpush.msra.mxu0 0.0
    %1982 = vmatpush.msra.mxu0 0.0
    %1983 = vmatpush.msra.mxu0 0.0
    %1984 = vmatpush.msra.mxu0 0.0
    %1985 = vmatpush.msra.mxu0 0.0
    %1986 = vmatpush.msra.mxu0 0.0
    %1987 = vmatpush.msra.mxu0 0.0
    %1988 = vmatpush.msra.mxu0 0.0
    %1989 = vmatpush.msra.mxu0 0.0
    %1990 = vmatpush.msra.mxu0 %v1974
    %1991 = vmatpush.msra.mxu0 %v1964
    %1992 = vmatmul.f32.gmra.mxu0 %v1969
    %v1993 = vpop.f32.mrf.mxu0
    %v1994 = vadd.f32 0.0, %v1993
    %1995 = vmatmul.f32.gmra.mxu0 %v1972
    %v1996 = vpop.f32.mrf.mxu0
    %v1997 = vadd.f32 0.0, %v1996
    %1998 = vdwg.mxu0
    %v1999 = vpack.c.bf16 %v1997, %v1994
    %v2000 = vpack.c.bf16 %v1694, %v1693
    %v2002 = vsel %vm1751, %v1999, 0
    %2004 = vmatpush.bf16.msra.mxu0 0
    %2005 = vmatpush.bf16.msra.mxu0 0
    %2006 = vmatpush.bf16.msra.mxu0 0
    %2007 = vmatpush.bf16.msra.mxu0 0
    %2008 = vmatpush.bf16.msra.mxu0 0
    %2009 = vmatpush.bf16.msra.mxu0 0
    %2010 = vmatpush.bf16.msra.mxu0 0
    %2011 = vmatpush.bf16.msra.mxu0 %v2000
    %2012 = vmatmul.bf16.gmra.mxu0 %v2002
    %v2013 = vpop.f32.mrf.mxu0
    %v2014 = vadd.f32 0.0, %v2013
    %v2015 = vpop.f32.mrf.mxu0
    %v2016 = vadd.f32 0.0, %v2015
    %2017 = vdwg.mxu0
    %v2019 = vsel %vm1751, %v1869, 0
    %2021 = vmatpush.bf16.msra.mxu0 0
    %2022 = vmatpush.bf16.msra.mxu0 0
    %2023 = vmatpush.bf16.msra.mxu0 0
    %2024 = vmatpush.bf16.msra.mxu0 0
    %2025 = vmatpush.bf16.msra.mxu0 0
    %2026 = vmatpush.bf16.msra.mxu0 0
    %2027 = vmatpush.bf16.msra.mxu0 0
    %2028 = vmatpush.bf16.msra.mxu0 %v1870
    %2029 = vmatmul.bf16.gmra.mxu0 %v2019
    %v2030 = vpop.f32.mrf.mxu0
    %v2031 = vadd.f32 %v2014, %v2030
    %v2032 = vpop.f32.mrf.mxu0
    %v2033 = vadd.f32 %v2016, %v2032
    %2034 = vdwg.mxu0
    %2035 = vrot.lane.b32.xlu0 %v1727, 96
    %v2036 = vpop.permute.xlu0 %2035
    %2037 = vrot.lane.b32.xlu0 %v1729, 96
    %v2038 = vpop.permute.xlu0 %2037
    %2039 = vrot.lane.b32.xlu0 %v1727, 32
    %v2040 = vpop.permute.xlu0 %2039
    %2041 = vrot.lane.b32.xlu0 %v1729, 32
    %v2042 = vpop.permute.xlu0 %2041
    %v2043 = vsel %vm1751, %v2036, 0
    %v2045 = vsel %vm1751, %v2038, 0
    %v2047 = vsel %vm1751, %v2040, 0
    %v2049 = vsel %vm1751, %v2042, 0
    %2051 = vmatpush.xpose.msra.mxu0 0.0
    %2052 = vmatpush.xpose.msra.mxu0 0.0
    %2053 = vmatpush.xpose.msra.mxu0 0.0
    %2054 = vmatpush.xpose.msra.mxu0 0.0
    %2055 = vmatpush.xpose.msra.mxu0 0.0
    %2056 = vmatpush.xpose.msra.mxu0 0.0
    %2057 = vmatpush.xpose.msra.mxu0 0.0
    %2058 = vmatpush.xpose.msra.mxu0 0.0
    %2059 = vmatpush.xpose.msra.mxu0 0.0
    %2060 = vmatpush.xpose.msra.mxu0 0.0
    %2061 = vmatpush.xpose.msra.mxu0 0.0
    %2062 = vmatpush.xpose.msra.mxu0 0.0
    %2063 = vmatpush.xpose.msra.mxu0 0.0
    %2064 = vmatpush.xpose.msra.mxu0 0.0
    %2065 = vmatpush.xpose.msra.mxu0 %v2049
    %2066 = vmatpush.xpose.msra.mxu0 %v2047
    %2067 = vmatmul.f32.gmra.mxu0 %v2043
    %v2068 = vpop.f32.mrf.mxu0
    %v2069 = vadd.f32 0.0, %v2068
    %2070 = vmatmul.f32.gmra.mxu0 %v2045
    %v2071 = vpop.f32.mrf.mxu0
    %v2072 = vadd.f32 0.0, %v2071
    %2073 = vdwg.mxu0
    %v2074 = vmul.f32 %v2069, 0.25
    %v2075 = vmul.f32 %v2072, 0.25
    %v2076 = vsel %vm120, %v2074, -1e+09
    %v2077 = vsel %vm121, %v2075, -1e+09
    %v2078 = vsel %vm1638, %v2076, -inf
    %2079 = vmax.xlane.f32.xlu0 %v2078
    %v2080 = vpop.xlane.xlu0 %2079
    %v2081 = vsel %vm1790, %v2077, -inf
    %2082 = vmax.xlane.f32.xlu0 %v2081
    %v2083 = vpop.xlane.xlu0 %2082
    %v2084 = vsub.f32 %v2076, %v2080
    %v2085 = vsub.f32 %v2077, %v2083
    %v2086 = vmul.f32 %v2084, 1.442695
    %v2087 = vpow.pop %v2086
    %v2088 = vmul.f32 %v2085, 1.442695
    %v2089 = vpow.pop %v2088
    %v2090 = vsel %vm1638, %v2087, 0.0
    %2091 = vadd.xlane.f32.xlu0 %v2090
    %v2092 = vpop.xlane.xlu0 %2091
    %v2093 = vsel %vm1790, %v2089, 0.0
    %2094 = vadd.xlane.f32.xlu0 %v2093
    %v2095 = vpop.xlane.xlu0 %2094
    %v2096 = vrcp.pop %v2092
    %v2097 = vmul.f32 %v2092, %v2096
    %v2098 = vsub.f32 1.0, %v2097
    %v2099 = vmul.f32 %v2096, %v2098
    %v2100 = vadd.f32 %v2096, %v2099
    %vm2101 = vweird.f32 %v2092
    %vm2102 = vweird.f32 %v2096
    %vm2103 = vmor %vm2101, %vm2102
    %v2104 = vsel %vm2103, %v2096, %v2100
    %v2105 = vand.u32 2147483647, %v2092
    %vm2106 = vcmp.eq.f32.partialorder %v2105, 8.507059e+37
    %v2107 = vand.u32 %v2092, 2147483648
    %v2108 = vor.u32 1.1754944e-38, %v2107
    %v2109 = vsel %vm2106, %v2108, %v2104
    %v2110 = vmul.f32 %v2087, %v2109
    %v2111 = vrcp.pop %v2095
    %v2112 = vmul.f32 %v2095, %v2111
    %v2113 = vsub.f32 1.0, %v2112
    %v2114 = vmul.f32 %v2111, %v2113
    %v2115 = vadd.f32 %v2111, %v2114
    %vm2116 = vweird.f32 %v2095
    %vm2117 = vweird.f32 %v2111
    %vm2118 = vmor %vm2116, %vm2117
    %v2119 = vsel %vm2118, %v2111, %v2115
    %v2120 = vand.u32 2147483647, %v2095
    %vm2121 = vcmp.eq.f32.partialorder %v2120, 8.507059e+37
    %v2122 = vand.u32 %v2095, 2147483648
    %v2123 = vor.u32 1.1754944e-38, %v2122
    %v2124 = vsel %vm2121, %v2123, %v2119
    %v2125 = vmul.f32 %v2089, %v2124
    %2126 = vrot.lane.b32.xlu0 %v1741, 96
    %v2127 = vpop.permute.xlu0 %2126
    %2128 = vrot.lane.b32.xlu0 %v1743, 96
    %v2129 = vpop.permute.xlu0 %2128
    %v2132 = vsel %vm1638, %v2110, 0
    %v2135 = vsel %vm1638, %v2125, 0
    %v2137 = vsel %vm1842, %v2129, 0
    %2139 = vmatpush.msra.mxu0 0.0
    %2140 = vmatpush.msra.mxu0 0.0
    %2141 = vmatpush.msra.mxu0 0.0
    %2142 = vmatpush.msra.mxu0 0.0
    %2143 = vmatpush.msra.mxu0 0.0
    %2144 = vmatpush.msra.mxu0 0.0
    %2145 = vmatpush.msra.mxu0 0.0
    %2146 = vmatpush.msra.mxu0 0.0
    %2147 = vmatpush.msra.mxu0 0.0
    %2148 = vmatpush.msra.mxu0 0.0
    %2149 = vmatpush.msra.mxu0 0.0
    %2150 = vmatpush.msra.mxu0 0.0
    %2151 = vmatpush.msra.mxu0 0.0
    %2152 = vmatpush.msra.mxu0 0.0
    %2153 = vmatpush.msra.mxu0 %v2137
    %2154 = vmatpush.msra.mxu0 %v2127
    %2155 = vmatmul.f32.gmra.mxu0 %v2132
    %v2156 = vpop.f32.mrf.mxu0
    %v2157 = vadd.f32 0.0, %v2156
    %2158 = vmatmul.f32.gmra.mxu0 %v2135
    %v2159 = vpop.f32.mrf.mxu0
    %v2160 = vadd.f32 0.0, %v2159
    %2161 = vdwg.mxu0
    %v2162 = vpack.c.bf16 %v2160, %v2157
    %v2163 = vpack.c.bf16 %v1696, %v1695
    %v2165 = vsel %vm1751, %v2162, 0
    %2167 = vmatpush.bf16.msra.mxu0 0
    %2168 = vmatpush.bf16.msra.mxu0 0
    %2169 = vmatpush.bf16.msra.mxu0 0
    %2170 = vmatpush.bf16.msra.mxu0 0
    %2171 = vmatpush.bf16.msra.mxu0 0
    %2172 = vmatpush.bf16.msra.mxu0 0
    %2173 = vmatpush.bf16.msra.mxu0 0
    %2174 = vmatpush.bf16.msra.mxu0 %v2163
    %2175 = vmatmul.bf16.gmra.mxu0 %v2165
    %v2176 = vpop.f32.mrf.mxu0
    %v2177 = vadd.f32 0.0, %v2176
    %v2178 = vpop.f32.mrf.mxu0
    %v2179 = vadd.f32 0.0, %v2178
    %2180 = vdwg.mxu0
    %v2181 = vadd.f32 %v2031, %v2177
    %v2182 = vadd.f32 %v2033, %v2179
    %2183 = vrot.lane.b32.xlu0 %v1727, 80
    %v2184 = vpop.permute.xlu0 %2183
    %2185 = vrot.lane.b32.xlu0 %v1729, 80
    %v2186 = vpop.permute.xlu0 %2185
    %2187 = vrot.lane.b32.xlu0 %v1727, 16
    %v2188 = vpop.permute.xlu0 %2187
    %2189 = vrot.lane.b32.xlu0 %v1729, 16
    %v2190 = vpop.permute.xlu0 %2189
    %v2191 = vsel %vm1751, %v2184, 0
    %v2193 = vsel %vm1751, %v2186, 0
    %v2195 = vsel %vm1751, %v2188, 0
    %v2197 = vsel %vm1751, %v2190, 0
    %2199 = vmatpush.xpose.msra.mxu0 0.0
    %2200 = vmatpush.xpose.msra.mxu0 0.0
    %2201 = vmatpush.xpose.msra.mxu0 0.0
    %2202 = vmatpush.xpose.msra.mxu0 0.0
    %2203 = vmatpush.xpose.msra.mxu0 0.0
    %2204 = vmatpush.xpose.msra.mxu0 0.0
    %2205 = vmatpush.xpose.msra.mxu0 0.0
    %2206 = vmatpush.xpose.msra.mxu0 0.0
    %2207 = vmatpush.xpose.msra.mxu0 0.0
    %2208 = vmatpush.xpose.msra.mxu0 0.0
    %2209 = vmatpush.xpose.msra.mxu0 0.0
    %2210 = vmatpush.xpose.msra.mxu0 0.0
    %2211 = vmatpush.xpose.msra.mxu0 0.0
    %2212 = vmatpush.xpose.msra.mxu0 0.0
    %2213 = vmatpush.xpose.msra.mxu0 %v2197
    %2214 = vmatpush.xpose.msra.mxu0 %v2195
    %2215 = vmatmul.f32.gmra.mxu0 %v2191
    %v2216 = vpop.f32.mrf.mxu0
    %v2217 = vadd.f32 0.0, %v2216
    %2218 = vmatmul.f32.gmra.mxu0 %v2193
    %v2219 = vpop.f32.mrf.mxu0
    %v2220 = vadd.f32 0.0, %v2219
    %2221 = vdwg.mxu0
    %v2222 = vmul.f32 %v2217, 0.25
    %v2223 = vmul.f32 %v2220, 0.25
    %v2224 = vsel %vm120, %v2222, -1e+09
    %v2225 = vsel %vm121, %v2223, -1e+09
    %v2226 = vsel %vm1638, %v2224, -inf
    %2227 = vmax.xlane.f32.xlu0 %v2226
    %v2228 = vpop.xlane.xlu0 %2227
    %v2229 = vsel %vm1790, %v2225, -inf
    %2230 = vmax.xlane.f32.xlu0 %v2229
    %v2231 = vpop.xlane.xlu0 %2230
    %v2232 = vsub.f32 %v2224, %v2228
    %v2233 = vsub.f32 %v2225, %v2231
    %v2234 = vmul.f32 %v2232, 1.442695
    %v2235 = vpow.pop %v2234
    %v2236 = vmul.f32 %v2233, 1.442695
    %v2237 = vpow.pop %v2236
    %v2238 = vsel %vm1638, %v2235, 0.0
    %2239 = vadd.xlane.f32.xlu0 %v2238
    %v2240 = vpop.xlane.xlu0 %2239
    %v2241 = vsel %vm1790, %v2237, 0.0
    %2242 = vadd.xlane.f32.xlu0 %v2241
    %v2243 = vpop.xlane.xlu0 %2242
    %v2244 = vrcp.pop %v2240
    %v2245 = vmul.f32 %v2240, %v2244
    %v2246 = vsub.f32 1.0, %v2245
    %v2247 = vmul.f32 %v2244, %v2246
    %v2248 = vadd.f32 %v2244, %v2247
    %vm2249 = vweird.f32 %v2240
    %vm2250 = vweird.f32 %v2244
    %vm2251 = vmor %vm2249, %vm2250
    %v2252 = vsel %vm2251, %v2244, %v2248
    %v2253 = vand.u32 2147483647, %v2240
    %vm2254 = vcmp.eq.f32.partialorder %v2253, 8.507059e+37
    %v2255 = vand.u32 %v2240, 2147483648
    %v2256 = vor.u32 1.1754944e-38, %v2255
    %v2257 = vsel %vm2254, %v2256, %v2252
    %v2258 = vmul.f32 %v2235, %v2257
    %v2259 = vrcp.pop %v2243
    %v2260 = vmul.f32 %v2243, %v2259
    %v2261 = vsub.f32 1.0, %v2260
    %v2262 = vmul.f32 %v2259, %v2261
    %v2263 = vadd.f32 %v2259, %v2262
    %vm2264 = vweird.f32 %v2243
    %vm2265 = vweird.f32 %v2259
    %vm2266 = vmor %vm2264, %vm2265
    %v2267 = vsel %vm2266, %v2259, %v2263
    %v2268 = vand.u32 2147483647, %v2243
    %vm2269 = vcmp.eq.f32.partialorder %v2268, 8.507059e+37
    %v2270 = vand.u32 %v2243, 2147483648
    %v2271 = vor.u32 1.1754944e-38, %v2270
    %v2272 = vsel %vm2269, %v2271, %v2267
    %v2273 = vmul.f32 %v2237, %v2272
    %2274 = vrot.lane.b32.xlu0 %v1741, 80
    %v2275 = vpop.permute.xlu0 %2274
    %2276 = vrot.lane.b32.xlu0 %v1743, 80
    %v2277 = vpop.permute.xlu0 %2276
    %v2280 = vsel %vm1638, %v2258, 0
    %v2283 = vsel %vm1638, %v2273, 0
    %v2285 = vsel %vm1842, %v2277, 0
    %2287 = vmatpush.msra.mxu0 0.0
    %2288 = vmatpush.msra.mxu0 0.0
    %2289 = vmatpush.msra.mxu0 0.0
    %2290 = vmatpush.msra.mxu0 0.0
    %2291 = vmatpush.msra.mxu0 0.0
    %2292 = vmatpush.msra.mxu0 0.0
    %2293 = vmatpush.msra.mxu0 0.0
    %2294 = vmatpush.msra.mxu0 0.0
    %2295 = vmatpush.msra.mxu0 0.0
    %2296 = vmatpush.msra.mxu0 0.0
    %2297 = vmatpush.msra.mxu0 0.0
    %2298 = vmatpush.msra.mxu0 0.0
    %2299 = vmatpush.msra.mxu0 0.0
    %2300 = vmatpush.msra.mxu0 0.0
    %2301 = vmatpush.msra.mxu0 %v2285
    %2302 = vmatpush.msra.mxu0 %v2275
    %2303 = vmatmul.f32.gmra.mxu0 %v2280
    %v2304 = vpop.f32.mrf.mxu0
    %v2305 = vadd.f32 0.0, %v2304
    %2306 = vmatmul.f32.gmra.mxu0 %v2283
    %v2307 = vpop.f32.mrf.mxu0
    %v2308 = vadd.f32 0.0, %v2307
    %2309 = vdwg.mxu0
    %v2310 = vpack.c.bf16 %v2308, %v2305
    %v2311 = vpack.c.bf16 %v1698, %v1697
    %v2313 = vsel %vm1751, %v2310, 0
    %2315 = vmatpush.bf16.msra.mxu0 0
    %2316 = vmatpush.bf16.msra.mxu0 0
    %2317 = vmatpush.bf16.msra.mxu0 0
    %2318 = vmatpush.bf16.msra.mxu0 0
    %2319 = vmatpush.bf16.msra.mxu0 0
    %2320 = vmatpush.bf16.msra.mxu0 0
    %2321 = vmatpush.bf16.msra.mxu0 0
    %2322 = vmatpush.bf16.msra.mxu0 %v2311
    %2323 = vmatmul.bf16.gmra.mxu0 %v2313
    %v2324 = vpop.f32.mrf.mxu0
    %v2325 = vadd.f32 0.0, %v2324
    %v2326 = vpop.f32.mrf.mxu0
    %v2327 = vadd.f32 0.0, %v2326
    %2328 = vdwg.mxu0
    %v2329 = vadd.f32 %v2181, %v2325
    %v2330 = vadd.f32 %v2182, %v2327
    %v2331 = vadd.f32 %v2329, %v1699
    %v2332 = vadd.f32 %v2330, %v1699
    %v2333 = vld [vmem:[#allocation10 + $0x78] sm:$0xff]
    %v2334 = vld [vmem:[#allocation10 + $0xf8] sm:$0xff]
    %v2335 = vld [vmem:[#allocation10 + $0x178] sm:$0xff]
    %v2336 = vld [vmem:[#allocation10 + $0x1f8] sm:$0xff]
    %v2337 = vld [vmem:[#allocation10 + $0x278] sm:$0xff]
    %v2338 = vld [vmem:[#allocation10 + $0x2f8] sm:$0xff]
    %v2339 = vld [vmem:[#allocation10 + $0x378] sm:$0xff]
    %v2340 = vld [vmem:[#allocation10 + $0x3f8] sm:$0xff]
    %v2341 = vpack.c.bf16 %v2332, %v2331
    %v2342 = vpack.c.bf16 %v2334, %v2333
    %v2343 = vpack.c.bf16 %v2336, %v2335
    %v2344 = vpack.c.bf16 %v2338, %v2337
    %v2345 = vpack.c.bf16 %v2340, %v2339
    %v2346 = vld [vmem:[#allocation7 + $0x42] ss:$0 sm:$0xff]
    %v2348 = vsel %vm1659, %v2341, 0
    %2350 = vmatpush.bf16.msra.mxu0 0
    %2351 = vmatpush.bf16.msra.mxu0 0
    %2352 = vmatpush.bf16.msra.mxu0 0
    %2353 = vmatpush.bf16.msra.mxu0 0
    %2354 = vmatpush.bf16.msra.mxu0 %v2345
    %2355 = vmatpush.bf16.msra.mxu0 %v2344
    %2356 = vmatpush.bf16.msra.mxu0 %v2343
    %2357 = vmatpush.bf16.msra.mxu0 %v2342
    %2358 = vmatmul.bf16.gmra.mxu0 %v2348
    %v2359 = vpop.f32.mrf.mxu0
    %v2360 = vadd.f32 %v2346, %v2359
    %v2361 = vpop.f32.mrf.mxu0
    %v2362 = vadd.f32 %v2346, %v2361
    %2363 = vdwg.mxu0
    %vm2364 = vcmp.gt.f32.partialorder %v2360, 0.0
    %vm2365 = vcmp.gt.f32.partialorder %v2362, 0.0
    %v2366 = vmul.f32 %v2360, 0.01
    %v2367 = vmul.f32 %v2362, 0.01
    %v2368 = vsel %vm2364, %v2360, %v2366
    %v2369 = vsel %vm2365, %v2362, %v2367
    %v2371 = vrot.slane %v122, 2
    %v2372 = vsel %vm1638, %v2371, 0
    %v2375 = vsel %vm1842, %v2369, 0
    %2377 = vmatpush.msra.mxu0 0.0
    %2378 = vmatpush.msra.mxu0 0.0
    %2379 = vmatpush.msra.mxu0 0.0
    %2380 = vmatpush.msra.mxu0 0.0
    %2381 = vmatpush.msra.mxu0 0.0
    %2382 = vmatpush.msra.mxu0 0.0
    %2383 = vmatpush.msra.mxu0 0.0
    %2384 = vmatpush.msra.mxu0 0.0
    %2385 = vmatpush.msra.mxu0 0.0
    %2386 = vmatpush.msra.mxu0 0.0
    %2387 = vmatpush.msra.mxu0 0.0
    %2388 = vmatpush.msra.mxu0 0.0
    %2389 = vmatpush.msra.mxu0 0.0
    %2390 = vmatpush.msra.mxu0 0.0
    %2391 = vmatpush.msra.mxu0 %v2375
    %2392 = vmatpush.msra.mxu0 %v2368
    %2393 = vmatmul.f32.gmra.mxu0 %v2372
    %v2394 = vpop.f32.mrf.mxu0
    %v2395 = vadd.f32 0.0, %v2394
    %2396 = vdwg.mxu0
    %2397 = vst.msk [vmem:[#allocation13] sm:$0x3] %vm1663, %v2395
    // Predicated region
    $region54: #{backbone_forward.1} parent=1 // pred_check
      _
    $region55: #{backbone_forward.1} parent=1 // pred_check_branch
      %2399 = sbr.rel (0) target = $region57
    $region56: #{backbone_forward.1} parent=1 // pred_region
      %2401 = vsyncadd [#allocation6], 0
      %s2403 = sshll.u32 [#allocation13], 4
      %s2404 = int_to_ptr.vmem [resolvable:$true] %s2403
      %s2405 = sshll.u32 %s8, 4
      %s2406 = int_to_ptr.hbm [resolvable:$true] %s2405
      %2408 = dma.vmem_to_hbm [thread:$0]  %s2404, 32, %s2406, [#allocation6]
    $region57: #{backbone_forward.1} parent=1 // pred_fallthru
      _
    // Predicated region
    $region58: #{backbone_forward.1} parent=1 // pred_check
      _
    $region59: #{backbone_forward.1} parent=1 // pred_check_branch
      %2410 = sbr.rel (0) target = $region61
    $region60: #{backbone_forward.1} parent=1 // pred_region
      %2412 = dma.done [#allocation6], 32
    $region61: #{backbone_forward.1} parent=1 // pred_fallthru
      _
    %2413 = vsyncpa [#allocation5], 1
    %2414 = vsyncpa [#allocation8], 1
    %2415 = vsyncpa [#allocation11], 1
    %2416 = vsyncpa [#allocation6], 1

</llo_original>
